<compile_context>
chip_gen: v7x
topology: tpu7x:2x2x1
jax: 0.10.0
libtpu: 0.0.40
codegen_flags: <defaults>
</compile_context>

<pallas_src>
import functools

import numpy as np
import jax
import jax.numpy as jnp
from jax import lax
from jax.experimental import pallas as pl
from jax.experimental.pallas import tpu as pltpu

IOU_THR = 0.5        # config.iou_thr stand-in
LN_EPS = 1e-5        # nn.LayerNorm default eps
UNION_EPS = 1e-9     # clamp to avoid 0/0 on degenerate boxes (documented deviation vs PyTorch NaN)
VMEM_LIMIT = 32 * 1024 * 1024  # == scoped default on v6e/v7x, safe raise on v5e


# --------------------------------------------------------------------------
# Kernel 1 (per batch): IoU + attn_mask + fused top-K neighbor selection.
#   overlaps[i, j] = iou[i, j] * seed[j] * (1 - seed[i])
#   idx[i, k]      = index of k-th largest overlap in row i   (stable, min-index tie-break)
#   mk[i, k]       = seed[idx] * (overlaps[i, idx] >= thr)    (computed divide-free & exact)
# --------------------------------------------------------------------------
def _iou_topk_kernel(top_k, box_row_ref, box_col_ref, seed_row_ref, seed_col_ref,
                     am_ref, idx_ref, mk_ref):
    # box_row_ref: (4, Q) cxcywh with Q on lanes; box_col_ref: (Q, 4) cxcywh with Q on sublanes.
    cxr = box_row_ref[0:1, :]; cyr = box_row_ref[1:2, :]
    wr = box_row_ref[2:3, :]; hr = box_row_ref[3:4, :]
    x1r = cxr - 0.5 * wr; y1r = cyr - 0.5 * hr
    x2r = cxr + 0.5 * wr; y2r = cyr + 0.5 * hr                        # (1, Q)  box j

    cxc = box_col_ref[:, 0:1]; cyc = box_col_ref[:, 1:2]
    wc = box_col_ref[:, 2:3]; hc = box_col_ref[:, 3:4]
    x1c = cxc - 0.5 * wc; y1c = cyc - 0.5 * hc
    x2c = cxc + 0.5 * wc; y2c = cyc + 0.5 * hc                        # (Q, 1)  box i

    area_r = (x2r - x1r) * (y2r - y1r)                                # (1, Q)
    area_c = (x2c - x1c) * (y2c - y1c)                                # (Q, 1)

    iw = jnp.maximum(jnp.minimum(x2c, x2r) - jnp.maximum(x1c, x1r), 0.0)   # (Q, Q)
    ih = jnp.maximum(jnp.minimum(y2c, y2r) - jnp.maximum(y1c, y1r), 0.0)
    inter = iw * ih
    union = jnp.maximum(area_c + area_r - inter, UNION_EPS)

    # Exact, divide-free threshold test:  iou >= thr  <=>  inter >= thr * union.
    hit = inter >= (IOU_THR * union)                                   # (Q, Q) bool
    am_ref[...] = hit.astype(jnp.int8)

    seed_row = seed_row_ref[...]                                       # (1, Q)  seed[j]
    neg_col = 1.0 - seed_col_ref[...]                                  # (Q, 1)  1 - seed[i]

    # mk_full[i, j] == mk value if j is selected as neighbor of i (exact, {0,1}).
    mk_full = hit.astype(jnp.float32) * seed_row * neg_col             # (Q, Q)

    # Ranking values: approx reciprocal (EUP) + one Newton step (~1e-7 rel err), review item.
    inv_u = pl.reciprocal(union, approx=True)
    inv_u = inv_u * (2.0 - union * inv_u)
    overlaps = inter * inv_u * seed_row * neg_col                      # (Q, Q)

    q = box_col_ref.shape[0]
    col_f = lax.broadcasted_iota(jnp.int32, (q, q), 1).astype(jnp.float32)
    lane_k = lax.broadcasted_iota(jnp.int32, (q, top_k), 1)

    work = overlaps
    idx_acc = jnp.zeros((q, top_k), jnp.float32)
    mk_acc = jnp.zeros((q, top_k), jnp.float32)
    for k in range(top_k):                                             # K-step top-k, in VMEM
        m = jnp.max(work, axis=-1, keepdims=True)                      # (Q, 1)
        is_max = work == m
        idxf = jnp.min(jnp.where(is_max, col_f, float(q)), axis=-1, keepdims=True)  # first max
        sel = col_f == idxf                                            # (Q, Q) one-hot
        mk_k = jnp.max(jnp.where(sel, mk_full, 0.0), axis=-1, keepdims=True)         # gather
        idx_acc = jnp.where(lane_k == k, idxf, idx_acc)
        mk_acc = jnp.where(lane_k == k, mk_k, mk_acc)
        work = jnp.where(sel, -1.0, work)                              # exclude selected column
    idx_ref[...] = idx_acc.astype(jnp.int32)
    mk_ref[...] = mk_acc


def iou_topk(pred_boxes, seed_mask, top_k):
    """pred_boxes: (B, Q, 4) cxcywh f32; seed_mask: (B, Q, 1) f32 {0,1}."""
    B, Q, _ = pred_boxes.shape
    boxes_col = pred_boxes                                  # (B, Q, 4) query-index orientation
    boxes_row = jnp.transpose(pred_boxes, (0, 2, 1))        # (B, 4, Q) candidate orientation
    seed_row = jnp.transpose(seed_mask, (0, 2, 1))          # (B, 1, Q)

    am, idx, mk = pl.pallas_call(
        functools.partial(_iou_topk_kernel, top_k),
        out_shape=(jax.ShapeDtypeStruct((B, Q, Q), jnp.int8),
                   jax.ShapeDtypeStruct((B, Q, top_k), jnp.int32),
                   jax.ShapeDtypeStruct((B, Q, top_k), jnp.float32)),
        grid=(B,),
        in_specs=[pl.BlockSpec((None, 4, Q), lambda b: (b, 0, 0)),
                  pl.BlockSpec((None, Q, 4), lambda b: (b, 0, 0)),
                  pl.BlockSpec((None, 1, Q), lambda b: (b, 0, 0)),
                  pl.BlockSpec((None, Q, 1), lambda b: (b, 0, 0))],
        out_specs=(pl.BlockSpec((None, Q, Q), lambda b: (b, 0, 0)),
                   pl.BlockSpec((None, Q, top_k), lambda b: (b, 0, 0)),
                   pl.BlockSpec((None, Q, top_k), lambda b: (b, 0, 0))),
        compiler_params=pltpu.CompilerParams(
            dimension_semantics=("parallel",),
            vmem_limit_bytes=VMEM_LIMIT),
    )(boxes_row, boxes_col, seed_row, seed_mask)
    return am, idx, mk


# --------------------------------------------------------------------------
# Kernel 2 (per batch): fused id-token + neighbor-difference path.
#   idn = LN(L2(relu(L1(tgt))))                                (bf16 MXU, f32 accum / LN)
#   p3  = idn @ W3                                             (f32; linear3 linearity)
#   per k: nb_p3 = onehot(idx_k) @ p3   (f32 MXU gather, on-chip)
#          f_k   = (relu(p3 - nb_p3 + b3) @ W4 + b4) * mk_k    (bf16 MXU)
#   out = tgt + relu(max_k f_k @ W5 + b5) * (1 - seed)         (bf16 MXU)
# --------------------------------------------------------------------------
def _dehomo_fused_kernel(top_k, tgt_ref, idx_ref, mk_ref, seed_ref,
                         w1_ref, b1_ref, w2_ref, b2_ref, g_ref, beta_ref,
                         w3_ref, b3_ref, w4_ref, b4_ref, w5_ref, b5_ref, out_ref):
    f32 = jnp.float32
    bf16 = jnp.bfloat16

    x = tgt_ref[...]                                                   # (Q, D) f32
    h1 = jnp.maximum(
        jnp.dot(x.astype(bf16), w1_ref[...], preferred_element_type=f32) + b1_ref[...], 0.0)
    y = jnp.dot(h1.astype(bf16), w2_ref[...], preferred_element_type=f32) + b2_ref[...]
    mu = jnp.mean(y, axis=-1, keepdims=True)
    var = jnp.mean((y - mu) ** 2, axis=-1, keepdims=True)
    idn = (y - mu) * lax.rsqrt(var + LN_EPS) * g_ref[...] + beta_ref[...]

    # linear3 linearity: (idn - nb) @ W3 == p3 - onehot @ p3.  Kept f32 (cancellation safety).
    p3 = jnp.dot(idn, w3_ref[...], preferred_element_type=f32)         # (Q, D) f32

    q = x.shape[0]
    col_ids = lax.broadcasted_iota(jnp.int32, (q, q), 1)
    idx_all = idx_ref[...]                                             # (Q, K) int32
    mk_all = mk_ref[...]                                               # (Q, K) f32

    red = None
    for k in range(top_k):
        sel = (col_ids == idx_all[:, k:k + 1]).astype(f32)             # (Q, Q) one-hot
        nb_p3 = jnp.dot(sel, p3, preferred_element_type=f32)           # f32 MXU row-gather
        hk = jnp.maximum((p3 - nb_p3) + b3_ref[...], 0.0)              # f32 subtraction
        fk = jnp.dot(hk.astype(bf16), w4_ref[...], preferred_element_type=f32) + b4_ref[...]
        fk = fk * mk_all[:, k:k + 1]
        red = fk if red is None else jnp.maximum(red, fk)

    z = jnp.maximum(
        jnp.dot(red.astype(bf16), w5_ref[...], preferred_element_type=f32) + b5_ref[...], 0.0)
    out_ref[...] = x + z * (1.0 - seed_ref[...])


def dehomo_fused_call(tgt, idx, mk, seed_mask, params, top_k):
    B, Q, D = tgt.shape
    w_res = pl.BlockSpec((D, D), lambda b: (0, 0))   # weights resident in VMEM
    b_res = pl.BlockSpec((1, D), lambda b: (0, 0))   # biases / LN params resident

    # bf16 copies for the MXU (TODO(synk): in deployment cast once at parameter-init time).
    w1b = params['w1'].astype(jnp.bfloat16)
    w2b = params['w2'].astype(jnp.bfloat16)
    w4b = params['w4'].astype(jnp.bfloat16)
    w5b = params['w5'].astype(jnp.bfloat16)

    return pl.pallas_call(
        functools.partial(_dehomo_fused_kernel, top_k),
        out_shape=jax.ShapeDtypeStruct((B, Q, D), jnp.float32),
        grid=(B,),
        in_specs=[pl.BlockSpec((None, Q, D), lambda b: (b, 0, 0)),      # tgt
                  pl.BlockSpec((None, Q, top_k), lambda b: (b, 0, 0)),  # idx
                  pl.BlockSpec((None, Q, top_k), lambda b: (b, 0, 0)),  # mk
                  pl.BlockSpec((None, Q, 1), lambda b: (b, 0, 0)),      # seed
                  w_res, b_res, w_res, b_res, b_res, b_res,             # w1,b1,w2,b2,gamma,beta
                  w_res, b_res,                                         # w3 (f32), b3
                  w_res, b_res, w_res, b_res],                          # w4,b4,w5,b5
        out_specs=pl.BlockSpec((None, Q, D), lambda b: (b, 0, 0)),
        compiler_params=pltpu.CompilerParams(
            dimension_semantics=("parallel",),
            vmem_limit_bytes=VMEM_LIMIT),
    )(tgt, idx, mk, seed_mask,
      w1b, params['b1'], w2b, params['b2'], params['gamma'], params['beta'],
      params['w3'], params['b3'], w4b, params['b4'], w5b, params['b5'])


# --------------------------------------------------------------------------
# Forward wrapper (Amself = 0, high_score_mask = None branch)
# --------------------------------------------------------------------------
def dehomo_forward(tgt, seed_mask, pred_boxes, params, top_k,
                   attention_position=None, attention_weight=None,
                   high_score_mask=None, prev_scores=None):
    del attention_position, attention_weight, high_score_mask, prev_scores  # unused (Amself=0)

    am_i8, idx, mk = iou_topk(pred_boxes, seed_mask, top_k)
    # TODO(synk): consumers could use the int8 mask directly; the bool cast is kept only to
    #             preserve the original module's boolean return dtype.
    attn_mask = am_i8.astype(jnp.bool_)

    out = dehomo_fused_call(tgt, idx, mk, seed_mask, params, top_k)
    return out, attn_mask


# --------------------------------------------------------------------------
# Deterministic parameter init (PyTorch nn.Linear-style uniform bounds)
# --------------------------------------------------------------------------
def init_params(key, d):
    ks = jax.random.split(key, 5)

    def lin(k):
        kw, kb = jax.random.split(k)
        bound = 1.0 / float(np.sqrt(d))
        w = jax.random.uniform(kw, (d, d), jnp.float32, -bound, bound)
        b = jax.random.uniform(kb, (1, d), jnp.float32, -bound, bound)
        return w, b

    p = {}
    p['w1'], p['b1'] = lin(ks[0])
    p['w2'], p['b2'] = lin(ks[1])
    p['w3'], p['b3'] = lin(ks[2])
    p['w4'], p['b4'] = lin(ks[3])
    p['w5'], p['b5'] = lin(ks[4])
    p['gamma'] = jnp.ones((1, d), jnp.float32)
    p['beta'] = jnp.zeros((1, d), jnp.float32)
    return p


# --------------------------------------------------------------------------
# Pure-JAX reference (PyTorch semantics) for the sanity check
# --------------------------------------------------------------------------
def reference_forward(tgt, seed_mask, pred_boxes, p, top_k):
    hp = jax.lax.Precision.HIGHEST
    cx, cy, w, h = (pred_boxes[..., 0], pred_boxes[..., 1],
                    pred_boxes[..., 2], pred_boxes[..., 3])
    x1, y1, x2, y2 = cx - 0.5 * w, cy - 0.5 * h, cx + 0.5 * w, cy + 0.5 * h
    area = (x2 - x1) * (y2 - y1)
    lt_x = jnp.maximum(x1[:, :, None], x1[:, None, :])
    lt_y = jnp.maximum(y1[:, :, None], y1[:, None, :])
    rb_x = jnp.minimum(x2[:, :, None], x2[:, None, :])
    rb_y = jnp.minimum(y2[:, :, None], y2[:, None, :])
    inter = jnp.maximum(rb_x - lt_x, 0.0) * jnp.maximum(rb_y - lt_y, 0.0)
    union = jnp.maximum(area[:, :, None] + area[:, None, :] - inter, UNION_EPS)
    iou = inter / union
    attn_mask = iou >= IOU_THR
    seed = seed_mask[..., 0]
    neg = 1.0 - seed
    overlaps = iou * seed[:, None, :] * neg[:, :, None]
    idx = jnp.argsort(-overlaps, axis=-1)[..., :top_k]
    nmk = jax.vmap(lambda s, i: s[i])(seed, idx)
    ious_g = jnp.take_along_axis(overlaps, idx, axis=2)
    mk = nmk * (ious_g >= IOU_THR).astype(jnp.float32)

    h1 = jnp.maximum(jnp.dot(tgt, p['w1'], precision=hp) + p['b1'][0], 0.0)
    idt = jnp.dot(h1, p['w2'], precision=hp) + p['b2'][0]
    mu = jnp.mean(idt, -1, keepdims=True)
    var = jnp.mean((idt - mu) ** 2, -1, keepdims=True)
    idt = (idt - mu) / jnp.sqrt(var + LN_EPS) * p['gamma'][0] + p['beta'][0]

    nb = jax.vmap(lambda t, i: t[i])(idt, idx)                               # (B, Q, K, D)
    diff = idt[:, :, None, :] - nb
    f = jnp.maximum(jnp.dot(diff, p['w3'], precision=hp) + p['b3'][0], 0.0)
    f = jnp.dot(f, p['w4'], precision=hp) + p['b4'][0]
    red = jnp.max(f * mk[..., None], axis=2)
    z = jnp.maximum(jnp.dot(red, p['w5'], precision=hp) + p['b5'][0], 0.0)
    return tgt + z * (1.0 - seed_mask), attn_mask


if __name__ == "__main__":
    key = jax.random.PRNGKey(0)
    # Lane-dense small shapes: batch=2, num_queries=128, d_model=128, neighbors=8
    B, Q, D, K = 2, 128, 128, 8

    k_tgt, k_seed, k_box, k_p = jax.random.split(key, 4)
    tgt = jax.random.normal(k_tgt, (B, Q, D), jnp.float32)
    seed_mask = (jax.random.uniform(k_seed, (B, Q, 1)) < 0.5).astype(jnp.float32)
    kc, kw = jax.random.split(k_box)
    ctr = jax.random.uniform(kc, (B, Q, 2), jnp.float32, 0.3, 0.7)
    wh = jax.random.uniform(kw, (B, Q, 2), jnp.float32, 0.2, 0.5)
    pred_boxes = jnp.concatenate([ctr, wh], axis=-1)

    params = init_params(k_p, D)

    cur_tgt, attn_mask = dehomo_forward(tgt, seed_mask, pred_boxes, params, top_k=K)
    jax.block_until_ready((cur_tgt, attn_mask))

    ref_tgt, ref_mask = reference_forward(tgt, seed_mask, pred_boxes, params, K)
    np.testing.assert_allclose(np.asarray(cur_tgt), np.asarray(ref_tgt), rtol=3e-2, atol=3e-2)
    assert np.array_equal(np.asarray(attn_mask), np.asarray(ref_mask))
    assert cur_tgt.shape == (B, Q, D) and attn_mask.shape == (B, Q, Q)

    print("KERNEL_OK")
</pallas_src>

<mosaic_0001>
module attributes {stable_mosaic.version = 11 : i64} {
  func.func @_iou_topk_kernel(%arg0: i32, %arg1: memref<1x4x128xf32, #tpu.memory_space<vmem>>, %arg2: memref<1x128x4xf32, #tpu.memory_space<vmem>>, %arg3: memref<1x1x128xf32, #tpu.memory_space<vmem>>, %arg4: memref<1x128x1xf32, #tpu.memory_space<vmem>>, %arg5: memref<1x128x128xi8, #tpu.memory_space<vmem>>, %arg6: memref<1x128x8xi32, #tpu.memory_space<vmem>>, %arg7: memref<1x128x8xf32, #tpu.memory_space<vmem>>) attributes {dimension_semantics = [#tpu.dimension_semantics<parallel>], iteration_bounds = array<i64: 2>, scalar_prefetch = 0 : i64, scratch_operands = 0 : i64, tpu.core_type = #tpu.core_type<tc>, window_params = [{transform_indices = @transform_0, window_bounds = array<i64: 1, 4, 128>}, {transform_indices = @transform_1, window_bounds = array<i64: 1, 128, 4>}, {transform_indices = @transform_2, window_bounds = array<i64: 1, 1, 128>}, {transform_indices = @transform_3, window_bounds = array<i64: 1, 128, 1>}, {transform_indices = @transform_4, window_bounds = array<i64: 1, 128, 128>}, {transform_indices = @transform_5, window_bounds = array<i64: 1, 128, 8>}, {transform_indices = @transform_6, window_bounds = array<i64: 1, 128, 8>}]} {
    %c0 = arith.constant 0 : index
    %c0_0 = arith.constant 0 : index
    %c0_1 = arith.constant 0 : index
    %0 = vector.load %arg1[%c0, %c0_0, %c0_1] : memref<1x4x128xf32, #tpu.memory_space<vmem>>, vector<1x1x128xf32>
    %1 = vector.shape_cast %0 : vector<1x1x128xf32> to vector<1x128xf32>
    %c0_2 = arith.constant 0 : index
    %c1 = arith.constant 1 : index
    %c0_3 = arith.constant 0 : index
    %2 = vector.load %arg1[%c0_2, %c1, %c0_3] : memref<1x4x128xf32, #tpu.memory_space<vmem>>, vector<1x1x128xf32>
    %3 = vector.shape_cast %2 : vector<1x1x128xf32> to vector<1x128xf32>
    %c0_4 = arith.constant 0 : index
    %c2 = arith.constant 2 : index
    %c0_5 = arith.constant 0 : index
    %4 = vector.load %arg1[%c0_4, %c2, %c0_5] : memref<1x4x128xf32, #tpu.memory_space<vmem>>, vector<1x1x128xf32>
    %5 = vector.shape_cast %4 : vector<1x1x128xf32> to vector<1x128xf32>
    %c0_6 = arith.constant 0 : index
    %c3 = arith.constant 3 : index
    %c0_7 = arith.constant 0 : index
    %6 = vector.load %arg1[%c0_6, %c3, %c0_7] : memref<1x4x128xf32, #tpu.memory_space<vmem>>, vector<1x1x128xf32>
    %7 = vector.shape_cast %6 : vector<1x1x128xf32> to vector<1x128xf32>
    %cst = arith.constant 5.000000e-01 : f32
    %8 = vector.broadcast %cst : f32 to vector<1x128xf32>
    %9 = arith.mulf %8, %5 : vector<1x128xf32>
    %10 = arith.subf %1, %9 : vector<1x128xf32>
    %cst_8 = arith.constant 5.000000e-01 : f32
    %11 = vector.broadcast %cst_8 : f32 to vector<1x128xf32>
    %12 = arith.mulf %11, %7 : vector<1x128xf32>
    %13 = arith.subf %3, %12 : vector<1x128xf32>
    %cst_9 = arith.constant 5.000000e-01 : f32
    %14 = vector.broadcast %cst_9 : f32 to vector<1x128xf32>
    %15 = arith.mulf %14, %5 : vector<1x128xf32>
    %16 = arith.addf %1, %15 : vector<1x128xf32>
    %cst_10 = arith.constant 5.000000e-01 : f32
    %17 = vector.broadcast %cst_10 : f32 to vector<1x128xf32>
    %18 = arith.mulf %17, %7 : vector<1x128xf32>
    %19 = arith.addf %3, %18 : vector<1x128xf32>
    %c0_11 = arith.constant 0 : index
    %c0_12 = arith.constant 0 : index
    %c0_13 = arith.constant 0 : index
    %20 = vector.load %arg2[%c0_11, %c0_12, %c0_13] : memref<1x128x4xf32, #tpu.memory_space<vmem>>, vector<1x128x1xf32>
    %21 = vector.shape_cast %20 : vector<1x128x1xf32> to vector<128x1xf32>
    %c0_14 = arith.constant 0 : index
    %c0_15 = arith.constant 0 : index
    %c1_16 = arith.constant 1 : index
    %22 = vector.load %arg2[%c0_14, %c0_15, %c1_16] : memref<1x128x4xf32, #tpu.memory_space<vmem>>, vector<1x128x1xf32>
    %23 = vector.shape_cast %22 : vector<1x128x1xf32> to vector<128x1xf32>
    %c0_17 = arith.constant 0 : index
    %c0_18 = arith.constant 0 : index
    %c2_19 = arith.constant 2 : index
    %24 = vector.load %arg2[%c0_17, %c0_18, %c2_19] : memref<1x128x4xf32, #tpu.memory_space<vmem>>, vector<1x128x1xf32>
    %25 = vector.shape_cast %24 : vector<1x128x1xf32> to vector<128x1xf32>
    %c0_20 = arith.constant 0 : index
    %c0_21 = arith.constant 0 : index
    %c3_22 = arith.constant 3 : index
    %26 = vector.load %arg2[%c0_20, %c0_21, %c3_22] : memref<1x128x4xf32, #tpu.memory_space<vmem>>, vector<1x128x1xf32>
    %27 = vector.shape_cast %26 : vector<1x128x1xf32> to vector<128x1xf32>
    %cst_23 = arith.constant 5.000000e-01 : f32
    %28 = vector.broadcast %cst_23 : f32 to vector<128x1xf32>
    %29 = arith.mulf %28, %25 : vector<128x1xf32>
    %30 = arith.subf %21, %29 : vector<128x1xf32>
    %cst_24 = arith.constant 5.000000e-01 : f32
    %31 = vector.broadcast %cst_24 : f32 to vector<128x1xf32>
    %32 = arith.mulf %31, %27 : vector<128x1xf32>
    %33 = arith.subf %23, %32 : vector<128x1xf32>
    %cst_25 = arith.constant 5.000000e-01 : f32
    %34 = vector.broadcast %cst_25 : f32 to vector<128x1xf32>
    %35 = arith.mulf %34, %25 : vector<128x1xf32>
    %36 = arith.addf %21, %35 : vector<128x1xf32>
    %cst_26 = arith.constant 5.000000e-01 : f32
    %37 = vector.broadcast %cst_26 : f32 to vector<128x1xf32>
    %38 = arith.mulf %37, %27 : vector<128x1xf32>
    %39 = arith.addf %23, %38 : vector<128x1xf32>
    %40 = arith.subf %16, %10 : vector<1x128xf32>
    %41 = arith.subf %19, %13 : vector<1x128xf32>
    %42 = arith.mulf %40, %41 : vector<1x128xf32>
    %43 = arith.subf %36, %30 : vector<128x1xf32>
    %44 = arith.subf %39, %33 : vector<128x1xf32>
    %45 = arith.mulf %43, %44 : vector<128x1xf32>
    %46 = vector.broadcast %36 : vector<128x1xf32> to vector<128x128xf32>
    %47 = vector.broadcast %16 : vector<1x128xf32> to vector<128x128xf32>
    %48 = arith.minimumf %46, %47 : vector<128x128xf32>
    %49 = vector.broadcast %30 : vector<128x1xf32> to vector<128x128xf32>
    %50 = vector.broadcast %10 : vector<1x128xf32> to vector<128x128xf32>
    %51 = arith.maximumf %49, %50 : vector<128x128xf32>
    %52 = arith.subf %48, %51 : vector<128x128xf32>
    %cst_27 = arith.constant 0.000000e+00 : f32
    %53 = vector.broadcast %cst_27 : f32 to vector<128x128xf32>
    %54 = arith.maximumf %52, %53 : vector<128x128xf32>
    %55 = vector.broadcast %39 : vector<128x1xf32> to vector<128x128xf32>
    %56 = vector.broadcast %19 : vector<1x128xf32> to vector<128x128xf32>
    %57 = arith.minimumf %55, %56 : vector<128x128xf32>
    %58 = vector.broadcast %33 : vector<128x1xf32> to vector<128x128xf32>
    %59 = vector.broadcast %13 : vector<1x128xf32> to vector<128x128xf32>
    %60 = arith.maximumf %58, %59 : vector<128x128xf32>
    %61 = arith.subf %57, %60 : vector<128x128xf32>
    %cst_28 = arith.constant 0.000000e+00 : f32
    %62 = vector.broadcast %cst_28 : f32 to vector<128x128xf32>
    %63 = arith.maximumf %61, %62 : vector<128x128xf32>
    %64 = arith.mulf %54, %63 : vector<128x128xf32>
    %65 = vector.broadcast %45 : vector<128x1xf32> to vector<128x128xf32>
    %66 = vector.broadcast %42 : vector<1x128xf32> to vector<128x128xf32>
    %67 = arith.addf %65, %66 : vector<128x128xf32>
    %68 = arith.subf %67, %64 : vector<128x128xf32>
    %cst_29 = arith.constant 9.99999971E-10 : f32
    %69 = vector.broadcast %cst_29 : f32 to vector<128x128xf32>
    %70 = arith.maximumf %68, %69 : vector<128x128xf32>
    %cst_30 = arith.constant 5.000000e-01 : f32
    %71 = vector.broadcast %cst_30 : f32 to vector<128x128xf32>
    %72 = arith.mulf %71, %70 : vector<128x128xf32>
    %73 = arith.cmpf oge, %64, %72 : vector<128x128xf32>
    %74 = arith.extui %73 : vector<128x128xi1> to vector<128x128xi8>
    %c0_31 = arith.constant 0 : index
    %c0_32 = arith.constant 0 : index
    %c0_33 = arith.constant 0 : index
    %75 = vector.load %arg5[%c0_31, %c0_32, %c0_33] : memref<1x128x128xi8, #tpu.memory_space<vmem>>, vector<1x128x128xi8>
    %76 = vector.shape_cast %75 : vector<1x128x128xi8> to vector<128x128xi8>
    %77 = vector.shape_cast %74 : vector<128x128xi8> to vector<1x128x128xi8>
    tpu.vector_store %arg5[%c0_31, %c0_32, %c0_33], %77 {strides = array<i32>} : memref<1x128x128xi8, #tpu.memory_space<vmem>>, vector<1x128x128xi8>,
    %c0_34 = arith.constant 0 : index
    %c0_35 = arith.constant 0 : index
    %c0_36 = arith.constant 0 : index
    %78 = vector.load %arg3[%c0_34, %c0_35, %c0_36] : memref<1x1x128xf32, #tpu.memory_space<vmem>>, vector<1x1x128xf32>
    %79 = vector.shape_cast %78 : vector<1x1x128xf32> to vector<1x128xf32>
    %c0_37 = arith.constant 0 : index
    %c0_38 = arith.constant 0 : index
    %c0_39 = arith.constant 0 : index
    %80 = vector.load %arg4[%c0_37, %c0_38, %c0_39] : memref<1x128x1xf32, #tpu.memory_space<vmem>>, vector<1x128x1xf32>
    %81 = vector.shape_cast %80 : vector<1x128x1xf32> to vector<128x1xf32>
    %cst_40 = arith.constant 1.000000e+00 : f32
    %82 = vector.broadcast %cst_40 : f32 to vector<128x1xf32>
    %83 = arith.subf %82, %81 : vector<128x1xf32>
    %84 = arith.extui %73 : vector<128x128xi1> to vector<128x128xi32>
    %85 = arith.sitofp %84 : vector<128x128xi32> to vector<128x128xf32>
    %86 = vector.broadcast %79 : vector<1x128xf32> to vector<128x128xf32>
    %87 = arith.mulf %85, %86 : vector<128x128xf32>
    %88 = vector.broadcast %83 : vector<128x1xf32> to vector<128x128xf32>
    %89 = arith.mulf %87, %88 : vector<128x128xf32>
    %90 = tpu.reciprocal %70 {approx = true} : vector<128x128xf32> -> vector<128x128xf32>
    %91 = arith.mulf %70, %90 : vector<128x128xf32>
    %cst_41 = arith.constant 2.000000e+00 : f32
    %92 = vector.broadcast %cst_41 : f32 to vector<128x128xf32>
    %93 = arith.subf %92, %91 : vector<128x128xf32>
    %94 = arith.mulf %90, %93 : vector<128x128xf32>
    %95 = arith.mulf %64, %94 : vector<128x128xf32>
    %96 = vector.broadcast %79 : vector<1x128xf32> to vector<128x128xf32>
    %97 = arith.mulf %95, %96 : vector<128x128xf32>
    %98 = vector.broadcast %83 : vector<128x1xf32> to vector<128x128xf32>
    %99 = arith.mulf %97, %98 : vector<128x128xf32>
    %100 = tpu.iota {dimensions = array<i32: 1>} : vector<128x128xi32>
    %101 = arith.sitofp %100 : vector<128x128xi32> to vector<128x128xf32>
    %102 = tpu.iota {dimensions = array<i32: 1>} : vector<128x8xi32>
    %cst_42 = arith.constant 0.000000e+00 : f32
    %103 = vector.broadcast %cst_42 : f32 to vector<128x8xf32>
    %cst_43 = arith.constant 0.000000e+00 : f32
    %104 = vector.broadcast %cst_43 : f32 to vector<128x8xf32>
    %cst_44 = arith.constant dense<0xFF800000> : vector<128xf32>
    %105 = vector.multi_reduction <maximumf>, %99, %cst_44 [1] : vector<128x128xf32> to vector<128xf32>
    %106 = vector.shape_cast %105 : vector<128xf32> to vector<128x1xf32>
    %107 = vector.broadcast %106 : vector<128x1xf32> to vector<128x128xf32>
    %108 = arith.cmpf oeq, %99, %107 : vector<128x128xf32>
    %cst_45 = arith.constant 1.280000e+02 : f32
    %109 = vector.broadcast %cst_45 : f32 to vector<128x128xf32>
    %110 = arith.select %108, %101, %109 : vector<128x128xi1>, vector<128x128xf32>
    %cst_46 = arith.constant dense<0x7F800000> : vector<128xf32>
    %111 = vector.multi_reduction <minimumf>, %110, %cst_46 [1] : vector<128x128xf32> to vector<128xf32>
    %112 = vector.shape_cast %111 : vector<128xf32> to vector<128x1xf32>
    %113 = vector.broadcast %112 : vector<128x1xf32> to vector<128x128xf32>
    %114 = arith.cmpf oeq, %101, %113 : vector<128x128xf32>
    %cst_47 = arith.constant 0.000000e+00 : f32
    %115 = vector.broadcast %cst_47 : f32 to vector<128x128xf32>
    %116 = arith.select %114, %89, %115 : vector<128x128xi1>, vector<128x128xf32>
    %cst_48 = arith.constant dense<0xFF800000> : vector<128xf32>
    %117 = vector.multi_reduction <maximumf>, %116, %cst_48 [1] : vector<128x128xf32> to vector<128xf32>
    %118 = vector.shape_cast %117 : vector<128xf32> to vector<128x1xf32>
    %c0_i32 = arith.constant 0 : i32
    %119 = vector.broadcast %c0_i32 : i32 to vector<128x8xi32>
    %120 = arith.cmpi eq, %102, %119 : vector<128x8xi32>
    %121 = vector.shape_cast %112 : vector<128x1xf32> to vector<128x1xf32>
    %122 = vector.broadcast %121 : vector<128x1xf32> to vector<128x8xf32>
    %123 = arith.select %120, %122, %103 : vector<128x8xi1>, vector<128x8xf32>
    %c0_i32_49 = arith.constant 0 : i32
    %124 = vector.broadcast %c0_i32_49 : i32 to vector<128x8xi32>
    %125 = arith.cmpi eq, %102, %124 : vector<128x8xi32>
    %126 = vector.shape_cast %118 : vector<128x1xf32> to vector<128x1xf32>
    %127 = vector.broadcast %126 : vector<128x1xf32> to vector<128x8xf32>
    %128 = arith.select %125, %127, %104 : vector<128x8xi1>, vector<128x8xf32>
    %cst_50 = arith.constant -1.000000e+00 : f32
    %129 = vector.broadcast %cst_50 : f32 to vector<128x128xf32>
    %130 = arith.select %114, %129, %99 : vector<128x128xi1>, vector<128x128xf32>
    %cst_51 = arith.constant dense<0xFF800000> : vector<128xf32>
    %131 = vector.multi_reduction <maximumf>, %130, %cst_51 [1] : vector<128x128xf32> to vector<128xf32>
    %132 = vector.shape_cast %131 : vector<128xf32> to vector<128x1xf32>
    %133 = vector.broadcast %132 : vector<128x1xf32> to vector<128x128xf32>
    %134 = arith.cmpf oeq, %130, %133 : vector<128x128xf32>
    %cst_52 = arith.constant 1.280000e+02 : f32
    %135 = vector.broadcast %cst_52 : f32 to vector<128x128xf32>
    %136 = arith.select %134, %101, %135 : vector<128x128xi1>, vector<128x128xf32>
    %cst_53 = arith.constant dense<0x7F800000> : vector<128xf32>
    %137 = vector.multi_reduction <minimumf>, %136, %cst_53 [1] : vector<128x128xf32> to vector<128xf32>
    %138 = vector.shape_cast %137 : vector<128xf32> to vector<128x1xf32>
    %139 = vector.broadcast %138 : vector<128x1xf32> to vector<128x128xf32>
    %140 = arith.cmpf oeq, %101, %139 : vector<128x128xf32>
    %cst_54 = arith.constant 0.000000e+00 : f32
    %141 = vector.broadcast %cst_54 : f32 to vector<128x128xf32>
    %142 = arith.select %140, %89, %141 : vector<128x128xi1>, vector<128x128xf32>
    %cst_55 = arith.constant dense<0xFF800000> : vector<128xf32>
    %143 = vector.multi_reduction <maximumf>, %142, %cst_55 [1] : vector<128x128xf32> to vector<128xf32>
    %144 = vector.shape_cast %143 : vector<128xf32> to vector<128x1xf32>
    %c1_i32 = arith.constant 1 : i32
    %145 = vector.broadcast %c1_i32 : i32 to vector<128x8xi32>
    %146 = arith.cmpi eq, %102, %145 : vector<128x8xi32>
    %147 = vector.shape_cast %138 : vector<128x1xf32> to vector<128x1xf32>
    %148 = vector.broadcast %147 : vector<128x1xf32> to vector<128x8xf32>
    %149 = arith.select %146, %148, %123 : vector<128x8xi1>, vector<128x8xf32>
    %c1_i32_56 = arith.constant 1 : i32
    %150 = vector.broadcast %c1_i32_56 : i32 to vector<128x8xi32>
    %151 = arith.cmpi eq, %102, %150 : vector<128x8xi32>
    %152 = vector.shape_cast %144 : vector<128x1xf32> to vector<128x1xf32>
    %153 = vector.broadcast %152 : vector<128x1xf32> to vector<128x8xf32>
    %154 = arith.select %151, %153, %128 : vector<128x8xi1>, vector<128x8xf32>
    %cst_57 = arith.constant -1.000000e+00 : f32
    %155 = vector.broadcast %cst_57 : f32 to vector<128x128xf32>
    %156 = arith.select %140, %155, %130 : vector<128x128xi1>, vector<128x128xf32>
    %cst_58 = arith.constant dense<0xFF800000> : vector<128xf32>
    %157 = vector.multi_reduction <maximumf>, %156, %cst_58 [1] : vector<128x128xf32> to vector<128xf32>
    %158 = vector.shape_cast %157 : vector<128xf32> to vector<128x1xf32>
    %159 = vector.broadcast %158 : vector<128x1xf32> to vector<128x128xf32>
    %160 = arith.cmpf oeq, %156, %159 : vector<128x128xf32>
    %cst_59 = arith.constant 1.280000e+02 : f32
    %161 = vector.broadcast %cst_59 : f32 to vector<128x128xf32>
    %162 = arith.select %160, %101, %161 : vector<128x128xi1>, vector<128x128xf32>
    %cst_60 = arith.constant dense<0x7F800000> : vector<128xf32>
    %163 = vector.multi_reduction <minimumf>, %162, %cst_60 [1] : vector<128x128xf32> to vector<128xf32>
    %164 = vector.shape_cast %163 : vector<128xf32> to vector<128x1xf32>
    %165 = vector.broadcast %164 : vector<128x1xf32> to vector<128x128xf32>
    %166 = arith.cmpf oeq, %101, %165 : vector<128x128xf32>
    %cst_61 = arith.constant 0.000000e+00 : f32
    %167 = vector.broadcast %cst_61 : f32 to vector<128x128xf32>
    %168 = arith.select %166, %89, %167 : vector<128x128xi1>, vector<128x128xf32>
    %cst_62 = arith.constant dense<0xFF800000> : vector<128xf32>
    %169 = vector.multi_reduction <maximumf>, %168, %cst_62 [1] : vector<128x128xf32> to vector<128xf32>
    %170 = vector.shape_cast %169 : vector<128xf32> to vector<128x1xf32>
    %c2_i32 = arith.constant 2 : i32
    %171 = vector.broadcast %c2_i32 : i32 to vector<128x8xi32>
    %172 = arith.cmpi eq, %102, %171 : vector<128x8xi32>
    %173 = vector.shape_cast %164 : vector<128x1xf32> to vector<128x1xf32>
    %174 = vector.broadcast %173 : vector<128x1xf32> to vector<128x8xf32>
    %175 = arith.select %172, %174, %149 : vector<128x8xi1>, vector<128x8xf32>
    %c2_i32_63 = arith.constant 2 : i32
    %176 = vector.broadcast %c2_i32_63 : i32 to vector<128x8xi32>
    %177 = arith.cmpi eq, %102, %176 : vector<128x8xi32>
    %178 = vector.shape_cast %170 : vector<128x1xf32> to vector<128x1xf32>
    %179 = vector.broadcast %178 : vector<128x1xf32> to vector<128x8xf32>
    %180 = arith.select %177, %179, %154 : vector<128x8xi1>, vector<128x8xf32>
    %cst_64 = arith.constant -1.000000e+00 : f32
    %181 = vector.broadcast %cst_64 : f32 to vector<128x128xf32>
    %182 = arith.select %166, %181, %156 : vector<128x128xi1>, vector<128x128xf32>
    %cst_65 = arith.constant dense<0xFF800000> : vector<128xf32>
    %183 = vector.multi_reduction <maximumf>, %182, %cst_65 [1] : vector<128x128xf32> to vector<128xf32>
    %184 = vector.shape_cast %183 : vector<128xf32> to vector<128x1xf32>
    %185 = vector.broadcast %184 : vector<128x1xf32> to vector<128x128xf32>
    %186 = arith.cmpf oeq, %182, %185 : vector<128x128xf32>
    %cst_66 = arith.constant 1.280000e+02 : f32
    %187 = vector.broadcast %cst_66 : f32 to vector<128x128xf32>
    %188 = arith.select %186, %101, %187 : vector<128x128xi1>, vector<128x128xf32>
    %cst_67 = arith.constant dense<0x7F800000> : vector<128xf32>
    %189 = vector.multi_reduction <minimumf>, %188, %cst_67 [1] : vector<128x128xf32> to vector<128xf32>
    %190 = vector.shape_cast %189 : vector<128xf32> to vector<128x1xf32>
    %191 = vector.broadcast %190 : vector<128x1xf32> to vector<128x128xf32>
    %192 = arith.cmpf oeq, %101, %191 : vector<128x128xf32>
    %cst_68 = arith.constant 0.000000e+00 : f32
    %193 = vector.broadcast %cst_68 : f32 to vector<128x128xf32>
    %194 = arith.select %192, %89, %193 : vector<128x128xi1>, vector<128x128xf32>
    %cst_69 = arith.constant dense<0xFF800000> : vector<128xf32>
    %195 = vector.multi_reduction <maximumf>, %194, %cst_69 [1] : vector<128x128xf32> to vector<128xf32>
    %196 = vector.shape_cast %195 : vector<128xf32> to vector<128x1xf32>
    %c3_i32 = arith.constant 3 : i32
    %197 = vector.broadcast %c3_i32 : i32 to vector<128x8xi32>
    %198 = arith.cmpi eq, %102, %197 : vector<128x8xi32>
    %199 = vector.shape_cast %190 : vector<128x1xf32> to vector<128x1xf32>
    %200 = vector.broadcast %199 : vector<128x1xf32> to vector<128x8xf32>
    %201 = arith.select %198, %200, %175 : vector<128x8xi1>, vector<128x8xf32>
    %c3_i32_70 = arith.constant 3 : i32
    %202 = vector.broadcast %c3_i32_70 : i32 to vector<128x8xi32>
    %203 = arith.cmpi eq, %102, %202 : vector<128x8xi32>
    %204 = vector.shape_cast %196 : vector<128x1xf32> to vector<128x1xf32>
    %205 = vector.broadcast %204 : vector<128x1xf32> to vector<128x8xf32>
    %206 = arith.select %203, %205, %180 : vector<128x8xi1>, vector<128x8xf32>
    %cst_71 = arith.constant -1.000000e+00 : f32
    %207 = vector.broadcast %cst_71 : f32 to vector<128x128xf32>
    %208 = arith.select %192, %207, %182 : vector<128x128xi1>, vector<128x128xf32>
    %cst_72 = arith.constant dense<0xFF800000> : vector<128xf32>
    %209 = vector.multi_reduction <maximumf>, %208, %cst_72 [1] : vector<128x128xf32> to vector<128xf32>
    %210 = vector.shape_cast %209 : vector<128xf32> to vector<128x1xf32>
    %211 = vector.broadcast %210 : vector<128x1xf32> to vector<128x128xf32>
    %212 = arith.cmpf oeq, %208, %211 : vector<128x128xf32>
    %cst_73 = arith.constant 1.280000e+02 : f32
    %213 = vector.broadcast %cst_73 : f32 to vector<128x128xf32>
    %214 = arith.select %212, %101, %213 : vector<128x128xi1>, vector<128x128xf32>
    %cst_74 = arith.constant dense<0x7F800000> : vector<128xf32>
    %215 = vector.multi_reduction <minimumf>, %214, %cst_74 [1] : vector<128x128xf32> to vector<128xf32>
    %216 = vector.shape_cast %215 : vector<128xf32> to vector<128x1xf32>
    %217 = vector.broadcast %216 : vector<128x1xf32> to vector<128x128xf32>
    %218 = arith.cmpf oeq, %101, %217 : vector<128x128xf32>
    %cst_75 = arith.constant 0.000000e+00 : f32
    %219 = vector.broadcast %cst_75 : f32 to vector<128x128xf32>
    %220 = arith.select %218, %89, %219 : vector<128x128xi1>, vector<128x128xf32>
    %cst_76 = arith.constant dense<0xFF800000> : vector<128xf32>
    %221 = vector.multi_reduction <maximumf>, %220, %cst_76 [1] : vector<128x128xf32> to vector<128xf32>
    %222 = vector.shape_cast %221 : vector<128xf32> to vector<128x1xf32>
    %c4_i32 = arith.constant 4 : i32
    %223 = vector.broadcast %c4_i32 : i32 to vector<128x8xi32>
    %224 = arith.cmpi eq, %102, %223 : vector<128x8xi32>
    %225 = vector.shape_cast %216 : vector<128x1xf32> to vector<128x1xf32>
    %226 = vector.broadcast %225 : vector<128x1xf32> to vector<128x8xf32>
    %227 = arith.select %224, %226, %201 : vector<128x8xi1>, vector<128x8xf32>
    %c4_i32_77 = arith.constant 4 : i32
    %228 = vector.broadcast %c4_i32_77 : i32 to vector<128x8xi32>
    %229 = arith.cmpi eq, %102, %228 : vector<128x8xi32>
    %230 = vector.shape_cast %222 : vector<128x1xf32> to vector<128x1xf32>
    %231 = vector.broadcast %230 : vector<128x1xf32> to vector<128x8xf32>
    %232 = arith.select %229, %231, %206 : vector<128x8xi1>, vector<128x8xf32>
    %cst_78 = arith.constant -1.000000e+00 : f32
    %233 = vector.broadcast %cst_78 : f32 to vector<128x128xf32>
    %234 = arith.select %218, %233, %208 : vector<128x128xi1>, vector<128x128xf32>
    %cst_79 = arith.constant dense<0xFF800000> : vector<128xf32>
    %235 = vector.multi_reduction <maximumf>, %234, %cst_79 [1] : vector<128x128xf32> to vector<128xf32>
    %236 = vector.shape_cast %235 : vector<128xf32> to vector<128x1xf32>
    %237 = vector.broadcast %236 : vector<128x1xf32> to vector<128x128xf32>
    %238 = arith.cmpf oeq, %234, %237 : vector<128x128xf32>
    %cst_80 = arith.constant 1.280000e+02 : f32
    %239 = vector.broadcast %cst_80 : f32 to vector<128x128xf32>
    %240 = arith.select %238, %101, %239 : vector<128x128xi1>, vector<128x128xf32>
    %cst_81 = arith.constant dense<0x7F800000> : vector<128xf32>
    %241 = vector.multi_reduction <minimumf>, %240, %cst_81 [1] : vector<128x128xf32> to vector<128xf32>
    %242 = vector.shape_cast %241 : vector<128xf32> to vector<128x1xf32>
    %243 = vector.broadcast %242 : vector<128x1xf32> to vector<128x128xf32>
    %244 = arith.cmpf oeq, %101, %243 : vector<128x128xf32>
    %cst_82 = arith.constant 0.000000e+00 : f32
    %245 = vector.broadcast %cst_82 : f32 to vector<128x128xf32>
    %246 = arith.select %244, %89, %245 : vector<128x128xi1>, vector<128x128xf32>
    %cst_83 = arith.constant dense<0xFF800000> : vector<128xf32>
    %247 = vector.multi_reduction <maximumf>, %246, %cst_83 [1] : vector<128x128xf32> to vector<128xf32>
    %248 = vector.shape_cast %247 : vector<128xf32> to vector<128x1xf32>
    %c5_i32 = arith.constant 5 : i32
    %249 = vector.broadcast %c5_i32 : i32 to vector<128x8xi32>
    %250 = arith.cmpi eq, %102, %249 : vector<128x8xi32>
    %251 = vector.shape_cast %242 : vector<128x1xf32> to vector<128x1xf32>
    %252 = vector.broadcast %251 : vector<128x1xf32> to vector<128x8xf32>
    %253 = arith.select %250, %252, %227 : vector<128x8xi1>, vector<128x8xf32>
    %c5_i32_84 = arith.constant 5 : i32
    %254 = vector.broadcast %c5_i32_84 : i32 to vector<128x8xi32>
    %255 = arith.cmpi eq, %102, %254 : vector<128x8xi32>
    %256 = vector.shape_cast %248 : vector<128x1xf32> to vector<128x1xf32>
    %257 = vector.broadcast %256 : vector<128x1xf32> to vector<128x8xf32>
    %258 = arith.select %255, %257, %232 : vector<128x8xi1>, vector<128x8xf32>
    %cst_85 = arith.constant -1.000000e+00 : f32
    %259 = vector.broadcast %cst_85 : f32 to vector<128x128xf32>
    %260 = arith.select %244, %259, %234 : vector<128x128xi1>, vector<128x128xf32>
    %cst_86 = arith.constant dense<0xFF800000> : vector<128xf32>
    %261 = vector.multi_reduction <maximumf>, %260, %cst_86 [1] : vector<128x128xf32> to vector<128xf32>
    %262 = vector.shape_cast %261 : vector<128xf32> to vector<128x1xf32>
    %263 = vector.broadcast %262 : vector<128x1xf32> to vector<128x128xf32>
    %264 = arith.cmpf oeq, %260, %263 : vector<128x128xf32>
    %cst_87 = arith.constant 1.280000e+02 : f32
    %265 = vector.broadcast %cst_87 : f32 to vector<128x128xf32>
    %266 = arith.select %264, %101, %265 : vector<128x128xi1>, vector<128x128xf32>
    %cst_88 = arith.constant dense<0x7F800000> : vector<128xf32>
    %267 = vector.multi_reduction <minimumf>, %266, %cst_88 [1] : vector<128x128xf32> to vector<128xf32>
    %268 = vector.shape_cast %267 : vector<128xf32> to vector<128x1xf32>
    %269 = vector.broadcast %268 : vector<128x1xf32> to vector<128x128xf32>
    %270 = arith.cmpf oeq, %101, %269 : vector<128x128xf32>
    %cst_89 = arith.constant 0.000000e+00 : f32
    %271 = vector.broadcast %cst_89 : f32 to vector<128x128xf32>
    %272 = arith.select %270, %89, %271 : vector<128x128xi1>, vector<128x128xf32>
    %cst_90 = arith.constant dense<0xFF800000> : vector<128xf32>
    %273 = vector.multi_reduction <maximumf>, %272, %cst_90 [1] : vector<128x128xf32> to vector<128xf32>
    %274 = vector.shape_cast %273 : vector<128xf32> to vector<128x1xf32>
    %c6_i32 = arith.constant 6 : i32
    %275 = vector.broadcast %c6_i32 : i32 to vector<128x8xi32>
    %276 = arith.cmpi eq, %102, %275 : vector<128x8xi32>
    %277 = vector.shape_cast %268 : vector<128x1xf32> to vector<128x1xf32>
    %278 = vector.broadcast %277 : vector<128x1xf32> to vector<128x8xf32>
    %279 = arith.select %276, %278, %253 : vector<128x8xi1>, vector<128x8xf32>
    %c6_i32_91 = arith.constant 6 : i32
    %280 = vector.broadcast %c6_i32_91 : i32 to vector<128x8xi32>
    %281 = arith.cmpi eq, %102, %280 : vector<128x8xi32>
    %282 = vector.shape_cast %274 : vector<128x1xf32> to vector<128x1xf32>
    %283 = vector.broadcast %282 : vector<128x1xf32> to vector<128x8xf32>
    %284 = arith.select %281, %283, %258 : vector<128x8xi1>, vector<128x8xf32>
    %cst_92 = arith.constant -1.000000e+00 : f32
    %285 = vector.broadcast %cst_92 : f32 to vector<128x128xf32>
    %286 = arith.select %270, %285, %260 : vector<128x128xi1>, vector<128x128xf32>
    %cst_93 = arith.constant dense<0xFF800000> : vector<128xf32>
    %287 = vector.multi_reduction <maximumf>, %286, %cst_93 [1] : vector<128x128xf32> to vector<128xf32>
    %288 = vector.shape_cast %287 : vector<128xf32> to vector<128x1xf32>
    %289 = vector.broadcast %288 : vector<128x1xf32> to vector<128x128xf32>
    %290 = arith.cmpf oeq, %286, %289 : vector<128x128xf32>
    %cst_94 = arith.constant 1.280000e+02 : f32
    %291 = vector.broadcast %cst_94 : f32 to vector<128x128xf32>
    %292 = arith.select %290, %101, %291 : vector<128x128xi1>, vector<128x128xf32>
    %cst_95 = arith.constant dense<0x7F800000> : vector<128xf32>
    %293 = vector.multi_reduction <minimumf>, %292, %cst_95 [1] : vector<128x128xf32> to vector<128xf32>
    %294 = vector.shape_cast %293 : vector<128xf32> to vector<128x1xf32>
    %295 = vector.broadcast %294 : vector<128x1xf32> to vector<128x128xf32>
    %296 = arith.cmpf oeq, %101, %295 : vector<128x128xf32>
    %cst_96 = arith.constant 0.000000e+00 : f32
    %297 = vector.broadcast %cst_96 : f32 to vector<128x128xf32>
    %298 = arith.select %296, %89, %297 : vector<128x128xi1>, vector<128x128xf32>
    %cst_97 = arith.constant dense<0xFF800000> : vector<128xf32>
    %299 = vector.multi_reduction <maximumf>, %298, %cst_97 [1] : vector<128x128xf32> to vector<128xf32>
    %300 = vector.shape_cast %299 : vector<128xf32> to vector<128x1xf32>
    %c7_i32 = arith.constant 7 : i32
    %301 = vector.broadcast %c7_i32 : i32 to vector<128x8xi32>
    %302 = arith.cmpi eq, %102, %301 : vector<128x8xi32>
    %303 = vector.shape_cast %294 : vector<128x1xf32> to vector<128x1xf32>
    %304 = vector.broadcast %303 : vector<128x1xf32> to vector<128x8xf32>
    %305 = arith.select %302, %304, %279 : vector<128x8xi1>, vector<128x8xf32>
    %c7_i32_98 = arith.constant 7 : i32
    %306 = vector.broadcast %c7_i32_98 : i32 to vector<128x8xi32>
    %307 = arith.cmpi eq, %102, %306 : vector<128x8xi32>
    %308 = vector.shape_cast %300 : vector<128x1xf32> to vector<128x1xf32>
    %309 = vector.broadcast %308 : vector<128x1xf32> to vector<128x8xf32>
    %310 = arith.select %307, %309, %284 : vector<128x8xi1>, vector<128x8xf32>
    %311 = arith.fptosi %305 : vector<128x8xf32> to vector<128x8xi32>
    %c0_99 = arith.constant 0 : index
    %c0_100 = arith.constant 0 : index
    %c0_101 = arith.constant 0 : index
    %312 = vector.load %arg6[%c0_99, %c0_100, %c0_101] : memref<1x128x8xi32, #tpu.memory_space<vmem>>, vector<1x128x8xi32>
    %313 = vector.shape_cast %312 : vector<1x128x8xi32> to vector<128x8xi32>
    %314 = vector.shape_cast %311 : vector<128x8xi32> to vector<1x128x8xi32>
    tpu.vector_store %arg6[%c0_99, %c0_100, %c0_101], %314 {strides = array<i32>} : memref<1x128x8xi32, #tpu.memory_space<vmem>>, vector<1x128x8xi32>,
    %c0_102 = arith.constant 0 : index
    %c0_103 = arith.constant 0 : index
    %c0_104 = arith.constant 0 : index
    %315 = vector.load %arg7[%c0_102, %c0_103, %c0_104] : memref<1x128x8xf32, #tpu.memory_space<vmem>>, vector<1x128x8xf32>
    %316 = vector.shape_cast %315 : vector<1x128x8xf32> to vector<128x8xf32>
    %317 = vector.shape_cast %310 : vector<128x8xf32> to vector<1x128x8xf32>
    tpu.vector_store %arg7[%c0_102, %c0_103, %c0_104], %317 {strides = array<i32>} : memref<1x128x8xf32, #tpu.memory_space<vmem>>, vector<1x128x8xf32>,
    return
  }
  func.func @transform_0(%arg0: i32) -> (i32, i32, i32) {
    %c0_i32 = arith.constant 0 : i32
    %c0_i32_0 = arith.constant 0 : i32
    %c0_i32_1 = arith.constant 0 : i32
    return %arg0, %c0_i32, %c0_i32_0 : i32, i32, i32
  }
  func.func @transform_1(%arg0: i32) -> (i32, i32, i32) {
    %c0_i32 = arith.constant 0 : i32
    %c0_i32_0 = arith.constant 0 : i32
    %c0_i32_1 = arith.constant 0 : i32
    return %arg0, %c0_i32, %c0_i32_0 : i32, i32, i32
  }
  func.func @transform_2(%arg0: i32) -> (i32, i32, i32) {
    %c0_i32 = arith.constant 0 : i32
    %c0_i32_0 = arith.constant 0 : i32
    %c0_i32_1 = arith.constant 0 : i32
    return %arg0, %c0_i32, %c0_i32_0 : i32, i32, i32
  }
  func.func @transform_3(%arg0: i32) -> (i32, i32, i32) {
    %c0_i32 = arith.constant 0 : i32
    %c0_i32_0 = arith.constant 0 : i32
    %c0_i32_1 = arith.constant 0 : i32
    return %arg0, %c0_i32, %c0_i32_0 : i32, i32, i32
  }
  func.func @transform_4(%arg0: i32) -> (i32, i32, i32) {
    %c0_i32 = arith.constant 0 : i32
    %c0_i32_0 = arith.constant 0 : i32
    %c0_i32_1 = arith.constant 0 : i32
    return %arg0, %c0_i32, %c0_i32_0 : i32, i32, i32
  }
  func.func @transform_5(%arg0: i32) -> (i32, i32, i32) {
    %c0_i32 = arith.constant 0 : i32
    %c0_i32_0 = arith.constant 0 : i32
    %c0_i32_1 = arith.constant 0 : i32
    return %arg0, %c0_i32, %c0_i32_0 : i32, i32, i32
  }
  func.func @transform_6(%arg0: i32) -> (i32, i32, i32) {
    %c0_i32 = arith.constant 0 : i32
    %c0_i32_0 = arith.constant 0 : i32
    %c0_i32_1 = arith.constant 0 : i32
    return %arg0, %c0_i32, %c0_i32_0 : i32, i32, i32
  }
}

</mosaic_0001>

<llo_original>
// kernel: tpu_custom_call.1
$region0: #{tpu_custom_call.1}
  #allocation0 [shape = 'u32[]', space=smem, size = 0x4, offset = 0x4, fixed_abs, tag = 'smem constant byte address 0x4 - core index']
  #allocation1 [shape = 'u32[144,128]{1,0:T(1,128)}', space=vmem, size = 0x12000, scoped, tag = 'internal scratch']
  %s0 = inlined_call_operand.vmem [shape: f32[2,4,128], index: 0, kind: input, shape index: {}]
  %s1 = inlined_call_operand.vmem [shape: f32[2,128,4], index: 1, kind: input, shape index: {}]
  %s2 = inlined_call_operand.vmem [shape: f32[2,1,128], index: 2, kind: input, shape index: {}]
  %s3 = inlined_call_operand.vmem [shape: f32[2,128,1], index: 3, kind: input, shape index: {}]
  %s4 = inlined_call_operand.hbm [shape: s8[2,128,128], index: 4, kind: output, shape index: {0}]
  %s5 = inlined_call_operand.vmem [shape: s32[2,128,8], index: 5, kind: output, shape index: {1}]
  %s6 = inlined_call_operand.vmem [shape: f32[2,128,8], index: 6, kind: output, shape index: {2}]
  %7 = xla_tuple %s4, %s5, %s6
  %s8 = sld [smem:[#allocation0]]
  $region65: #{tpu_custom_call.1} parent=0
    _
  %s10 = ssub.s32 1, %s8
  %s11 = scalar_select 0, %s10, %s8
  $region1: #{tpu_custom_call.1} parent=0
    #allocation2 [shape = 'u8[32768]{0}', space=vmem, size = 0x8000, scoped, tag = 'output window, operand 0']
    #allocation3 [shape = 's32[2]{0}', space=sflag, size = 0x8, scoped, tag = 'scoped memory for tpu_custom_call.1']
    %12 = vsyncpa [#allocation3], 0
    %s13 = scalar_lea.sflag [#allocation3], 1
    %14 = vsyncpa %s13, 0
    loop: start=0, step=1, limit=4
    $region2: #{tpu_custom_call.1} parent=1 // loop_pre_header
      _
    $region3: #{tpu_custom_call.1} parent=1 // loop_header
      %s16 = sphi 0, %s20
      %p17 = scmp.ge.s32.totalorder %s16, 4
      %s26 = sphi 0, %s28
      %s29 = sphi 0, %s26
      %s30 = sphi 0, %s29
      %s46 = sphi 0, %s30
      %s52 = sphi 0, %s54
      %s55 = sphi 0, %s52
      %s56 = sphi 0, %s55
      %s72 = sphi 0, %s56
      %s78 = sphi 0, %s80
      %s81 = sphi 0, %s78
      %s82 = sphi 0, %s81
      %s98 = sphi 0, %s82
      %s104 = sphi 0, %s106
      %s107 = sphi 0, %s104
      %s108 = sphi 0, %s107
      %s124 = sphi 0, %s108
      %s130 = sphi 0, %s132
      %s133 = sphi 0, %s130
      %s134 = sphi 0, %s133
      %s150 = sphi 0, %s134
      %s156 = sphi 0, %s158
      %s159 = sphi 0, %s156
      %s160 = sphi 0, %s159
      %s176 = sphi 0, %s160
      %s182 = sphi 0, %s184
      %s185 = sphi 0, %s182
      %s186 = sphi 0, %s185
      %s202 = sphi 0, %s186
    $region4: #{tpu_custom_call.1} parent=1 // loop_header_branch
      %19 = sbr.rel (%p17) target = $region8
    $region5: #{tpu_custom_call.1} parent=1 // loop_body
      %s21 = ssub.s32 %s16, 1
      %s22 = ssub.s32 %s16, 2
      %s23 = sadd.s32 %s16, 1
      %s24 = ssub.s32 %s16, %s23
      %p25 = scmp.eq.s32.totalorder %s24, 0
      %s27 = sadd.s32 %s26, 1
      %s28 = scalar_select %p25, %s26, %s27
      %p31 = pneg %p25
      %p32 = scmp.eq.s32.totalorder %s16, 1
      %p33 = por %p31, %p32
      %p34 = scmp.ne.s32.totalorder %s26, %s29
      %p35 = scmp.eq.s32.totalorder %s16, 0
      %p36 = por %p34, %p35
      %p37 = scmp.ne.s32.totalorder %s26, %s29
      %p38 = scmp.eq.s32.totalorder %s21, 1
      %p39 = por %p37, %p38
      %p40 = scmp.ne.s32.totalorder %s29, %s30
      %p41 = scmp.eq.s32.totalorder %s21, 0
      %p42 = por %p40, %p41
      %p43 = scmp.ne.s32.totalorder %s29, %s30
      %p44 = scmp.eq.s32.totalorder %s22, 1
      %p45 = por %p43, %p44
      %p47 = scmp.ne.s32.totalorder %s30, %s46
      %p48 = scmp.eq.s32.totalorder %s22, 0
      %p49 = por %p47, %p48
      %s50 = ssub.s32 %s16, %s23
      %p51 = scmp.eq.s32.totalorder %s50, 0
      %s53 = sadd.s32 %s52, 1
      %s54 = scalar_select %p51, %s52, %s53
      %p57 = pneg %p51
      %p58 = scmp.eq.s32.totalorder %s16, 1
      %p59 = por %p57, %p58
      %p60 = scmp.ne.s32.totalorder %s52, %s55
      %p61 = scmp.eq.s32.totalorder %s16, 0
      %p62 = por %p60, %p61
      %p63 = scmp.ne.s32.totalorder %s52, %s55
      %p64 = scmp.eq.s32.totalorder %s21, 1
      %p65 = por %p63, %p64
      %p66 = scmp.ne.s32.totalorder %s55, %s56
      %p67 = scmp.eq.s32.totalorder %s21, 0
      %p68 = por %p66, %p67
      %p69 = scmp.ne.s32.totalorder %s55, %s56
      %p70 = scmp.eq.s32.totalorder %s22, 1
      %p71 = por %p69, %p70
      %p73 = scmp.ne.s32.totalorder %s56, %s72
      %p74 = scmp.eq.s32.totalorder %s22, 0
      %p75 = por %p73, %p74
      %s76 = ssub.s32 %s16, %s23
      %p77 = scmp.eq.s32.totalorder %s76, 0
      %s79 = sadd.s32 %s78, 1
      %s80 = scalar_select %p77, %s78, %s79
      %p83 = pneg %p77
      %p84 = scmp.eq.s32.totalorder %s16, 1
      %p85 = por %p83, %p84
      %p86 = scmp.ne.s32.totalorder %s78, %s81
      %p87 = scmp.eq.s32.totalorder %s16, 0
      %p88 = por %p86, %p87
      %p89 = scmp.ne.s32.totalorder %s78, %s81
      %p90 = scmp.eq.s32.totalorder %s21, 1
      %p91 = por %p89, %p90
      %p92 = scmp.ne.s32.totalorder %s81, %s82
      %p93 = scmp.eq.s32.totalorder %s21, 0
      %p94 = por %p92, %p93
      %p95 = scmp.ne.s32.totalorder %s81, %s82
      %p96 = scmp.eq.s32.totalorder %s22, 1
      %p97 = por %p95, %p96
      %p99 = scmp.ne.s32.totalorder %s82, %s98
      %p100 = scmp.eq.s32.totalorder %s22, 0
      %p101 = por %p99, %p100
      %s102 = ssub.s32 %s16, %s23
      %p103 = scmp.eq.s32.totalorder %s102, 0
      %s105 = sadd.s32 %s104, 1
      %s106 = scalar_select %p103, %s104, %s105
      %p109 = pneg %p103
      %p110 = scmp.eq.s32.totalorder %s16, 1
      %p111 = por %p109, %p110
      %p112 = scmp.ne.s32.totalorder %s104, %s107
      %p113 = scmp.eq.s32.totalorder %s16, 0
      %p114 = por %p112, %p113
      %p115 = scmp.ne.s32.totalorder %s104, %s107
      %p116 = scmp.eq.s32.totalorder %s21, 1
      %p117 = por %p115, %p116
      %p118 = scmp.ne.s32.totalorder %s107, %s108
      %p119 = scmp.eq.s32.totalorder %s21, 0
      %p120 = por %p118, %p119
      %p121 = scmp.ne.s32.totalorder %s107, %s108
      %p122 = scmp.eq.s32.totalorder %s22, 1
      %p123 = por %p121, %p122
      %p125 = scmp.ne.s32.totalorder %s108, %s124
      %p126 = scmp.eq.s32.totalorder %s22, 0
      %p127 = por %p125, %p126
      %s128 = ssub.s32 %s16, %s23
      %p129 = scmp.eq.s32.totalorder %s128, 0
      %s131 = sadd.s32 %s130, 1
      %s132 = scalar_select %p129, %s130, %s131
      %p135 = pneg %p129
      %p136 = scmp.eq.s32.totalorder %s16, 1
      %p137 = por %p135, %p136
      %p138 = scmp.ne.s32.totalorder %s130, %s133
      %p139 = scmp.eq.s32.totalorder %s16, 0
      %p140 = por %p138, %p139
      %p141 = scmp.ne.s32.totalorder %s130, %s133
      %p142 = scmp.eq.s32.totalorder %s21, 1
      %p143 = por %p141, %p142
      %p144 = scmp.ne.s32.totalorder %s133, %s134
      %p145 = scmp.eq.s32.totalorder %s21, 0
      %p146 = por %p144, %p145
      %p147 = scmp.ne.s32.totalorder %s133, %s134
      %p148 = scmp.eq.s32.totalorder %s22, 1
      %p149 = por %p147, %p148
      %p151 = scmp.ne.s32.totalorder %s134, %s150
      %p152 = scmp.eq.s32.totalorder %s22, 0
      %p153 = por %p151, %p152
      %s154 = ssub.s32 %s16, %s23
      %p155 = scmp.eq.s32.totalorder %s154, 0
      %s157 = sadd.s32 %s156, 1
      %s158 = scalar_select %p155, %s156, %s157
      %p161 = pneg %p155
      %p162 = scmp.eq.s32.totalorder %s16, 1
      %p163 = por %p161, %p162
      %p164 = scmp.ne.s32.totalorder %s156, %s159
      %p165 = scmp.eq.s32.totalorder %s16, 0
      %p166 = por %p164, %p165
      %p167 = scmp.ne.s32.totalorder %s156, %s159
      %p168 = scmp.eq.s32.totalorder %s21, 1
      %p169 = por %p167, %p168
      %p170 = scmp.ne.s32.totalorder %s159, %s160
      %p171 = scmp.eq.s32.totalorder %s21, 0
      %p172 = por %p170, %p171
      %p173 = scmp.ne.s32.totalorder %s159, %s160
      %p174 = scmp.eq.s32.totalorder %s22, 1
      %p175 = por %p173, %p174
      %p177 = scmp.ne.s32.totalorder %s160, %s176
      %p178 = scmp.eq.s32.totalorder %s22, 0
      %p179 = por %p177, %p178
      %s180 = ssub.s32 %s16, %s23
      %p181 = scmp.eq.s32.totalorder %s180, 0
      %s183 = sadd.s32 %s182, 1
      %s184 = scalar_select %p181, %s182, %s183
      %p187 = pneg %p181
      %p188 = scmp.eq.s32.totalorder %s16, 1
      %p189 = por %p187, %p188
      %p190 = scmp.ne.s32.totalorder %s182, %s185
      %p191 = scmp.eq.s32.totalorder %s16, 0
      %p192 = por %p190, %p191
      %p193 = scmp.ne.s32.totalorder %s182, %s185
      %p194 = scmp.eq.s32.totalorder %s21, 1
      %p195 = por %p193, %p194
      %p196 = scmp.ne.s32.totalorder %s185, %s186
      %p197 = scmp.eq.s32.totalorder %s21, 0
      %p198 = por %p196, %p197
      %p199 = scmp.ne.s32.totalorder %s185, %s186
      %p200 = scmp.eq.s32.totalorder %s22, 1
      %p201 = por %p199, %p200
      %p203 = scmp.ne.s32.totalorder %s186, %s202
      %p204 = scmp.eq.s32.totalorder %s22, 0
      %p205 = por %p203, %p204
      %p206 = scmp.le.s32.totalorder 1, %s16
      %p207 = scmp.lt.s32.totalorder %s16, 3
      %p208 = pnand %p206, %p207
      %p209 = pneg %p208
      // Predicated region
      $region9: #{tpu_custom_call.1} parent=5 // pred_check
        _
      $region10: #{tpu_custom_call.1} parent=5 // pred_check_branch
        %211 = sbr.rel (%p208) target = $region12
      $region11: #{tpu_custom_call.1} parent=5 // pred_region
        %s212 = ssub.s32 %s16, 1
      $region12: #{tpu_custom_call.1} parent=5 // pred_fallthru
        _
      %p213 = scmp.lt.s32.totalorder %s16, 2
      // Predicated region
      $region13: #{tpu_custom_call.1} parent=5 // pred_check
        %p214 = pneg %p213
      $region14: #{tpu_custom_call.1} parent=5 // pred_check_branch
        %216 = sbr.rel (%p214) target = $region16
      $region15: #{tpu_custom_call.1} parent=5 // pred_region
        // Predicated region
        $region17: #{tpu_custom_call.1} parent=15 // pred_check
          %p217 = pneg %p36
        $region18: #{tpu_custom_call.1} parent=15 // pred_check_branch
          %219 = sbr.rel (%p217) target = $region20
        $region19: #{tpu_custom_call.1} parent=15 // pred_region
          %p220 = scmp.lt.s32.totalorder %s16, 1
          %s221 = scalar_select %p220, %s16, 1
          %s222 = smul.addr %s221, 4
          %s223 = scalar_lea.vmem %s0, %s222
        $region20: #{tpu_custom_call.1} parent=15 // pred_fallthru
          _
        // Predicated region
        $region21: #{tpu_custom_call.1} parent=15 // pred_check
          %p224 = pneg %p62
        $region22: #{tpu_custom_call.1} parent=15 // pred_check_branch
          %226 = sbr.rel (%p224) target = $region24
        $region23: #{tpu_custom_call.1} parent=15 // pred_region
          %p227 = scmp.lt.s32.totalorder %s16, 1
          %s228 = scalar_select %p227, %s16, 1
          %s229 = smul.addr %s228, 16
          %s230 = smul.addr %s229, 8
          %s231 = scalar_lea.vmem %s1, %s230
        $region24: #{tpu_custom_call.1} parent=15 // pred_fallthru
          _
        // Predicated region
        $region25: #{tpu_custom_call.1} parent=15 // pred_check
          %p232 = pneg %p88
        $region26: #{tpu_custom_call.1} parent=15 // pred_check_branch
          %234 = sbr.rel (%p232) target = $region28
        $region27: #{tpu_custom_call.1} parent=15 // pred_region
          %p235 = scmp.lt.s32.totalorder %s16, 1
          %s236 = scalar_select %p235, %s16, 1
          %s237 = scalar_lea.vmem %s2, %s236
        $region28: #{tpu_custom_call.1} parent=15 // pred_fallthru
          _
        // Predicated region
        $region29: #{tpu_custom_call.1} parent=15 // pred_check
          %p238 = pneg %p114
        $region30: #{tpu_custom_call.1} parent=15 // pred_check_branch
          %240 = sbr.rel (%p238) target = $region32
        $region31: #{tpu_custom_call.1} parent=15 // pred_region
          %p241 = scmp.lt.s32.totalorder %s16, 1
          %s242 = scalar_select %p241, %s16, 1
          %s243 = smul.addr %s242, 16
          %s244 = smul.addr %s243, 8
          %s245 = scalar_lea.vmem %s3, %s244
        $region32: #{tpu_custom_call.1} parent=15 // pred_fallthru
          _
      $region16: #{tpu_custom_call.1} parent=5 // pred_fallthru
        _
      %p246 = scmp.le.s32.totalorder 1, %s16
      %p247 = scmp.lt.s32.totalorder %s16, 3
      %p248 = pnand %p246, %p247
      %p249 = pneg %p248
      // Predicated region
      $region33: #{tpu_custom_call.1} parent=5 // pred_check
        _
      $region34: #{tpu_custom_call.1} parent=5 // pred_check_branch
        %251 = sbr.rel (%p248) target = $region36
      $region35: #{tpu_custom_call.1} parent=5 // pred_region
        %s252 = ssub.s32 %s16, 1
        %p253 = scmp.lt.s32.totalorder %s21, 1
        %s254 = scalar_select %p253, %s21, 1
        %s255 = smul.addr %s254, 4
        %s256 = scalar_lea.vmem %s0, %s255
        %p257 = pneg %p42
        %p258 = pneg %p39
        %p259 = scmp.lt.s32.totalorder %s21, 1
        %s260 = scalar_select %p259, %s21, 1
        %s261 = smul.addr %s260, 16
        %s262 = smul.addr %s261, 8
        %s263 = scalar_lea.vmem %s1, %s262
        %p264 = pneg %p68
        %p265 = pneg %p65
        %p266 = scmp.lt.s32.totalorder %s21, 1
        %s267 = scalar_select %p266, %s21, 1
        %s268 = scalar_lea.vmem %s2, %s267
        %p269 = pneg %p94
        %p270 = pneg %p91
        %p271 = scmp.lt.s32.totalorder %s21, 1
        %s272 = scalar_select %p271, %s21, 1
        %s273 = smul.addr %s272, 16
        %s274 = smul.addr %s273, 8
        %s275 = scalar_lea.vmem %s3, %s274
        %p276 = pneg %p120
        %p277 = pneg %p117
        %p278 = pneg %p146
        %p279 = pneg %p143
        %s280 = sand.u32 %s133, 1
        %s281 = scalar_lea.sflag [#allocation3], %s280
        %s282 = sand.u32 %s133, 1
        %s283 = smul.addr %s282, 32
        %s284 = scalar_lea.vmem [#allocation2], %s283
        %p285 = pneg %p172
        %p286 = pneg %p169
        %p287 = scmp.lt.s32.totalorder %s21, 1
        %s288 = scalar_select %p287, %s21, 1
        %s289 = smul.addr %s288, 16
        %s290 = smul.addr %s289, 8
        %s291 = scalar_lea.vmem %s5, %s290
        %p292 = pneg %p198
        %p293 = pneg %p195
        %p294 = scmp.lt.s32.totalorder %s21, 1
        %s295 = scalar_select %p294, %s21, 1
        %s296 = smul.addr %s295, 16
        %s297 = smul.addr %s296, 8
        %s298 = scalar_lea.vmem %s6, %s297
        %p299 = scmp.lt.s32.totalorder %s21, 1
        %s300 = scalar_select %p299, %s21, 1
        %s301 = smul.addr %s300, 4
        %s302 = scalar_lea.vmem %s0, %s301
        %p303 = scmp.lt.s32.totalorder %s21, 1
        %s304 = scalar_select %p303, %s21, 1
        %s305 = smul.addr %s304, 16
        %s306 = smul.addr %s305, 8
        %s307 = scalar_lea.vmem %s1, %s306
        %p308 = scmp.lt.s32.totalorder %s21, 1
        %s309 = scalar_select %p308, %s21, 1
        %s310 = scalar_lea.vmem %s2, %s309
        %p311 = scmp.lt.s32.totalorder %s21, 1
        %s312 = scalar_select %p311, %s21, 1
        %s313 = smul.addr %s312, 16
        %s314 = smul.addr %s313, 8
        %s315 = scalar_lea.vmem %s3, %s314
        %p316 = scmp.lt.s32.totalorder %s21, 1
        %s317 = scalar_select %p316, %s21, 1
        %s318 = smul.addr %s317, 16
        %s319 = smul.addr %s318, 8
        %s320 = scalar_lea.vmem %s5, %s319
        %p321 = scmp.lt.s32.totalorder %s21, 1
        %s322 = scalar_select %p321, %s21, 1
        %s323 = smul.addr %s322, 16
        %s324 = smul.addr %s323, 8
        %s325 = scalar_lea.vmem %s6, %s324
        %v328 = vld [vmem:[%s302] sm:$0x1]
        %v329 = vld [vmem:[%s302 + $0x1] sm:$0x1]
        %v330 = vld [vmem:[%s302 + $0x2] sm:$0x1]
        %v331 = vld [vmem:[%s302 + $0x3] sm:$0x1]
        %v332 = vmul.f32 %v330, 0.5
        %v333 = vsub.f32 %v328, %v332
        %v334 = vmul.f32 %v331, 0.5
        %v335 = vsub.f32 %v329, %v334
        %v336 = vadd.f32 %v328, %v332
        %v337 = vadd.f32 %v329, %v334
        %v338 = vld [vmem:[%s307] sm:$0xff]
        %v339 = vld [vmem:[%s307 + $0x8] sm:$0xff]
        %v340 = vld [vmem:[%s307 + $0x10] sm:$0xff]
        %v341 = vld [vmem:[%s307 + $0x18] sm:$0xff]
        %v342 = vld [vmem:[%s307 + $0x20] sm:$0xff]
        %v343 = vld [vmem:[%s307 + $0x28] sm:$0xff]
        %v344 = vld [vmem:[%s307 + $0x30] sm:$0xff]
        %v345 = vld [vmem:[%s307 + $0x38] sm:$0xff]
        %v346 = vld [vmem:[%s307 + $0x40] sm:$0xff]
        %v347 = vld [vmem:[%s307 + $0x48] sm:$0xff]
        %v348 = vld [vmem:[%s307 + $0x50] sm:$0xff]
        %v349 = vld [vmem:[%s307 + $0x58] sm:$0xff]
        %v350 = vld [vmem:[%s307 + $0x60] sm:$0xff]
        %v351 = vld [vmem:[%s307 + $0x68] sm:$0xff]
        %v352 = vld [vmem:[%s307 + $0x70] sm:$0xff]
        %v353 = vld [vmem:[%s307 + $0x78] sm:$0xff]
        %v354 = vmul.f32 %v338, 0.5
        %v355 = vmul.f32 %v339, 0.5
        %v356 = vmul.f32 %v340, 0.5
        %v357 = vmul.f32 %v341, 0.5
        %v358 = vmul.f32 %v342, 0.5
        %v359 = vmul.f32 %v343, 0.5
        %v360 = vmul.f32 %v344, 0.5
        %v361 = vmul.f32 %v345, 0.5
        %v362 = vmul.f32 %v346, 0.5
        %v363 = vmul.f32 %v347, 0.5
        %v364 = vmul.f32 %v348, 0.5
        %v365 = vmul.f32 %v349, 0.5
        %v366 = vmul.f32 %v350, 0.5
        %v367 = vmul.f32 %v351, 0.5
        %v368 = vmul.f32 %v352, 0.5
        %v369 = vmul.f32 %v353, 0.5
        %386 = vrot.lane.b32.xlu0 %v354, 126
        %v387 = vpop.permute.xlu0 %386
        %388 = vrot.lane.b32.xlu0 %v355, 126
        %v389 = vpop.permute.xlu0 %388
        %390 = vrot.lane.b32.xlu0 %v356, 126
        %v391 = vpop.permute.xlu0 %390
        %392 = vrot.lane.b32.xlu0 %v357, 126
        %v393 = vpop.permute.xlu0 %392
        %394 = vrot.lane.b32.xlu0 %v358, 126
        %v395 = vpop.permute.xlu0 %394
        %396 = vrot.lane.b32.xlu0 %v359, 126
        %v397 = vpop.permute.xlu0 %396
        %398 = vrot.lane.b32.xlu0 %v360, 126
        %v399 = vpop.permute.xlu0 %398
        %400 = vrot.lane.b32.xlu0 %v361, 126
        %v401 = vpop.permute.xlu0 %400
        %402 = vrot.lane.b32.xlu0 %v362, 126
        %v403 = vpop.permute.xlu0 %402
        %404 = vrot.lane.b32.xlu0 %v363, 126
        %v405 = vpop.permute.xlu0 %404
        %406 = vrot.lane.b32.xlu0 %v364, 126
        %v407 = vpop.permute.xlu0 %406
        %408 = vrot.lane.b32.xlu0 %v365, 126
        %v409 = vpop.permute.xlu0 %408
        %410 = vrot.lane.b32.xlu0 %v366, 126
        %v411 = vpop.permute.xlu0 %410
        %412 = vrot.lane.b32.xlu0 %v367, 126
        %v413 = vpop.permute.xlu0 %412
        %414 = vrot.lane.b32.xlu0 %v368, 126
        %v415 = vpop.permute.xlu0 %414
        %416 = vrot.lane.b32.xlu0 %v369, 126
        %v417 = vpop.permute.xlu0 %416
        %v434 = vsub.f32 %v338, %v387
        %v435 = vsub.f32 %v339, %v389
        %v436 = vsub.f32 %v340, %v391
        %v437 = vsub.f32 %v341, %v393
        %v438 = vsub.f32 %v342, %v395
        %v439 = vsub.f32 %v343, %v397
        %v440 = vsub.f32 %v344, %v399
        %v441 = vsub.f32 %v345, %v401
        %v442 = vsub.f32 %v346, %v403
        %v443 = vsub.f32 %v347, %v405
        %v444 = vsub.f32 %v348, %v407
        %v445 = vsub.f32 %v349, %v409
        %v446 = vsub.f32 %v350, %v411
        %v447 = vsub.f32 %v351, %v413
        %v448 = vsub.f32 %v352, %v415
        %v449 = vsub.f32 %v353, %v417
        %v450 = vadd.f32 %v338, %v387
        %v451 = vadd.f32 %v339, %v389
        %v452 = vadd.f32 %v340, %v391
        %v453 = vadd.f32 %v341, %v393
        %v454 = vadd.f32 %v342, %v395
        %v455 = vadd.f32 %v343, %v397
        %v456 = vadd.f32 %v344, %v399
        %v457 = vadd.f32 %v345, %v401
        %v458 = vadd.f32 %v346, %v403
        %v459 = vadd.f32 %v347, %v405
        %v460 = vadd.f32 %v348, %v407
        %v461 = vadd.f32 %v349, %v409
        %v462 = vadd.f32 %v350, %v411
        %v463 = vadd.f32 %v351, %v413
        %v464 = vadd.f32 %v352, %v415
        %v465 = vadd.f32 %v353, %v417
        %v466 = vsub.f32 %v336, %v333
        %v467 = vsub.f32 %v337, %v335
        %v468 = vmul.f32 %v466, %v467
        %v469 = vsub.f32 %v450, %v434
        %v470 = vsub.f32 %v451, %v435
        %v471 = vsub.f32 %v452, %v436
        %v472 = vsub.f32 %v453, %v437
        %v473 = vsub.f32 %v454, %v438
        %v474 = vsub.f32 %v455, %v439
        %v475 = vsub.f32 %v456, %v440
        %v476 = vsub.f32 %v457, %v441
        %v477 = vsub.f32 %v458, %v442
        %v478 = vsub.f32 %v459, %v443
        %v479 = vsub.f32 %v460, %v444
        %v480 = vsub.f32 %v461, %v445
        %v481 = vsub.f32 %v462, %v446
        %v482 = vsub.f32 %v463, %v447
        %v483 = vsub.f32 %v464, %v448
        %v484 = vsub.f32 %v465, %v449
        %501 = vrot.lane.b32.xlu0 %v469, 127
        %v502 = vpop.permute.xlu0 %501
        %503 = vrot.lane.b32.xlu0 %v470, 127
        %v504 = vpop.permute.xlu0 %503
        %505 = vrot.lane.b32.xlu0 %v471, 127
        %v506 = vpop.permute.xlu0 %505
        %507 = vrot.lane.b32.xlu0 %v472, 127
        %v508 = vpop.permute.xlu0 %507
        %509 = vrot.lane.b32.xlu0 %v473, 127
        %v510 = vpop.permute.xlu0 %509
        %511 = vrot.lane.b32.xlu0 %v474, 127
        %v512 = vpop.permute.xlu0 %511
        %513 = vrot.lane.b32.xlu0 %v475, 127
        %v514 = vpop.permute.xlu0 %513
        %515 = vrot.lane.b32.xlu0 %v476, 127
        %v516 = vpop.permute.xlu0 %515
        %517 = vrot.lane.b32.xlu0 %v477, 127
        %v518 = vpop.permute.xlu0 %517
        %519 = vrot.lane.b32.xlu0 %v478, 127
        %v520 = vpop.permute.xlu0 %519
        %521 = vrot.lane.b32.xlu0 %v479, 127
        %v522 = vpop.permute.xlu0 %521
        %523 = vrot.lane.b32.xlu0 %v480, 127
        %v524 = vpop.permute.xlu0 %523
        %525 = vrot.lane.b32.xlu0 %v481, 127
        %v526 = vpop.permute.xlu0 %525
        %527 = vrot.lane.b32.xlu0 %v482, 127
        %v528 = vpop.permute.xlu0 %527
        %529 = vrot.lane.b32.xlu0 %v483, 127
        %v530 = vpop.permute.xlu0 %529
        %531 = vrot.lane.b32.xlu0 %v484, 127
        %v532 = vpop.permute.xlu0 %531
        %v549 = vmul.f32 %v469, %v502
        %v550 = vmul.f32 %v470, %v504
        %v551 = vmul.f32 %v471, %v506
        %v552 = vmul.f32 %v472, %v508
        %v553 = vmul.f32 %v473, %v510
        %v554 = vmul.f32 %v474, %v512
        %v555 = vmul.f32 %v475, %v514
        %v556 = vmul.f32 %v476, %v516
        %v557 = vmul.f32 %v477, %v518
        %v558 = vmul.f32 %v478, %v520
        %v559 = vmul.f32 %v479, %v522
        %v560 = vmul.f32 %v480, %v524
        %v561 = vmul.f32 %v481, %v526
        %v562 = vmul.f32 %v482, %v528
        %v563 = vmul.f32 %v483, %v530
        %v564 = vmul.f32 %v484, %v532
        %566 = vset.pattern.permute.xlu0 0
        %567 = vperm.xlu0 %566, %v450
        %v568 = vpop.permute.xlu0 %567
        %571 = vset.pattern.permute.xlu0 0
        %572 = vperm.xlu0 %571, %v451
        %v573 = vpop.permute.xlu0 %572
        %576 = vset.pattern.permute.xlu0 0
        %577 = vperm.xlu0 %576, %v452
        %v578 = vpop.permute.xlu0 %577
        %581 = vset.pattern.permute.xlu0 0
        %582 = vperm.xlu0 %581, %v453
        %v583 = vpop.permute.xlu0 %582
        %586 = vset.pattern.permute.xlu0 0
        %587 = vperm.xlu0 %586, %v454
        %v588 = vpop.permute.xlu0 %587
        %591 = vset.pattern.permute.xlu0 0
        %592 = vperm.xlu0 %591, %v455
        %v593 = vpop.permute.xlu0 %592
        %596 = vset.pattern.permute.xlu0 0
        %597 = vperm.xlu0 %596, %v456
        %v598 = vpop.permute.xlu0 %597
        %601 = vset.pattern.permute.xlu0 0
        %602 = vperm.xlu0 %601, %v457
        %v603 = vpop.permute.xlu0 %602
        %606 = vset.pattern.permute.xlu0 0
        %607 = vperm.xlu0 %606, %v458
        %v608 = vpop.permute.xlu0 %607
        %611 = vset.pattern.permute.xlu0 0
        %612 = vperm.xlu0 %611, %v459
        %v613 = vpop.permute.xlu0 %612
        %616 = vset.pattern.permute.xlu0 0
        %617 = vperm.xlu0 %616, %v460
        %v618 = vpop.permute.xlu0 %617
        %621 = vset.pattern.permute.xlu0 0
        %622 = vperm.xlu0 %621, %v461
        %v623 = vpop.permute.xlu0 %622
        %626 = vset.pattern.permute.xlu0 0
        %627 = vperm.xlu0 %626, %v462
        %v628 = vpop.permute.xlu0 %627
        %631 = vset.pattern.permute.xlu0 0
        %632 = vperm.xlu0 %631, %v463
        %v633 = vpop.permute.xlu0 %632
        %636 = vset.pattern.permute.xlu0 0
        %637 = vperm.xlu0 %636, %v464
        %v638 = vpop.permute.xlu0 %637
        %641 = vset.pattern.permute.xlu0 0
        %642 = vperm.xlu0 %641, %v465
        %v643 = vpop.permute.xlu0 %642
        %v645 = vlaneseq
        %v646 = vshrl.u32 %v645, 7
        %v647 = vsub.s32 0, %v646
        %v648 = vrot.slane %v336, %v647
        %v649 = vmin.f32 %v568, %v648
        %v650 = vmin.f32 %v573, %v648
        %v651 = vmin.f32 %v578, %v648
        %v652 = vmin.f32 %v583, %v648
        %v653 = vmin.f32 %v588, %v648
        %v654 = vmin.f32 %v593, %v648
        %v655 = vmin.f32 %v598, %v648
        %v656 = vmin.f32 %v603, %v648
        %v657 = vmin.f32 %v608, %v648
        %v658 = vmin.f32 %v613, %v648
        %v659 = vmin.f32 %v618, %v648
        %v660 = vmin.f32 %v623, %v648
        %v661 = vmin.f32 %v628, %v648
        %v662 = vmin.f32 %v633, %v648
        %v663 = vmin.f32 %v638, %v648
        %v664 = vmin.f32 %v643, %v648
        %666 = vset.pattern.permute.xlu0 0
        %667 = vperm.xlu0 %666, %v434
        %v668 = vpop.permute.xlu0 %667
        %671 = vset.pattern.permute.xlu0 0
        %672 = vperm.xlu0 %671, %v435
        %v673 = vpop.permute.xlu0 %672
        %676 = vset.pattern.permute.xlu0 0
        %677 = vperm.xlu0 %676, %v436
        %v678 = vpop.permute.xlu0 %677
        %681 = vset.pattern.permute.xlu0 0
        %682 = vperm.xlu0 %681, %v437
        %v683 = vpop.permute.xlu0 %682
        %686 = vset.pattern.permute.xlu0 0
        %687 = vperm.xlu0 %686, %v438
        %v688 = vpop.permute.xlu0 %687
        %691 = vset.pattern.permute.xlu0 0
        %692 = vperm.xlu0 %691, %v439
        %v693 = vpop.permute.xlu0 %692
        %696 = vset.pattern.permute.xlu0 0
        %697 = vperm.xlu0 %696, %v440
        %v698 = vpop.permute.xlu0 %697
        %701 = vset.pattern.permute.xlu0 0
        %702 = vperm.xlu0 %701, %v441
        %v703 = vpop.permute.xlu0 %702
        %706 = vset.pattern.permute.xlu0 0
        %707 = vperm.xlu0 %706, %v442
        %v708 = vpop.permute.xlu0 %707
        %711 = vset.pattern.permute.xlu0 0
        %712 = vperm.xlu0 %711, %v443
        %v713 = vpop.permute.xlu0 %712
        %716 = vset.pattern.permute.xlu0 0
        %717 = vperm.xlu0 %716, %v444
        %v718 = vpop.permute.xlu0 %717
        %721 = vset.pattern.permute.xlu0 0
        %722 = vperm.xlu0 %721, %v445
        %v723 = vpop.permute.xlu0 %722
        %726 = vset.pattern.permute.xlu0 0
        %727 = vperm.xlu0 %726, %v446
        %v728 = vpop.permute.xlu0 %727
        %731 = vset.pattern.permute.xlu0 0
        %732 = vperm.xlu0 %731, %v447
        %v733 = vpop.permute.xlu0 %732
        %736 = vset.pattern.permute.xlu0 0
        %737 = vperm.xlu0 %736, %v448
        %v738 = vpop.permute.xlu0 %737
        %741 = vset.pattern.permute.xlu0 0
        %742 = vperm.xlu0 %741, %v449
        %v743 = vpop.permute.xlu0 %742
        %v745 = vlaneseq
        %v746 = vshrl.u32 %v745, 7
        %v747 = vsub.s32 0, %v746
        %v748 = vrot.slane %v333, %v747
        %v749 = vmax.f32 %v668, %v748
        %v750 = vmax.f32 %v673, %v748
        %v751 = vmax.f32 %v678, %v748
        %v752 = vmax.f32 %v683, %v748
        %v753 = vmax.f32 %v688, %v748
        %v754 = vmax.f32 %v693, %v748
        %v755 = vmax.f32 %v698, %v748
        %v756 = vmax.f32 %v703, %v748
        %v757 = vmax.f32 %v708, %v748
        %v758 = vmax.f32 %v713, %v748
        %v759 = vmax.f32 %v718, %v748
        %v760 = vmax.f32 %v723, %v748
        %v761 = vmax.f32 %v728, %v748
        %v762 = vmax.f32 %v733, %v748
        %v763 = vmax.f32 %v738, %v748
        %v764 = vmax.f32 %v743, %v748
        %v765 = vsub.f32 %v649, %v749
        %v766 = vsub.f32 %v650, %v750
        %v767 = vsub.f32 %v651, %v751
        %v768 = vsub.f32 %v652, %v752
        %v769 = vsub.f32 %v653, %v753
        %v770 = vsub.f32 %v654, %v754
        %v771 = vsub.f32 %v655, %v755
        %v772 = vsub.f32 %v656, %v756
        %v773 = vsub.f32 %v657, %v757
        %v774 = vsub.f32 %v658, %v758
        %v775 = vsub.f32 %v659, %v759
        %v776 = vsub.f32 %v660, %v760
        %v777 = vsub.f32 %v661, %v761
        %v778 = vsub.f32 %v662, %v762
        %v779 = vsub.f32 %v663, %v763
        %v780 = vsub.f32 %v664, %v764
        %v781 = vmax.f32 %v765, 0.0
        %v782 = vmax.f32 %v766, 0.0
        %v783 = vmax.f32 %v767, 0.0
        %v784 = vmax.f32 %v768, 0.0
        %v785 = vmax.f32 %v769, 0.0
        %v786 = vmax.f32 %v770, 0.0
        %v787 = vmax.f32 %v771, 0.0
        %v788 = vmax.f32 %v772, 0.0
        %v789 = vmax.f32 %v773, 0.0
        %v790 = vmax.f32 %v774, 0.0
        %v791 = vmax.f32 %v775, 0.0
        %v792 = vmax.f32 %v776, 0.0
        %v793 = vmax.f32 %v777, 0.0
        %v794 = vmax.f32 %v778, 0.0
        %v795 = vmax.f32 %v779, 0.0
        %v796 = vmax.f32 %v780, 0.0
        %797 = vset.pattern.permute.xlu0 1
        %798 = vperm.xlu0 %797, %v450
        %v799 = vpop.permute.xlu0 %798
        %801 = vset.pattern.permute.xlu0 1
        %802 = vperm.xlu0 %801, %v451
        %v803 = vpop.permute.xlu0 %802
        %805 = vset.pattern.permute.xlu0 1
        %806 = vperm.xlu0 %805, %v452
        %v807 = vpop.permute.xlu0 %806
        %809 = vset.pattern.permute.xlu0 1
        %810 = vperm.xlu0 %809, %v453
        %v811 = vpop.permute.xlu0 %810
        %813 = vset.pattern.permute.xlu0 1
        %814 = vperm.xlu0 %813, %v454
        %v815 = vpop.permute.xlu0 %814
        %817 = vset.pattern.permute.xlu0 1
        %818 = vperm.xlu0 %817, %v455
        %v819 = vpop.permute.xlu0 %818
        %821 = vset.pattern.permute.xlu0 1
        %822 = vperm.xlu0 %821, %v456
        %v823 = vpop.permute.xlu0 %822
        %825 = vset.pattern.permute.xlu0 1
        %826 = vperm.xlu0 %825, %v457
        %v827 = vpop.permute.xlu0 %826
        %829 = vset.pattern.permute.xlu0 1
        %830 = vperm.xlu0 %829, %v458
        %v831 = vpop.permute.xlu0 %830
        %833 = vset.pattern.permute.xlu0 1
        %834 = vperm.xlu0 %833, %v459
        %v835 = vpop.permute.xlu0 %834
        %837 = vset.pattern.permute.xlu0 1
        %838 = vperm.xlu0 %837, %v460
        %v839 = vpop.permute.xlu0 %838
        %841 = vset.pattern.permute.xlu0 1
        %842 = vperm.xlu0 %841, %v461
        %v843 = vpop.permute.xlu0 %842
        %845 = vset.pattern.permute.xlu0 1
        %846 = vperm.xlu0 %845, %v462
        %v847 = vpop.permute.xlu0 %846
        %849 = vset.pattern.permute.xlu0 1
        %850 = vperm.xlu0 %849, %v463
        %v851 = vpop.permute.xlu0 %850
        %853 = vset.pattern.permute.xlu0 1
        %854 = vperm.xlu0 %853, %v464
        %v855 = vpop.permute.xlu0 %854
        %857 = vset.pattern.permute.xlu0 1
        %858 = vperm.xlu0 %857, %v465
        %v859 = vpop.permute.xlu0 %858
        %v861 = vlaneseq
        %v862 = vshrl.u32 %v861, 7
        %v863 = vsub.s32 0, %v862
        %v864 = vrot.slane %v337, %v863
        %v865 = vmin.f32 %v799, %v864
        %v866 = vmin.f32 %v803, %v864
        %v867 = vmin.f32 %v807, %v864
        %v868 = vmin.f32 %v811, %v864
        %v869 = vmin.f32 %v815, %v864
        %v870 = vmin.f32 %v819, %v864
        %v871 = vmin.f32 %v823, %v864
        %v872 = vmin.f32 %v827, %v864
        %v873 = vmin.f32 %v831, %v864
        %v874 = vmin.f32 %v835, %v864
        %v875 = vmin.f32 %v839, %v864
        %v876 = vmin.f32 %v843, %v864
        %v877 = vmin.f32 %v847, %v864
        %v878 = vmin.f32 %v851, %v864
        %v879 = vmin.f32 %v855, %v864
        %v880 = vmin.f32 %v859, %v864
        %881 = vset.pattern.permute.xlu0 1
        %882 = vperm.xlu0 %881, %v434
        %v883 = vpop.permute.xlu0 %882
        %885 = vset.pattern.permute.xlu0 1
        %886 = vperm.xlu0 %885, %v435
        %v887 = vpop.permute.xlu0 %886
        %889 = vset.pattern.permute.xlu0 1
        %890 = vperm.xlu0 %889, %v436
        %v891 = vpop.permute.xlu0 %890
        %893 = vset.pattern.permute.xlu0 1
        %894 = vperm.xlu0 %893, %v437
        %v895 = vpop.permute.xlu0 %894
        %897 = vset.pattern.permute.xlu0 1
        %898 = vperm.xlu0 %897, %v438
        %v899 = vpop.permute.xlu0 %898
        %901 = vset.pattern.permute.xlu0 1
        %902 = vperm.xlu0 %901, %v439
        %v903 = vpop.permute.xlu0 %902
        %905 = vset.pattern.permute.xlu0 1
        %906 = vperm.xlu0 %905, %v440
        %v907 = vpop.permute.xlu0 %906
        %909 = vset.pattern.permute.xlu0 1
        %910 = vperm.xlu0 %909, %v441
        %v911 = vpop.permute.xlu0 %910
        %913 = vset.pattern.permute.xlu0 1
        %914 = vperm.xlu0 %913, %v442
        %v915 = vpop.permute.xlu0 %914
        %917 = vset.pattern.permute.xlu0 1
        %918 = vperm.xlu0 %917, %v443
        %v919 = vpop.permute.xlu0 %918
        %921 = vset.pattern.permute.xlu0 1
        %922 = vperm.xlu0 %921, %v444
        %v923 = vpop.permute.xlu0 %922
        %925 = vset.pattern.permute.xlu0 1
        %926 = vperm.xlu0 %925, %v445
        %v927 = vpop.permute.xlu0 %926
        %929 = vset.pattern.permute.xlu0 1
        %930 = vperm.xlu0 %929, %v446
        %v931 = vpop.permute.xlu0 %930
        %933 = vset.pattern.permute.xlu0 1
        %934 = vperm.xlu0 %933, %v447
        %v935 = vpop.permute.xlu0 %934
        %937 = vset.pattern.permute.xlu0 1
        %938 = vperm.xlu0 %937, %v448
        %v939 = vpop.permute.xlu0 %938
        %941 = vset.pattern.permute.xlu0 1
        %942 = vperm.xlu0 %941, %v449
        %v943 = vpop.permute.xlu0 %942
        %v945 = vlaneseq
        %v946 = vshrl.u32 %v945, 7
        %v947 = vsub.s32 0, %v946
        %v948 = vrot.slane %v335, %v947
        %v949 = vmax.f32 %v883, %v948
        %v950 = vmax.f32 %v887, %v948
        %v951 = vmax.f32 %v891, %v948
        %v952 = vmax.f32 %v895, %v948
        %v953 = vmax.f32 %v899, %v948
        %v954 = vmax.f32 %v903, %v948
        %v955 = vmax.f32 %v907, %v948
        %v956 = vmax.f32 %v911, %v948
        %v957 = vmax.f32 %v915, %v948
        %v958 = vmax.f32 %v919, %v948
        %v959 = vmax.f32 %v923, %v948
        %v960 = vmax.f32 %v927, %v948
        %v961 = vmax.f32 %v931, %v948
        %v962 = vmax.f32 %v935, %v948
        %v963 = vmax.f32 %v939, %v948
        %v964 = vmax.f32 %v943, %v948
        %v965 = vsub.f32 %v865, %v949
        %v966 = vsub.f32 %v866, %v950
        %v967 = vsub.f32 %v867, %v951
        %v968 = vsub.f32 %v868, %v952
        %v969 = vsub.f32 %v869, %v953
        %v970 = vsub.f32 %v870, %v954
        %v971 = vsub.f32 %v871, %v955
        %v972 = vsub.f32 %v872, %v956
        %v973 = vsub.f32 %v873, %v957
        %v974 = vsub.f32 %v874, %v958
        %v975 = vsub.f32 %v875, %v959
        %v976 = vsub.f32 %v876, %v960
        %v977 = vsub.f32 %v877, %v961
        %v978 = vsub.f32 %v878, %v962
        %v979 = vsub.f32 %v879, %v963
        %v980 = vsub.f32 %v880, %v964
        %v981 = vmax.f32 %v965, 0.0
        %v982 = vmax.f32 %v966, 0.0
        %v983 = vmax.f32 %v967, 0.0
        %v984 = vmax.f32 %v968, 0.0
        %v985 = vmax.f32 %v969, 0.0
        %v986 = vmax.f32 %v970, 0.0
        %v987 = vmax.f32 %v971, 0.0
        %v988 = vmax.f32 %v972, 0.0
        %v989 = vmax.f32 %v973, 0.0
        %v990 = vmax.f32 %v974, 0.0
        %v991 = vmax.f32 %v975, 0.0
        %v992 = vmax.f32 %v976, 0.0
        %v993 = vmax.f32 %v977, 0.0
        %v994 = vmax.f32 %v978, 0.0
        %v995 = vmax.f32 %v979, 0.0
        %v996 = vmax.f32 %v980, 0.0
        %v997 = vmul.f32 %v781, %v981
        %v998 = vmul.f32 %v782, %v982
        %v999 = vmul.f32 %v783, %v983
        %v1000 = vmul.f32 %v784, %v984
        %v1001 = vmul.f32 %v785, %v985
        %v1002 = vmul.f32 %v786, %v986
        %v1003 = vmul.f32 %v787, %v987
        %v1004 = vmul.f32 %v788, %v988
        %v1005 = vmul.f32 %v789, %v989
        %v1006 = vmul.f32 %v790, %v990
        %v1007 = vmul.f32 %v791, %v991
        %v1008 = vmul.f32 %v792, %v992
        %v1009 = vmul.f32 %v793, %v993
        %v1010 = vmul.f32 %v794, %v994
        %v1011 = vmul.f32 %v795, %v995
        %v1012 = vmul.f32 %v796, %v996
        %1014 = vset.pattern.permute.xlu0 0
        %1015 = vperm.xlu0 %1014, %v549
        %v1016 = vpop.permute.xlu0 %1015
        %1019 = vset.pattern.permute.xlu0 0
        %1020 = vperm.xlu0 %1019, %v550
        %v1021 = vpop.permute.xlu0 %1020
        %1024 = vset.pattern.permute.xlu0 0
        %1025 = vperm.xlu0 %1024, %v551
        %v1026 = vpop.permute.xlu0 %1025
        %1029 = vset.pattern.permute.xlu0 0
        %1030 = vperm.xlu0 %1029, %v552
        %v1031 = vpop.permute.xlu0 %1030
        %1034 = vset.pattern.permute.xlu0 0
        %1035 = vperm.xlu0 %1034, %v553
        %v1036 = vpop.permute.xlu0 %1035
        %1039 = vset.pattern.permute.xlu0 0
        %1040 = vperm.xlu0 %1039, %v554
        %v1041 = vpop.permute.xlu0 %1040
        %1044 = vset.pattern.permute.xlu0 0
        %1045 = vperm.xlu0 %1044, %v555
        %v1046 = vpop.permute.xlu0 %1045
        %1049 = vset.pattern.permute.xlu0 0
        %1050 = vperm.xlu0 %1049, %v556
        %v1051 = vpop.permute.xlu0 %1050
        %1054 = vset.pattern.permute.xlu0 0
        %1055 = vperm.xlu0 %1054, %v557
        %v1056 = vpop.permute.xlu0 %1055
        %1059 = vset.pattern.permute.xlu0 0
        %1060 = vperm.xlu0 %1059, %v558
        %v1061 = vpop.permute.xlu0 %1060
        %1064 = vset.pattern.permute.xlu0 0
        %1065 = vperm.xlu0 %1064, %v559
        %v1066 = vpop.permute.xlu0 %1065
        %1069 = vset.pattern.permute.xlu0 0
        %1070 = vperm.xlu0 %1069, %v560
        %v1071 = vpop.permute.xlu0 %1070
        %1074 = vset.pattern.permute.xlu0 0
        %1075 = vperm.xlu0 %1074, %v561
        %v1076 = vpop.permute.xlu0 %1075
        %1079 = vset.pattern.permute.xlu0 0
        %1080 = vperm.xlu0 %1079, %v562
        %v1081 = vpop.permute.xlu0 %1080
        %1084 = vset.pattern.permute.xlu0 0
        %1085 = vperm.xlu0 %1084, %v563
        %v1086 = vpop.permute.xlu0 %1085
        %1089 = vset.pattern.permute.xlu0 0
        %1090 = vperm.xlu0 %1089, %v564
        %v1091 = vpop.permute.xlu0 %1090
        %v1093 = vlaneseq
        %v1094 = vshrl.u32 %v1093, 7
        %v1095 = vsub.s32 0, %v1094
        %v1096 = vrot.slane %v468, %v1095
        %v1097 = vadd.f32 %v1016, %v1096
        %v1098 = vadd.f32 %v1021, %v1096
        %v1099 = vadd.f32 %v1026, %v1096
        %v1100 = vadd.f32 %v1031, %v1096
        %v1101 = vadd.f32 %v1036, %v1096
        %v1102 = vadd.f32 %v1041, %v1096
        %v1103 = vadd.f32 %v1046, %v1096
        %v1104 = vadd.f32 %v1051, %v1096
        %v1105 = vadd.f32 %v1056, %v1096
        %v1106 = vadd.f32 %v1061, %v1096
        %v1107 = vadd.f32 %v1066, %v1096
        %v1108 = vadd.f32 %v1071, %v1096
        %v1109 = vadd.f32 %v1076, %v1096
        %v1110 = vadd.f32 %v1081, %v1096
        %v1111 = vadd.f32 %v1086, %v1096
        %v1112 = vadd.f32 %v1091, %v1096
        %v1113 = vsub.f32 %v1097, %v997
        %v1114 = vsub.f32 %v1098, %v998
        %v1115 = vsub.f32 %v1099, %v999
        %v1116 = vsub.f32 %v1100, %v1000
        %v1117 = vsub.f32 %v1101, %v1001
        %v1118 = vsub.f32 %v1102, %v1002
        %v1119 = vsub.f32 %v1103, %v1003
        %v1120 = vsub.f32 %v1104, %v1004
        %v1121 = vsub.f32 %v1105, %v1005
        %v1122 = vsub.f32 %v1106, %v1006
        %v1123 = vsub.f32 %v1107, %v1007
        %v1124 = vsub.f32 %v1108, %v1008
        %v1125 = vsub.f32 %v1109, %v1009
        %v1126 = vsub.f32 %v1110, %v1010
        %v1127 = vsub.f32 %v1111, %v1011
        %v1128 = vsub.f32 %v1112, %v1012
        %v1129 = vmax.f32 %v1113, 1e-09
        %v1130 = vmax.f32 %v1114, 1e-09
        %v1131 = vmax.f32 %v1115, 1e-09
        %v1132 = vmax.f32 %v1116, 1e-09
        %v1133 = vmax.f32 %v1117, 1e-09
        %v1134 = vmax.f32 %v1118, 1e-09
        %v1135 = vmax.f32 %v1119, 1e-09
        %v1136 = vmax.f32 %v1120, 1e-09
        %v1137 = vmax.f32 %v1121, 1e-09
        %v1138 = vmax.f32 %v1122, 1e-09
        %v1139 = vmax.f32 %v1123, 1e-09
        %v1140 = vmax.f32 %v1124, 1e-09
        %v1141 = vmax.f32 %v1125, 1e-09
        %v1142 = vmax.f32 %v1126, 1e-09
        %v1143 = vmax.f32 %v1127, 1e-09
        %v1144 = vmax.f32 %v1128, 1e-09
        %v1145 = vmul.f32 %v1129, 0.5
        %v1146 = vmul.f32 %v1130, 0.5
        %v1147 = vmul.f32 %v1131, 0.5
        %v1148 = vmul.f32 %v1132, 0.5
        %v1149 = vmul.f32 %v1133, 0.5
        %v1150 = vmul.f32 %v1134, 0.5
        %v1151 = vmul.f32 %v1135, 0.5
        %v1152 = vmul.f32 %v1136, 0.5
        %v1153 = vmul.f32 %v1137, 0.5
        %v1154 = vmul.f32 %v1138, 0.5
        %v1155 = vmul.f32 %v1139, 0.5
        %v1156 = vmul.f32 %v1140, 0.5
        %v1157 = vmul.f32 %v1141, 0.5
        %v1158 = vmul.f32 %v1142, 0.5
        %v1159 = vmul.f32 %v1143, 0.5
        %v1160 = vmul.f32 %v1144, 0.5
        %vm1161 = vcmp.ge.f32.partialorder %v997, %v1145
        %vm1162 = vcmp.ge.f32.partialorder %v998, %v1146
        %vm1163 = vcmp.ge.f32.partialorder %v999, %v1147
        %vm1164 = vcmp.ge.f32.partialorder %v1000, %v1148
        %vm1165 = vcmp.ge.f32.partialorder %v1001, %v1149
        %vm1166 = vcmp.ge.f32.partialorder %v1002, %v1150
        %vm1167 = vcmp.ge.f32.partialorder %v1003, %v1151
        %vm1168 = vcmp.ge.f32.partialorder %v1004, %v1152
        %vm1169 = vcmp.ge.f32.partialorder %v1005, %v1153
        %vm1170 = vcmp.ge.f32.partialorder %v1006, %v1154
        %vm1171 = vcmp.ge.f32.partialorder %v1007, %v1155
        %vm1172 = vcmp.ge.f32.partialorder %v1008, %v1156
        %vm1173 = vcmp.ge.f32.partialorder %v1009, %v1157
        %vm1174 = vcmp.ge.f32.partialorder %v1010, %v1158
        %vm1175 = vcmp.ge.f32.partialorder %v1011, %v1159
        %vm1176 = vcmp.ge.f32.partialorder %v1012, %v1160
        %vm1177 = vmpackc.low %vm1162, %vm1161
        %vm1178 = vmpackc.low %vm1164, %vm1163
        %vm1179 = vmpackc.even %vm1178, %vm1177
        %vm1180 = vmpackc.low %vm1166, %vm1165
        %vm1181 = vmpackc.low %vm1168, %vm1167
        %vm1182 = vmpackc.even %vm1181, %vm1180
        %vm1183 = vmpackc.low %vm1170, %vm1169
        %vm1184 = vmpackc.low %vm1172, %vm1171
        %vm1185 = vmpackc.even %vm1184, %vm1183
        %vm1186 = vmpackc.low %vm1174, %vm1173
        %vm1187 = vmpackc.low %vm1176, %vm1175
        %vm1188 = vmpackc.even %vm1187, %vm1186
        %v1189 = vsel %vm1179, 16843009, 0
        %v1190 = vsel %vm1182, 16843009, 0
        %v1191 = vsel %vm1185, 16843009, 0
        %v1192 = vsel %vm1188, 16843009, 0
        %1193 = vst [vmem:[%s284] sm:$0xff] %v1189
        %1194 = vst [vmem:[%s284 + $0x8] sm:$0xff] %v1190
        %1195 = vst [vmem:[%s284 + $0x10] sm:$0xff] %v1191
        %1196 = vst [vmem:[%s284 + $0x18] sm:$0xff] %v1192
        %v1197 = vld [vmem:[%s310] sm:$0x1]
        %v1198 = vld [vmem:[%s315] sm:$0xff]
        %v1199 = vld [vmem:[%s315 + $0x8] sm:$0xff]
        %v1200 = vld [vmem:[%s315 + $0x10] sm:$0xff]
        %v1201 = vld [vmem:[%s315 + $0x18] sm:$0xff]
        %v1202 = vld [vmem:[%s315 + $0x20] sm:$0xff]
        %v1203 = vld [vmem:[%s315 + $0x28] sm:$0xff]
        %v1204 = vld [vmem:[%s315 + $0x30] sm:$0xff]
        %v1205 = vld [vmem:[%s315 + $0x38] sm:$0xff]
        %v1206 = vld [vmem:[%s315 + $0x40] sm:$0xff]
        %v1207 = vld [vmem:[%s315 + $0x48] sm:$0xff]
        %v1208 = vld [vmem:[%s315 + $0x50] sm:$0xff]
        %v1209 = vld [vmem:[%s315 + $0x58] sm:$0xff]
        %v1210 = vld [vmem:[%s315 + $0x60] sm:$0xff]
        %v1211 = vld [vmem:[%s315 + $0x68] sm:$0xff]
        %v1212 = vld [vmem:[%s315 + $0x70] sm:$0xff]
        %v1213 = vld [vmem:[%s315 + $0x78] sm:$0xff]
        %v1214 = vsub.f32 1.0, %v1198
        %v1215 = vsub.f32 1.0, %v1199
        %v1216 = vsub.f32 1.0, %v1200
        %v1217 = vsub.f32 1.0, %v1201
        %v1218 = vsub.f32 1.0, %v1202
        %v1219 = vsub.f32 1.0, %v1203
        %v1220 = vsub.f32 1.0, %v1204
        %v1221 = vsub.f32 1.0, %v1205
        %v1222 = vsub.f32 1.0, %v1206
        %v1223 = vsub.f32 1.0, %v1207
        %v1224 = vsub.f32 1.0, %v1208
        %v1225 = vsub.f32 1.0, %v1209
        %v1226 = vsub.f32 1.0, %v1210
        %v1227 = vsub.f32 1.0, %v1211
        %v1228 = vsub.f32 1.0, %v1212
        %v1229 = vsub.f32 1.0, %v1213
        %v1230 = vsel %vm1161, 1, 0
        %v1231 = vsel %vm1162, 1, 0
        %v1232 = vsel %vm1163, 1, 0
        %v1233 = vsel %vm1164, 1, 0
        %v1234 = vsel %vm1165, 1, 0
        %v1235 = vsel %vm1166, 1, 0
        %v1236 = vsel %vm1167, 1, 0
        %v1237 = vsel %vm1168, 1, 0
        %v1238 = vsel %vm1169, 1, 0
        %v1239 = vsel %vm1170, 1, 0
        %v1240 = vsel %vm1171, 1, 0
        %v1241 = vsel %vm1172, 1, 0
        %v1242 = vsel %vm1173, 1, 0
        %v1243 = vsel %vm1174, 1, 0
        %v1244 = vsel %vm1175, 1, 0
        %v1245 = vsel %vm1176, 1, 0
        %v1246 = vcvt.s32.f32 %v1230
        %v1247 = vcvt.s32.f32 %v1231
        %v1248 = vcvt.s32.f32 %v1232
        %v1249 = vcvt.s32.f32 %v1233
        %v1250 = vcvt.s32.f32 %v1234
        %v1251 = vcvt.s32.f32 %v1235
        %v1252 = vcvt.s32.f32 %v1236
        %v1253 = vcvt.s32.f32 %v1237
        %v1254 = vcvt.s32.f32 %v1238
        %v1255 = vcvt.s32.f32 %v1239
        %v1256 = vcvt.s32.f32 %v1240
        %v1257 = vcvt.s32.f32 %v1241
        %v1258 = vcvt.s32.f32 %v1242
        %v1259 = vcvt.s32.f32 %v1243
        %v1260 = vcvt.s32.f32 %v1244
        %v1261 = vcvt.s32.f32 %v1245
        %v1263 = vlaneseq
        %v1264 = vshrl.u32 %v1263, 7
        %v1265 = vsub.s32 0, %v1264
        %v1266 = vrot.slane %v1197, %v1265
        %v1268 = vmul.f32 %v1246, %v1266
        %v1269 = vmul.f32 %v1247, %v1266
        %v1270 = vmul.f32 %v1248, %v1266
        %v1271 = vmul.f32 %v1249, %v1266
        %v1272 = vmul.f32 %v1250, %v1266
        %v1273 = vmul.f32 %v1251, %v1266
        %v1274 = vmul.f32 %v1252, %v1266
        %v1275 = vmul.f32 %v1253, %v1266
        %v1276 = vmul.f32 %v1254, %v1266
        %v1277 = vmul.f32 %v1255, %v1266
        %v1278 = vmul.f32 %v1256, %v1266
        %v1279 = vmul.f32 %v1257, %v1266
        %v1280 = vmul.f32 %v1258, %v1266
        %v1281 = vmul.f32 %v1259, %v1266
        %v1282 = vmul.f32 %v1260, %v1266
        %v1283 = vmul.f32 %v1261, %v1266
        %1285 = vset.pattern.permute.xlu0 0
        %1286 = vperm.xlu0 %1285, %v1214
        %v1287 = vpop.permute.xlu0 %1286
        %1290 = vset.pattern.permute.xlu0 0
        %1291 = vperm.xlu0 %1290, %v1215
        %v1292 = vpop.permute.xlu0 %1291
        %1295 = vset.pattern.permute.xlu0 0
        %1296 = vperm.xlu0 %1295, %v1216
        %v1297 = vpop.permute.xlu0 %1296
        %1300 = vset.pattern.permute.xlu0 0
        %1301 = vperm.xlu0 %1300, %v1217
        %v1302 = vpop.permute.xlu0 %1301
        %1305 = vset.pattern.permute.xlu0 0
        %1306 = vperm.xlu0 %1305, %v1218
        %v1307 = vpop.permute.xlu0 %1306
        %1310 = vset.pattern.permute.xlu0 0
        %1311 = vperm.xlu0 %1310, %v1219
        %v1312 = vpop.permute.xlu0 %1311
        %1315 = vset.pattern.permute.xlu0 0
        %1316 = vperm.xlu0 %1315, %v1220
        %v1317 = vpop.permute.xlu0 %1316
        %1320 = vset.pattern.permute.xlu0 0
        %1321 = vperm.xlu0 %1320, %v1221
        %v1322 = vpop.permute.xlu0 %1321
        %1325 = vset.pattern.permute.xlu0 0
        %1326 = vperm.xlu0 %1325, %v1222
        %v1327 = vpop.permute.xlu0 %1326
        %1330 = vset.pattern.permute.xlu0 0
        %1331 = vperm.xlu0 %1330, %v1223
        %v1332 = vpop.permute.xlu0 %1331
        %1335 = vset.pattern.permute.xlu0 0
        %1336 = vperm.xlu0 %1335, %v1224
        %v1337 = vpop.permute.xlu0 %1336
        %1340 = vset.pattern.permute.xlu0 0
        %1341 = vperm.xlu0 %1340, %v1225
        %v1342 = vpop.permute.xlu0 %1341
        %1345 = vset.pattern.permute.xlu0 0
        %1346 = vperm.xlu0 %1345, %v1226
        %v1347 = vpop.permute.xlu0 %1346
        %1350 = vset.pattern.permute.xlu0 0
        %1351 = vperm.xlu0 %1350, %v1227
        %v1352 = vpop.permute.xlu0 %1351
        %1355 = vset.pattern.permute.xlu0 0
        %1356 = vperm.xlu0 %1355, %v1228
        %v1357 = vpop.permute.xlu0 %1356
        %1360 = vset.pattern.permute.xlu0 0
        %1361 = vperm.xlu0 %1360, %v1229
        %v1362 = vpop.permute.xlu0 %1361
        %v1364 = vmul.f32 %v1268, %v1287
        %v1365 = vmul.f32 %v1269, %v1292
        %v1366 = vmul.f32 %v1270, %v1297
        %v1367 = vmul.f32 %v1271, %v1302
        %v1368 = vmul.f32 %v1272, %v1307
        %v1369 = vmul.f32 %v1273, %v1312
        %v1370 = vmul.f32 %v1274, %v1317
        %v1371 = vmul.f32 %v1275, %v1322
        %v1372 = vmul.f32 %v1276, %v1327
        %v1373 = vmul.f32 %v1277, %v1332
        %v1374 = vmul.f32 %v1278, %v1337
        %v1375 = vmul.f32 %v1279, %v1342
        %v1376 = vmul.f32 %v1280, %v1347
        %v1377 = vmul.f32 %v1281, %v1352
        %v1378 = vmul.f32 %v1282, %v1357
        %v1379 = vmul.f32 %v1283, %v1362
        %v1380 = vrcp.pop %v1129
        %v1381 = vrcp.pop %v1130
        %v1382 = vrcp.pop %v1131
        %v1383 = vrcp.pop %v1132
        %v1384 = vrcp.pop %v1133
        %v1385 = vrcp.pop %v1134
        %v1386 = vrcp.pop %v1135
        %v1387 = vrcp.pop %v1136
        %v1388 = vrcp.pop %v1137
        %v1389 = vrcp.pop %v1138
        %v1390 = vrcp.pop %v1139
        %v1391 = vrcp.pop %v1140
        %v1392 = vrcp.pop %v1141
        %v1393 = vrcp.pop %v1142
        %v1394 = vrcp.pop %v1143
        %v1395 = vrcp.pop %v1144
        %v1396 = vmul.f32 %v1129, %v1380
        %v1397 = vmul.f32 %v1130, %v1381
        %v1398 = vmul.f32 %v1131, %v1382
        %v1399 = vmul.f32 %v1132, %v1383
        %v1400 = vmul.f32 %v1133, %v1384
        %v1401 = vmul.f32 %v1134, %v1385
        %v1402 = vmul.f32 %v1135, %v1386
        %v1403 = vmul.f32 %v1136, %v1387
        %v1404 = vmul.f32 %v1137, %v1388
        %v1405 = vmul.f32 %v1138, %v1389
        %v1406 = vmul.f32 %v1139, %v1390
        %v1407 = vmul.f32 %v1140, %v1391
        %v1408 = vmul.f32 %v1141, %v1392
        %v1409 = vmul.f32 %v1142, %v1393
        %v1410 = vmul.f32 %v1143, %v1394
        %v1411 = vmul.f32 %v1144, %v1395
        %v1412 = vsub.f32 2.0, %v1396
        %v1413 = vsub.f32 2.0, %v1397
        %v1414 = vsub.f32 2.0, %v1398
        %v1415 = vsub.f32 2.0, %v1399
        %v1416 = vsub.f32 2.0, %v1400
        %v1417 = vsub.f32 2.0, %v1401
        %v1418 = vsub.f32 2.0, %v1402
        %v1419 = vsub.f32 2.0, %v1403
        %v1420 = vsub.f32 2.0, %v1404
        %v1421 = vsub.f32 2.0, %v1405
        %v1422 = vsub.f32 2.0, %v1406
        %v1423 = vsub.f32 2.0, %v1407
        %v1424 = vsub.f32 2.0, %v1408
        %v1425 = vsub.f32 2.0, %v1409
        %v1426 = vsub.f32 2.0, %v1410
        %v1427 = vsub.f32 2.0, %v1411
        %v1428 = vmul.f32 %v1380, %v1412
        %v1429 = vmul.f32 %v1381, %v1413
        %v1430 = vmul.f32 %v1382, %v1414
        %v1431 = vmul.f32 %v1383, %v1415
        %v1432 = vmul.f32 %v1384, %v1416
        %v1433 = vmul.f32 %v1385, %v1417
        %v1434 = vmul.f32 %v1386, %v1418
        %v1435 = vmul.f32 %v1387, %v1419
        %v1436 = vmul.f32 %v1388, %v1420
        %v1437 = vmul.f32 %v1389, %v1421
        %v1438 = vmul.f32 %v1390, %v1422
        %v1439 = vmul.f32 %v1391, %v1423
        %v1440 = vmul.f32 %v1392, %v1424
        %v1441 = vmul.f32 %v1393, %v1425
        %v1442 = vmul.f32 %v1394, %v1426
        %v1443 = vmul.f32 %v1395, %v1427
        %v1444 = vmul.f32 %v997, %v1428
        %v1445 = vmul.f32 %v998, %v1429
        %v1446 = vmul.f32 %v999, %v1430
        %v1447 = vmul.f32 %v1000, %v1431
        %v1448 = vmul.f32 %v1001, %v1432
        %v1449 = vmul.f32 %v1002, %v1433
        %v1450 = vmul.f32 %v1003, %v1434
        %v1451 = vmul.f32 %v1004, %v1435
        %v1452 = vmul.f32 %v1005, %v1436
        %v1453 = vmul.f32 %v1006, %v1437
        %v1454 = vmul.f32 %v1007, %v1438
        %v1455 = vmul.f32 %v1008, %v1439
        %v1456 = vmul.f32 %v1009, %v1440
        %v1457 = vmul.f32 %v1010, %v1441
        %v1458 = vmul.f32 %v1011, %v1442
        %v1459 = vmul.f32 %v1012, %v1443
        %v1460 = vmul.f32 %v1444, %v1266
        %v1461 = vmul.f32 %v1445, %v1266
        %v1462 = vmul.f32 %v1446, %v1266
        %v1463 = vmul.f32 %v1447, %v1266
        %v1464 = vmul.f32 %v1448, %v1266
        %v1465 = vmul.f32 %v1449, %v1266
        %v1466 = vmul.f32 %v1450, %v1266
        %v1467 = vmul.f32 %v1451, %v1266
        %v1468 = vmul.f32 %v1452, %v1266
        %v1469 = vmul.f32 %v1453, %v1266
        %v1470 = vmul.f32 %v1454, %v1266
        %v1471 = vmul.f32 %v1455, %v1266
        %v1472 = vmul.f32 %v1456, %v1266
        %v1473 = vmul.f32 %v1457, %v1266
        %v1474 = vmul.f32 %v1458, %v1266
        %v1475 = vmul.f32 %v1459, %v1266
        %v1476 = vmul.f32 %v1460, %v1287
        %v1477 = vmul.f32 %v1461, %v1292
        %v1478 = vmul.f32 %v1462, %v1297
        %v1479 = vmul.f32 %v1463, %v1302
        %v1480 = vmul.f32 %v1464, %v1307
        %v1481 = vmul.f32 %v1465, %v1312
        %v1482 = vmul.f32 %v1466, %v1317
        %v1483 = vmul.f32 %v1467, %v1322
        %v1484 = vmul.f32 %v1468, %v1327
        %v1485 = vmul.f32 %v1469, %v1332
        %v1486 = vmul.f32 %v1470, %v1337
        %v1487 = vmul.f32 %v1471, %v1342
        %v1488 = vmul.f32 %v1472, %v1347
        %v1489 = vmul.f32 %v1473, %v1352
        %v1490 = vmul.f32 %v1474, %v1357
        %v1491 = vmul.f32 %v1475, %v1362
        %v1492 = vlaneseq
        %v1493 = vand.u32 %v1492, 127
        %v1494 = vcvt.s32.f32 %v1493
        %1495 = vmax.xlane.f32.xlu0 %v1476
        %v1496 = vpop.xlane.xlu0 %1495
        %1497 = vmax.xlane.f32.xlu0 %v1477
        %v1498 = vpop.xlane.xlu0 %1497
        %1499 = vmax.xlane.f32.xlu0 %v1478
        %v1500 = vpop.xlane.xlu0 %1499
        %1501 = vmax.xlane.f32.xlu0 %v1479
        %v1502 = vpop.xlane.xlu0 %1501
        %1503 = vmax.xlane.f32.xlu0 %v1480
        %v1504 = vpop.xlane.xlu0 %1503
        %1505 = vmax.xlane.f32.xlu0 %v1481
        %v1506 = vpop.xlane.xlu0 %1505
        %1507 = vmax.xlane.f32.xlu0 %v1482
        %v1508 = vpop.xlane.xlu0 %1507
        %1509 = vmax.xlane.f32.xlu0 %v1483
        %v1510 = vpop.xlane.xlu0 %1509
        %1511 = vmax.xlane.f32.xlu0 %v1484
        %v1512 = vpop.xlane.xlu0 %1511
        %1513 = vmax.xlane.f32.xlu0 %v1485
        %v1514 = vpop.xlane.xlu0 %1513
        %1515 = vmax.xlane.f32.xlu0 %v1486
        %v1516 = vpop.xlane.xlu0 %1515
        %1517 = vmax.xlane.f32.xlu0 %v1487
        %v1518 = vpop.xlane.xlu0 %1517
        %1519 = vmax.xlane.f32.xlu0 %v1488
        %v1520 = vpop.xlane.xlu0 %1519
        %1521 = vmax.xlane.f32.xlu0 %v1489
        %v1522 = vpop.xlane.xlu0 %1521
        %1523 = vmax.xlane.f32.xlu0 %v1490
        %v1524 = vpop.xlane.xlu0 %1523
        %1525 = vmax.xlane.f32.xlu0 %v1491
        %v1526 = vpop.xlane.xlu0 %1525
        %vm1527 = vcmp.eq.f32.partialorder %v1476, %v1496
        %vm1528 = vcmp.eq.f32.partialorder %v1477, %v1498
        %vm1529 = vcmp.eq.f32.partialorder %v1478, %v1500
        %vm1530 = vcmp.eq.f32.partialorder %v1479, %v1502
        %vm1531 = vcmp.eq.f32.partialorder %v1480, %v1504
        %vm1532 = vcmp.eq.f32.partialorder %v1481, %v1506
        %vm1533 = vcmp.eq.f32.partialorder %v1482, %v1508
        %vm1534 = vcmp.eq.f32.partialorder %v1483, %v1510
        %vm1535 = vcmp.eq.f32.partialorder %v1484, %v1512
        %vm1536 = vcmp.eq.f32.partialorder %v1485, %v1514
        %vm1537 = vcmp.eq.f32.partialorder %v1486, %v1516
        %vm1538 = vcmp.eq.f32.partialorder %v1487, %v1518
        %vm1539 = vcmp.eq.f32.partialorder %v1488, %v1520
        %vm1540 = vcmp.eq.f32.partialorder %v1489, %v1522
        %vm1541 = vcmp.eq.f32.partialorder %v1490, %v1524
        %vm1542 = vcmp.eq.f32.partialorder %v1491, %v1526
        %v1543 = vsel %vm1527, %v1494, 128.0
        %v1544 = vsel %vm1528, %v1494, 128.0
        %v1545 = vsel %vm1529, %v1494, 128.0
        %v1546 = vsel %vm1530, %v1494, 128.0
        %v1547 = vsel %vm1531, %v1494, 128.0
        %v1548 = vsel %vm1532, %v1494, 128.0
        %v1549 = vsel %vm1533, %v1494, 128.0
        %v1550 = vsel %vm1534, %v1494, 128.0
        %v1551 = vsel %vm1535, %v1494, 128.0
        %v1552 = vsel %vm1536, %v1494, 128.0
        %v1553 = vsel %vm1537, %v1494, 128.0
        %v1554 = vsel %vm1538, %v1494, 128.0
        %v1555 = vsel %vm1539, %v1494, 128.0
        %v1556 = vsel %vm1540, %v1494, 128.0
        %v1557 = vsel %vm1541, %v1494, 128.0
        %v1558 = vsel %vm1542, %v1494, 128.0
        %1559 = vmin.xlane.f32.xlu0 %v1543
        %v1560 = vpop.xlane.xlu0 %1559
        %1561 = vmin.xlane.f32.xlu0 %v1544
        %v1562 = vpop.xlane.xlu0 %1561
        %1563 = vmin.xlane.f32.xlu0 %v1545
        %v1564 = vpop.xlane.xlu0 %1563
        %1565 = vmin.xlane.f32.xlu0 %v1546
        %v1566 = vpop.xlane.xlu0 %1565
        %1567 = vmin.xlane.f32.xlu0 %v1547
        %v1568 = vpop.xlane.xlu0 %1567
        %1569 = vmin.xlane.f32.xlu0 %v1548
        %v1570 = vpop.xlane.xlu0 %1569
        %1571 = vmin.xlane.f32.xlu0 %v1549
        %v1572 = vpop.xlane.xlu0 %1571
        %1573 = vmin.xlane.f32.xlu0 %v1550
        %v1574 = vpop.xlane.xlu0 %1573
        %1575 = vmin.xlane.f32.xlu0 %v1551
        %v1576 = vpop.xlane.xlu0 %1575
        %1577 = vmin.xlane.f32.xlu0 %v1552
        %v1578 = vpop.xlane.xlu0 %1577
        %1579 = vmin.xlane.f32.xlu0 %v1553
        %v1580 = vpop.xlane.xlu0 %1579
        %1581 = vmin.xlane.f32.xlu0 %v1554
        %v1582 = vpop.xlane.xlu0 %1581
        %1583 = vmin.xlane.f32.xlu0 %v1555
        %v1584 = vpop.xlane.xlu0 %1583
        %1585 = vmin.xlane.f32.xlu0 %v1556
        %v1586 = vpop.xlane.xlu0 %1585
        %1587 = vmin.xlane.f32.xlu0 %v1557
        %v1588 = vpop.xlane.xlu0 %1587
        %1589 = vmin.xlane.f32.xlu0 %v1558
        %v1590 = vpop.xlane.xlu0 %1589
        %vm1591 = vcmp.eq.f32.partialorder %v1494, %v1560
        %vm1592 = vcmp.eq.f32.partialorder %v1494, %v1562
        %vm1593 = vcmp.eq.f32.partialorder %v1494, %v1564
        %vm1594 = vcmp.eq.f32.partialorder %v1494, %v1566
        %vm1595 = vcmp.eq.f32.partialorder %v1494, %v1568
        %vm1596 = vcmp.eq.f32.partialorder %v1494, %v1570
        %vm1597 = vcmp.eq.f32.partialorder %v1494, %v1572
        %vm1598 = vcmp.eq.f32.partialorder %v1494, %v1574
        %vm1599 = vcmp.eq.f32.partialorder %v1494, %v1576
        %vm1600 = vcmp.eq.f32.partialorder %v1494, %v1578
        %vm1601 = vcmp.eq.f32.partialorder %v1494, %v1580
        %vm1602 = vcmp.eq.f32.partialorder %v1494, %v1582
        %vm1603 = vcmp.eq.f32.partialorder %v1494, %v1584
        %vm1604 = vcmp.eq.f32.partialorder %v1494, %v1586
        %vm1605 = vcmp.eq.f32.partialorder %v1494, %v1588
        %vm1606 = vcmp.eq.f32.partialorder %v1494, %v1590
        %v1607 = vsel %vm1591, %v1364, 0.0
        %v1608 = vsel %vm1592, %v1365, 0.0
        %v1609 = vsel %vm1593, %v1366, 0.0
        %v1610 = vsel %vm1594, %v1367, 0.0
        %v1611 = vsel %vm1595, %v1368, 0.0
        %v1612 = vsel %vm1596, %v1369, 0.0
        %v1613 = vsel %vm1597, %v1370, 0.0
        %v1614 = vsel %vm1598, %v1371, 0.0
        %v1615 = vsel %vm1599, %v1372, 0.0
        %v1616 = vsel %vm1600, %v1373, 0.0
        %v1617 = vsel %vm1601, %v1374, 0.0
        %v1618 = vsel %vm1602, %v1375, 0.0
        %v1619 = vsel %vm1603, %v1376, 0.0
        %v1620 = vsel %vm1604, %v1377, 0.0
        %v1621 = vsel %vm1605, %v1378, 0.0
        %v1622 = vsel %vm1606, %v1379, 0.0
        %1623 = vmax.xlane.f32.xlu0 %v1607
        %v1624 = vpop.xlane.xlu0 %1623
        %1625 = vmax.xlane.f32.xlu0 %v1608
        %v1626 = vpop.xlane.xlu0 %1625
        %1627 = vmax.xlane.f32.xlu0 %v1609
        %v1628 = vpop.xlane.xlu0 %1627
        %1629 = vmax.xlane.f32.xlu0 %v1610
        %v1630 = vpop.xlane.xlu0 %1629
        %1631 = vmax.xlane.f32.xlu0 %v1611
        %v1632 = vpop.xlane.xlu0 %1631
        %1633 = vmax.xlane.f32.xlu0 %v1612
        %v1634 = vpop.xlane.xlu0 %1633
        %1635 = vmax.xlane.f32.xlu0 %v1613
        %v1636 = vpop.xlane.xlu0 %1635
        %1637 = vmax.xlane.f32.xlu0 %v1614
        %v1638 = vpop.xlane.xlu0 %1637
        %1639 = vmax.xlane.f32.xlu0 %v1615
        %v1640 = vpop.xlane.xlu0 %1639
        %1641 = vmax.xlane.f32.xlu0 %v1616
        %v1642 = vpop.xlane.xlu0 %1641
        %1643 = vmax.xlane.f32.xlu0 %v1617
        %v1644 = vpop.xlane.xlu0 %1643
        %1645 = vmax.xlane.f32.xlu0 %v1618
        %v1646 = vpop.xlane.xlu0 %1645
        %1647 = vmax.xlane.f32.xlu0 %v1619
        %v1648 = vpop.xlane.xlu0 %1647
        %1649 = vmax.xlane.f32.xlu0 %v1620
        %v1650 = vpop.xlane.xlu0 %1649
        %1651 = vmax.xlane.f32.xlu0 %v1621
        %v1652 = vpop.xlane.xlu0 %1651
        %1653 = vmax.xlane.f32.xlu0 %v1622
        %v1654 = vpop.xlane.xlu0 %1653
        %vm1655 = vcmp.eq.s32.totalorder %v1493, 0
        %v1656 = vsel %vm1655, %v1560, 0.0
        %v1657 = vsel %vm1655, %v1562, 0.0
        %v1658 = vsel %vm1655, %v1564, 0.0
        %v1659 = vsel %vm1655, %v1566, 0.0
        %v1660 = vsel %vm1655, %v1568, 0.0
        %v1661 = vsel %vm1655, %v1570, 0.0
        %v1662 = vsel %vm1655, %v1572, 0.0
        %v1663 = vsel %vm1655, %v1574, 0.0
        %v1664 = vsel %vm1655, %v1576, 0.0
        %v1665 = vsel %vm1655, %v1578, 0.0
        %v1666 = vsel %vm1655, %v1580, 0.0
        %v1667 = vsel %vm1655, %v1582, 0.0
        %v1668 = vsel %vm1655, %v1584, 0.0
        %v1669 = vsel %vm1655, %v1586, 0.0
        %v1670 = vsel %vm1655, %v1588, 0.0
        %v1671 = vsel %vm1655, %v1590, 0.0
        %v1672 = vsel %vm1655, %v1624, 0.0
        %v1673 = vsel %vm1655, %v1626, 0.0
        %v1674 = vsel %vm1655, %v1628, 0.0
        %v1675 = vsel %vm1655, %v1630, 0.0
        %v1676 = vsel %vm1655, %v1632, 0.0
        %v1677 = vsel %vm1655, %v1634, 0.0
        %v1678 = vsel %vm1655, %v1636, 0.0
        %v1679 = vsel %vm1655, %v1638, 0.0
        %v1680 = vsel %vm1655, %v1640, 0.0
        %v1681 = vsel %vm1655, %v1642, 0.0
        %v1682 = vsel %vm1655, %v1644, 0.0
        %v1683 = vsel %vm1655, %v1646, 0.0
        %v1684 = vsel %vm1655, %v1648, 0.0
        %v1685 = vsel %vm1655, %v1650, 0.0
        %v1686 = vsel %vm1655, %v1652, 0.0
        %v1687 = vsel %vm1655, %v1654, 0.0
        %v1688 = vsel %vm1591, -1.0, %v1476
        %v1689 = vsel %vm1592, -1.0, %v1477
        %v1690 = vsel %vm1593, -1.0, %v1478
        %v1691 = vsel %vm1594, -1.0, %v1479
        %v1692 = vsel %vm1595, -1.0, %v1480
        %v1693 = vsel %vm1596, -1.0, %v1481
        %v1694 = vsel %vm1597, -1.0, %v1482
        %v1695 = vsel %vm1598, -1.0, %v1483
        %v1696 = vsel %vm1599, -1.0, %v1484
        %v1697 = vsel %vm1600, -1.0, %v1485
        %v1698 = vsel %vm1601, -1.0, %v1486
        %v1699 = vsel %vm1602, -1.0, %v1487
        %v1700 = vsel %vm1603, -1.0, %v1488
        %v1701 = vsel %vm1604, -1.0, %v1489
        %v1702 = vsel %vm1605, -1.0, %v1490
        %v1703 = vsel %vm1606, -1.0, %v1491
        %1704 = vmax.xlane.f32.xlu0 %v1688
        %v1705 = vpop.xlane.xlu0 %1704
        %1706 = vmax.xlane.f32.xlu0 %v1689
        %v1707 = vpop.xlane.xlu0 %1706
        %1708 = vmax.xlane.f32.xlu0 %v1690
        %v1709 = vpop.xlane.xlu0 %1708
        %1710 = vmax.xlane.f32.xlu0 %v1691
        %v1711 = vpop.xlane.xlu0 %1710
        %1712 = vmax.xlane.f32.xlu0 %v1692
        %v1713 = vpop.xlane.xlu0 %1712
        %1714 = vmax.xlane.f32.xlu0 %v1693
        %v1715 = vpop.xlane.xlu0 %1714
        %1716 = vmax.xlane.f32.xlu0 %v1694
        %v1717 = vpop.xlane.xlu0 %1716
        %1718 = vmax.xlane.f32.xlu0 %v1695
        %v1719 = vpop.xlane.xlu0 %1718
        %1720 = vmax.xlane.f32.xlu0 %v1696
        %v1721 = vpop.xlane.xlu0 %1720
        %1722 = vmax.xlane.f32.xlu0 %v1697
        %v1723 = vpop.xlane.xlu0 %1722
        %1724 = vmax.xlane.f32.xlu0 %v1698
        %v1725 = vpop.xlane.xlu0 %1724
        %1726 = vmax.xlane.f32.xlu0 %v1699
        %v1727 = vpop.xlane.xlu0 %1726
        %1728 = vmax.xlane.f32.xlu0 %v1700
        %v1729 = vpop.xlane.xlu0 %1728
        %1730 = vmax.xlane.f32.xlu0 %v1701
        %v1731 = vpop.xlane.xlu0 %1730
        %1732 = vmax.xlane.f32.xlu0 %v1702
        %v1733 = vpop.xlane.xlu0 %1732
        %1734 = vmax.xlane.f32.xlu0 %v1703
        %v1735 = vpop.xlane.xlu0 %1734
        %vm1736 = vcmp.eq.f32.partialorder %v1688, %v1705
        %vm1737 = vcmp.eq.f32.partialorder %v1689, %v1707
        %vm1738 = vcmp.eq.f32.partialorder %v1690, %v1709
        %vm1739 = vcmp.eq.f32.partialorder %v1691, %v1711
        %vm1740 = vcmp.eq.f32.partialorder %v1692, %v1713
        %vm1741 = vcmp.eq.f32.partialorder %v1693, %v1715
        %vm1742 = vcmp.eq.f32.partialorder %v1694, %v1717
        %vm1743 = vcmp.eq.f32.partialorder %v1695, %v1719
        %vm1744 = vcmp.eq.f32.partialorder %v1696, %v1721
        %vm1745 = vcmp.eq.f32.partialorder %v1697, %v1723
        %vm1746 = vcmp.eq.f32.partialorder %v1698, %v1725
        %vm1747 = vcmp.eq.f32.partialorder %v1699, %v1727
        %vm1748 = vcmp.eq.f32.partialorder %v1700, %v1729
        %vm1749 = vcmp.eq.f32.partialorder %v1701, %v1731
        %vm1750 = vcmp.eq.f32.partialorder %v1702, %v1733
        %vm1751 = vcmp.eq.f32.partialorder %v1703, %v1735
        %v1752 = vsel %vm1736, %v1494, 128.0
        %v1753 = vsel %vm1737, %v1494, 128.0
        %v1754 = vsel %vm1738, %v1494, 128.0
        %v1755 = vsel %vm1739, %v1494, 128.0
        %v1756 = vsel %vm1740, %v1494, 128.0
        %v1757 = vsel %vm1741, %v1494, 128.0
        %v1758 = vsel %vm1742, %v1494, 128.0
        %v1759 = vsel %vm1743, %v1494, 128.0
        %v1760 = vsel %vm1744, %v1494, 128.0
        %v1761 = vsel %vm1745, %v1494, 128.0
        %v1762 = vsel %vm1746, %v1494, 128.0
        %v1763 = vsel %vm1747, %v1494, 128.0
        %v1764 = vsel %vm1748, %v1494, 128.0
        %v1765 = vsel %vm1749, %v1494, 128.0
        %v1766 = vsel %vm1750, %v1494, 128.0
        %v1767 = vsel %vm1751, %v1494, 128.0
        %1768 = vmin.xlane.f32.xlu0 %v1752
        %v1769 = vpop.xlane.xlu0 %1768
        %1770 = vmin.xlane.f32.xlu0 %v1753
        %v1771 = vpop.xlane.xlu0 %1770
        %1772 = vmin.xlane.f32.xlu0 %v1754
        %v1773 = vpop.xlane.xlu0 %1772
        %1774 = vmin.xlane.f32.xlu0 %v1755
        %v1775 = vpop.xlane.xlu0 %1774
        %1776 = vmin.xlane.f32.xlu0 %v1756
        %v1777 = vpop.xlane.xlu0 %1776
        %1778 = vmin.xlane.f32.xlu0 %v1757
        %v1779 = vpop.xlane.xlu0 %1778
        %1780 = vmin.xlane.f32.xlu0 %v1758
        %v1781 = vpop.xlane.xlu0 %1780
        %1782 = vmin.xlane.f32.xlu0 %v1759
        %v1783 = vpop.xlane.xlu0 %1782
        %1784 = vmin.xlane.f32.xlu0 %v1760
        %v1785 = vpop.xlane.xlu0 %1784
        %1786 = vmin.xlane.f32.xlu0 %v1761
        %v1787 = vpop.xlane.xlu0 %1786
        %1788 = vmin.xlane.f32.xlu0 %v1762
        %v1789 = vpop.xlane.xlu0 %1788
        %1790 = vmin.xlane.f32.xlu0 %v1763
        %v1791 = vpop.xlane.xlu0 %1790
        %1792 = vmin.xlane.f32.xlu0 %v1764
        %v1793 = vpop.xlane.xlu0 %1792
        %1794 = vmin.xlane.f32.xlu0 %v1765
        %v1795 = vpop.xlane.xlu0 %1794
        %1796 = vmin.xlane.f32.xlu0 %v1766
        %v1797 = vpop.xlane.xlu0 %1796
        %1798 = vmin.xlane.f32.xlu0 %v1767
        %v1799 = vpop.xlane.xlu0 %1798
        %vm1800 = vcmp.eq.f32.partialorder %v1494, %v1769
        %vm1801 = vcmp.eq.f32.partialorder %v1494, %v1771
        %vm1802 = vcmp.eq.f32.partialorder %v1494, %v1773
        %vm1803 = vcmp.eq.f32.partialorder %v1494, %v1775
        %vm1804 = vcmp.eq.f32.partialorder %v1494, %v1777
        %vm1805 = vcmp.eq.f32.partialorder %v1494, %v1779
        %vm1806 = vcmp.eq.f32.partialorder %v1494, %v1781
        %vm1807 = vcmp.eq.f32.partialorder %v1494, %v1783
        %vm1808 = vcmp.eq.f32.partialorder %v1494, %v1785
        %vm1809 = vcmp.eq.f32.partialorder %v1494, %v1787
        %vm1810 = vcmp.eq.f32.partialorder %v1494, %v1789
        %vm1811 = vcmp.eq.f32.partialorder %v1494, %v1791
        %vm1812 = vcmp.eq.f32.partialorder %v1494, %v1793
        %vm1813 = vcmp.eq.f32.partialorder %v1494, %v1795
        %vm1814 = vcmp.eq.f32.partialorder %v1494, %v1797
        %vm1815 = vcmp.eq.f32.partialorder %v1494, %v1799
        %v1816 = vsel %vm1800, %v1364, 0.0
        %v1817 = vsel %vm1801, %v1365, 0.0
        %v1818 = vsel %vm1802, %v1366, 0.0
        %v1819 = vsel %vm1803, %v1367, 0.0
        %v1820 = vsel %vm1804, %v1368, 0.0
        %v1821 = vsel %vm1805, %v1369, 0.0
        %v1822 = vsel %vm1806, %v1370, 0.0
        %v1823 = vsel %vm1807, %v1371, 0.0
        %v1824 = vsel %vm1808, %v1372, 0.0
        %v1825 = vsel %vm1809, %v1373, 0.0
        %v1826 = vsel %vm1810, %v1374, 0.0
        %v1827 = vsel %vm1811, %v1375, 0.0
        %v1828 = vsel %vm1812, %v1376, 0.0
        %v1829 = vsel %vm1813, %v1377, 0.0
        %v1830 = vsel %vm1814, %v1378, 0.0
        %v1831 = vsel %vm1815, %v1379, 0.0
        %1832 = vmax.xlane.f32.xlu0 %v1816
        %v1833 = vpop.xlane.xlu0 %1832
        %1834 = vmax.xlane.f32.xlu0 %v1817
        %v1835 = vpop.xlane.xlu0 %1834
        %1836 = vmax.xlane.f32.xlu0 %v1818
        %v1837 = vpop.xlane.xlu0 %1836
        %1838 = vmax.xlane.f32.xlu0 %v1819
        %v1839 = vpop.xlane.xlu0 %1838
        %1840 = vmax.xlane.f32.xlu0 %v1820
        %v1841 = vpop.xlane.xlu0 %1840
        %1842 = vmax.xlane.f32.xlu0 %v1821
        %v1843 = vpop.xlane.xlu0 %1842
        %1844 = vmax.xlane.f32.xlu0 %v1822
        %v1845 = vpop.xlane.xlu0 %1844
        %1846 = vmax.xlane.f32.xlu0 %v1823
        %v1847 = vpop.xlane.xlu0 %1846
        %1848 = vmax.xlane.f32.xlu0 %v1824
        %v1849 = vpop.xlane.xlu0 %1848
        %1850 = vmax.xlane.f32.xlu0 %v1825
        %v1851 = vpop.xlane.xlu0 %1850
        %1852 = vmax.xlane.f32.xlu0 %v1826
        %v1853 = vpop.xlane.xlu0 %1852
        %1854 = vmax.xlane.f32.xlu0 %v1827
        %v1855 = vpop.xlane.xlu0 %1854
        %1856 = vmax.xlane.f32.xlu0 %v1828
        %v1857 = vpop.xlane.xlu0 %1856
        %1858 = vmax.xlane.f32.xlu0 %v1829
        %v1859 = vpop.xlane.xlu0 %1858
        %1860 = vmax.xlane.f32.xlu0 %v1830
        %v1861 = vpop.xlane.xlu0 %1860
        %1862 = vmax.xlane.f32.xlu0 %v1831
        %v1863 = vpop.xlane.xlu0 %1862
        %vm1864 = vcmp.eq.s32.totalorder %v1493, 1
        %v1865 = vsel %vm1864, %v1769, %v1656
        %v1866 = vsel %vm1864, %v1771, %v1657
        %v1867 = vsel %vm1864, %v1773, %v1658
        %v1868 = vsel %vm1864, %v1775, %v1659
        %v1869 = vsel %vm1864, %v1777, %v1660
        %v1870 = vsel %vm1864, %v1779, %v1661
        %v1871 = vsel %vm1864, %v1781, %v1662
        %v1872 = vsel %vm1864, %v1783, %v1663
        %v1873 = vsel %vm1864, %v1785, %v1664
        %v1874 = vsel %vm1864, %v1787, %v1665
        %v1875 = vsel %vm1864, %v1789, %v1666
        %v1876 = vsel %vm1864, %v1791, %v1667
        %v1877 = vsel %vm1864, %v1793, %v1668
        %v1878 = vsel %vm1864, %v1795, %v1669
        %v1879 = vsel %vm1864, %v1797, %v1670
        %v1880 = vsel %vm1864, %v1799, %v1671
        %v1881 = vsel %vm1864, %v1833, %v1672
        %v1882 = vsel %vm1864, %v1835, %v1673
        %v1883 = vsel %vm1864, %v1837, %v1674
        %v1884 = vsel %vm1864, %v1839, %v1675
        %v1885 = vsel %vm1864, %v1841, %v1676
        %v1886 = vsel %vm1864, %v1843, %v1677
        %v1887 = vsel %vm1864, %v1845, %v1678
        %v1888 = vsel %vm1864, %v1847, %v1679
        %v1889 = vsel %vm1864, %v1849, %v1680
        %v1890 = vsel %vm1864, %v1851, %v1681
        %v1891 = vsel %vm1864, %v1853, %v1682
        %v1892 = vsel %vm1864, %v1855, %v1683
        %v1893 = vsel %vm1864, %v1857, %v1684
        %v1894 = vsel %vm1864, %v1859, %v1685
        %v1895 = vsel %vm1864, %v1861, %v1686
        %v1896 = vsel %vm1864, %v1863, %v1687
        %v1897 = vsel %vm1800, -1.0, %v1688
        %v1898 = vsel %vm1801, -1.0, %v1689
        %v1899 = vsel %vm1802, -1.0, %v1690
        %v1900 = vsel %vm1803, -1.0, %v1691
        %v1901 = vsel %vm1804, -1.0, %v1692
        %v1902 = vsel %vm1805, -1.0, %v1693
        %v1903 = vsel %vm1806, -1.0, %v1694
        %v1904 = vsel %vm1807, -1.0, %v1695
        %v1905 = vsel %vm1808, -1.0, %v1696
        %v1906 = vsel %vm1809, -1.0, %v1697
        %v1907 = vsel %vm1810, -1.0, %v1698
        %v1908 = vsel %vm1811, -1.0, %v1699
        %v1909 = vsel %vm1812, -1.0, %v1700
        %v1910 = vsel %vm1813, -1.0, %v1701
        %v1911 = vsel %vm1814, -1.0, %v1702
        %v1912 = vsel %vm1815, -1.0, %v1703
        %1913 = vmax.xlane.f32.xlu0 %v1897
        %v1914 = vpop.xlane.xlu0 %1913
        %1915 = vmax.xlane.f32.xlu0 %v1898
        %v1916 = vpop.xlane.xlu0 %1915
        %1917 = vmax.xlane.f32.xlu0 %v1899
        %v1918 = vpop.xlane.xlu0 %1917
        %1919 = vmax.xlane.f32.xlu0 %v1900
        %v1920 = vpop.xlane.xlu0 %1919
        %1921 = vmax.xlane.f32.xlu0 %v1901
        %v1922 = vpop.xlane.xlu0 %1921
        %1923 = vmax.xlane.f32.xlu0 %v1902
        %v1924 = vpop.xlane.xlu0 %1923
        %1925 = vmax.xlane.f32.xlu0 %v1903
        %v1926 = vpop.xlane.xlu0 %1925
        %1927 = vmax.xlane.f32.xlu0 %v1904
        %v1928 = vpop.xlane.xlu0 %1927
        %1929 = vmax.xlane.f32.xlu0 %v1905
        %v1930 = vpop.xlane.xlu0 %1929
        %1931 = vmax.xlane.f32.xlu0 %v1906
        %v1932 = vpop.xlane.xlu0 %1931
        %1933 = vmax.xlane.f32.xlu0 %v1907
        %v1934 = vpop.xlane.xlu0 %1933
        %1935 = vmax.xlane.f32.xlu0 %v1908
        %v1936 = vpop.xlane.xlu0 %1935
        %1937 = vmax.xlane.f32.xlu0 %v1909
        %v1938 = vpop.xlane.xlu0 %1937
        %1939 = vmax.xlane.f32.xlu0 %v1910
        %v1940 = vpop.xlane.xlu0 %1939
        %1941 = vmax.xlane.f32.xlu0 %v1911
        %v1942 = vpop.xlane.xlu0 %1941
        %1943 = vmax.xlane.f32.xlu0 %v1912
        %v1944 = vpop.xlane.xlu0 %1943
        %vm1945 = vcmp.eq.f32.partialorder %v1897, %v1914
        %vm1946 = vcmp.eq.f32.partialorder %v1898, %v1916
        %vm1947 = vcmp.eq.f32.partialorder %v1899, %v1918
        %vm1948 = vcmp.eq.f32.partialorder %v1900, %v1920
        %vm1949 = vcmp.eq.f32.partialorder %v1901, %v1922
        %vm1950 = vcmp.eq.f32.partialorder %v1902, %v1924
        %vm1951 = vcmp.eq.f32.partialorder %v1903, %v1926
        %vm1952 = vcmp.eq.f32.partialorder %v1904, %v1928
        %vm1953 = vcmp.eq.f32.partialorder %v1905, %v1930
        %vm1954 = vcmp.eq.f32.partialorder %v1906, %v1932
        %vm1955 = vcmp.eq.f32.partialorder %v1907, %v1934
        %vm1956 = vcmp.eq.f32.partialorder %v1908, %v1936
        %vm1957 = vcmp.eq.f32.partialorder %v1909, %v1938
        %vm1958 = vcmp.eq.f32.partialorder %v1910, %v1940
        %vm1959 = vcmp.eq.f32.partialorder %v1911, %v1942
        %vm1960 = vcmp.eq.f32.partialorder %v1912, %v1944
        %v1961 = vsel %vm1945, %v1494, 128.0
        %v1962 = vsel %vm1946, %v1494, 128.0
        %v1963 = vsel %vm1947, %v1494, 128.0
        %v1964 = vsel %vm1948, %v1494, 128.0
        %v1965 = vsel %vm1949, %v1494, 128.0
        %v1966 = vsel %vm1950, %v1494, 128.0
        %v1967 = vsel %vm1951, %v1494, 128.0
        %v1968 = vsel %vm1952, %v1494, 128.0
        %v1969 = vsel %vm1953, %v1494, 128.0
        %v1970 = vsel %vm1954, %v1494, 128.0
        %v1971 = vsel %vm1955, %v1494, 128.0
        %v1972 = vsel %vm1956, %v1494, 128.0
        %v1973 = vsel %vm1957, %v1494, 128.0
        %v1974 = vsel %vm1958, %v1494, 128.0
        %v1975 = vsel %vm1959, %v1494, 128.0
        %v1976 = vsel %vm1960, %v1494, 128.0
        %1977 = vmin.xlane.f32.xlu0 %v1961
        %v1978 = vpop.xlane.xlu0 %1977
        %1979 = vmin.xlane.f32.xlu0 %v1962
        %v1980 = vpop.xlane.xlu0 %1979
        %1981 = vmin.xlane.f32.xlu0 %v1963
        %v1982 = vpop.xlane.xlu0 %1981
        %1983 = vmin.xlane.f32.xlu0 %v1964
        %v1984 = vpop.xlane.xlu0 %1983
        %1985 = vmin.xlane.f32.xlu0 %v1965
        %v1986 = vpop.xlane.xlu0 %1985
        %1987 = vmin.xlane.f32.xlu0 %v1966
        %v1988 = vpop.xlane.xlu0 %1987
        %1989 = vmin.xlane.f32.xlu0 %v1967
        %v1990 = vpop.xlane.xlu0 %1989
        %1991 = vmin.xlane.f32.xlu0 %v1968
        %v1992 = vpop.xlane.xlu0 %1991
        %1993 = vmin.xlane.f32.xlu0 %v1969
        %v1994 = vpop.xlane.xlu0 %1993
        %1995 = vmin.xlane.f32.xlu0 %v1970
        %v1996 = vpop.xlane.xlu0 %1995
        %1997 = vmin.xlane.f32.xlu0 %v1971
        %v1998 = vpop.xlane.xlu0 %1997
        %1999 = vmin.xlane.f32.xlu0 %v1972
        %v2000 = vpop.xlane.xlu0 %1999
        %2001 = vmin.xlane.f32.xlu0 %v1973
        %v2002 = vpop.xlane.xlu0 %2001
        %2003 = vmin.xlane.f32.xlu0 %v1974
        %v2004 = vpop.xlane.xlu0 %2003
        %2005 = vmin.xlane.f32.xlu0 %v1975
        %v2006 = vpop.xlane.xlu0 %2005
        %2007 = vmin.xlane.f32.xlu0 %v1976
        %v2008 = vpop.xlane.xlu0 %2007
        %vm2009 = vcmp.eq.f32.partialorder %v1494, %v1978
        %vm2010 = vcmp.eq.f32.partialorder %v1494, %v1980
        %vm2011 = vcmp.eq.f32.partialorder %v1494, %v1982
        %vm2012 = vcmp.eq.f32.partialorder %v1494, %v1984
        %vm2013 = vcmp.eq.f32.partialorder %v1494, %v1986
        %vm2014 = vcmp.eq.f32.partialorder %v1494, %v1988
        %vm2015 = vcmp.eq.f32.partialorder %v1494, %v1990
        %vm2016 = vcmp.eq.f32.partialorder %v1494, %v1992
        %vm2017 = vcmp.eq.f32.partialorder %v1494, %v1994
        %vm2018 = vcmp.eq.f32.partialorder %v1494, %v1996
        %vm2019 = vcmp.eq.f32.partialorder %v1494, %v1998
        %vm2020 = vcmp.eq.f32.partialorder %v1494, %v2000
        %vm2021 = vcmp.eq.f32.partialorder %v1494, %v2002
        %vm2022 = vcmp.eq.f32.partialorder %v1494, %v2004
        %vm2023 = vcmp.eq.f32.partialorder %v1494, %v2006
        %vm2024 = vcmp.eq.f32.partialorder %v1494, %v2008
        %v2025 = vsel %vm2009, %v1364, 0.0
        %v2026 = vsel %vm2010, %v1365, 0.0
        %v2027 = vsel %vm2011, %v1366, 0.0
        %v2028 = vsel %vm2012, %v1367, 0.0
        %v2029 = vsel %vm2013, %v1368, 0.0
        %v2030 = vsel %vm2014, %v1369, 0.0
        %v2031 = vsel %vm2015, %v1370, 0.0
        %v2032 = vsel %vm2016, %v1371, 0.0
        %v2033 = vsel %vm2017, %v1372, 0.0
        %v2034 = vsel %vm2018, %v1373, 0.0
        %v2035 = vsel %vm2019, %v1374, 0.0
        %v2036 = vsel %vm2020, %v1375, 0.0
        %v2037 = vsel %vm2021, %v1376, 0.0
        %v2038 = vsel %vm2022, %v1377, 0.0
        %v2039 = vsel %vm2023, %v1378, 0.0
        %v2040 = vsel %vm2024, %v1379, 0.0
        %2041 = vmax.xlane.f32.xlu0 %v2025
        %v2042 = vpop.xlane.xlu0 %2041
        %2043 = vmax.xlane.f32.xlu0 %v2026
        %v2044 = vpop.xlane.xlu0 %2043
        %2045 = vmax.xlane.f32.xlu0 %v2027
        %v2046 = vpop.xlane.xlu0 %2045
        %2047 = vmax.xlane.f32.xlu0 %v2028
        %v2048 = vpop.xlane.xlu0 %2047
        %2049 = vmax.xlane.f32.xlu0 %v2029
        %v2050 = vpop.xlane.xlu0 %2049
        %2051 = vmax.xlane.f32.xlu0 %v2030
        %v2052 = vpop.xlane.xlu0 %2051
        %2053 = vmax.xlane.f32.xlu0 %v2031
        %v2054 = vpop.xlane.xlu0 %2053
        %2055 = vmax.xlane.f32.xlu0 %v2032
        %v2056 = vpop.xlane.xlu0 %2055
        %2057 = vmax.xlane.f32.xlu0 %v2033
        %v2058 = vpop.xlane.xlu0 %2057
        %2059 = vmax.xlane.f32.xlu0 %v2034
        %v2060 = vpop.xlane.xlu0 %2059
        %2061 = vmax.xlane.f32.xlu0 %v2035
        %v2062 = vpop.xlane.xlu0 %2061
        %2063 = vmax.xlane.f32.xlu0 %v2036
        %v2064 = vpop.xlane.xlu0 %2063
        %2065 = vmax.xlane.f32.xlu0 %v2037
        %v2066 = vpop.xlane.xlu0 %2065
        %2067 = vmax.xlane.f32.xlu0 %v2038
        %v2068 = vpop.xlane.xlu0 %2067
        %2069 = vmax.xlane.f32.xlu0 %v2039
        %v2070 = vpop.xlane.xlu0 %2069
        %2071 = vmax.xlane.f32.xlu0 %v2040
        %v2072 = vpop.xlane.xlu0 %2071
        %vm2073 = vcmp.eq.s32.totalorder %v1493, 2
        %v2074 = vsel %vm2073, %v1978, %v1865
        %v2075 = vsel %vm2073, %v1980, %v1866
        %v2076 = vsel %vm2073, %v1982, %v1867
        %v2077 = vsel %vm2073, %v1984, %v1868
        %v2078 = vsel %vm2073, %v1986, %v1869
        %v2079 = vsel %vm2073, %v1988, %v1870
        %v2080 = vsel %vm2073, %v1990, %v1871
        %v2081 = vsel %vm2073, %v1992, %v1872
        %v2082 = vsel %vm2073, %v1994, %v1873
        %v2083 = vsel %vm2073, %v1996, %v1874
        %v2084 = vsel %vm2073, %v1998, %v1875
        %v2085 = vsel %vm2073, %v2000, %v1876
        %v2086 = vsel %vm2073, %v2002, %v1877
        %v2087 = vsel %vm2073, %v2004, %v1878
        %v2088 = vsel %vm2073, %v2006, %v1879
        %v2089 = vsel %vm2073, %v2008, %v1880
        %v2090 = vsel %vm2073, %v2042, %v1881
        %v2091 = vsel %vm2073, %v2044, %v1882
        %v2092 = vsel %vm2073, %v2046, %v1883
        %v2093 = vsel %vm2073, %v2048, %v1884
        %v2094 = vsel %vm2073, %v2050, %v1885
        %v2095 = vsel %vm2073, %v2052, %v1886
        %v2096 = vsel %vm2073, %v2054, %v1887
        %v2097 = vsel %vm2073, %v2056, %v1888
        %v2098 = vsel %vm2073, %v2058, %v1889
        %v2099 = vsel %vm2073, %v2060, %v1890
        %v2100 = vsel %vm2073, %v2062, %v1891
        %v2101 = vsel %vm2073, %v2064, %v1892
        %v2102 = vsel %vm2073, %v2066, %v1893
        %v2103 = vsel %vm2073, %v2068, %v1894
        %v2104 = vsel %vm2073, %v2070, %v1895
        %v2105 = vsel %vm2073, %v2072, %v1896
        %v2106 = vsel %vm2009, -1.0, %v1897
        %v2107 = vsel %vm2010, -1.0, %v1898
        %v2108 = vsel %vm2011, -1.0, %v1899
        %v2109 = vsel %vm2012, -1.0, %v1900
        %v2110 = vsel %vm2013, -1.0, %v1901
        %v2111 = vsel %vm2014, -1.0, %v1902
        %v2112 = vsel %vm2015, -1.0, %v1903
        %v2113 = vsel %vm2016, -1.0, %v1904
        %v2114 = vsel %vm2017, -1.0, %v1905
        %v2115 = vsel %vm2018, -1.0, %v1906
        %v2116 = vsel %vm2019, -1.0, %v1907
        %v2117 = vsel %vm2020, -1.0, %v1908
        %v2118 = vsel %vm2021, -1.0, %v1909
        %v2119 = vsel %vm2022, -1.0, %v1910
        %v2120 = vsel %vm2023, -1.0, %v1911
        %v2121 = vsel %vm2024, -1.0, %v1912
        %2122 = vmax.xlane.f32.xlu0 %v2106
        %v2123 = vpop.xlane.xlu0 %2122
        %2124 = vmax.xlane.f32.xlu0 %v2107
        %v2125 = vpop.xlane.xlu0 %2124
        %2126 = vmax.xlane.f32.xlu0 %v2108
        %v2127 = vpop.xlane.xlu0 %2126
        %2128 = vmax.xlane.f32.xlu0 %v2109
        %v2129 = vpop.xlane.xlu0 %2128
        %2130 = vmax.xlane.f32.xlu0 %v2110
        %v2131 = vpop.xlane.xlu0 %2130
        %2132 = vmax.xlane.f32.xlu0 %v2111
        %v2133 = vpop.xlane.xlu0 %2132
        %2134 = vmax.xlane.f32.xlu0 %v2112
        %v2135 = vpop.xlane.xlu0 %2134
        %2136 = vmax.xlane.f32.xlu0 %v2113
        %v2137 = vpop.xlane.xlu0 %2136
        %2138 = vmax.xlane.f32.xlu0 %v2114
        %v2139 = vpop.xlane.xlu0 %2138
        %2140 = vmax.xlane.f32.xlu0 %v2115
        %v2141 = vpop.xlane.xlu0 %2140
        %2142 = vmax.xlane.f32.xlu0 %v2116
        %v2143 = vpop.xlane.xlu0 %2142
        %2144 = vmax.xlane.f32.xlu0 %v2117
        %v2145 = vpop.xlane.xlu0 %2144
        %2146 = vmax.xlane.f32.xlu0 %v2118
        %v2147 = vpop.xlane.xlu0 %2146
        %2148 = vmax.xlane.f32.xlu0 %v2119
        %v2149 = vpop.xlane.xlu0 %2148
        %2150 = vmax.xlane.f32.xlu0 %v2120
        %v2151 = vpop.xlane.xlu0 %2150
        %2152 = vmax.xlane.f32.xlu0 %v2121
        %v2153 = vpop.xlane.xlu0 %2152
        %vm2154 = vcmp.eq.f32.partialorder %v2106, %v2123
        %vm2155 = vcmp.eq.f32.partialorder %v2107, %v2125
        %vm2156 = vcmp.eq.f32.partialorder %v2108, %v2127
        %vm2157 = vcmp.eq.f32.partialorder %v2109, %v2129
        %vm2158 = vcmp.eq.f32.partialorder %v2110, %v2131
        %vm2159 = vcmp.eq.f32.partialorder %v2111, %v2133
        %vm2160 = vcmp.eq.f32.partialorder %v2112, %v2135
        %vm2161 = vcmp.eq.f32.partialorder %v2113, %v2137
        %vm2162 = vcmp.eq.f32.partialorder %v2114, %v2139
        %vm2163 = vcmp.eq.f32.partialorder %v2115, %v2141
        %vm2164 = vcmp.eq.f32.partialorder %v2116, %v2143
        %vm2165 = vcmp.eq.f32.partialorder %v2117, %v2145
        %vm2166 = vcmp.eq.f32.partialorder %v2118, %v2147
        %vm2167 = vcmp.eq.f32.partialorder %v2119, %v2149
        %vm2168 = vcmp.eq.f32.partialorder %v2120, %v2151
        %vm2169 = vcmp.eq.f32.partialorder %v2121, %v2153
        %v2170 = vsel %vm2154, %v1494, 128.0
        %v2171 = vsel %vm2155, %v1494, 128.0
        %v2172 = vsel %vm2156, %v1494, 128.0
        %v2173 = vsel %vm2157, %v1494, 128.0
        %v2174 = vsel %vm2158, %v1494, 128.0
        %v2175 = vsel %vm2159, %v1494, 128.0
        %v2176 = vsel %vm2160, %v1494, 128.0
        %v2177 = vsel %vm2161, %v1494, 128.0
        %v2178 = vsel %vm2162, %v1494, 128.0
        %v2179 = vsel %vm2163, %v1494, 128.0
        %v2180 = vsel %vm2164, %v1494, 128.0
        %v2181 = vsel %vm2165, %v1494, 128.0
        %v2182 = vsel %vm2166, %v1494, 128.0
        %v2183 = vsel %vm2167, %v1494, 128.0
        %v2184 = vsel %vm2168, %v1494, 128.0
        %v2185 = vsel %vm2169, %v1494, 128.0
        %2186 = vmin.xlane.f32.xlu0 %v2170
        %v2187 = vpop.xlane.xlu0 %2186
        %2188 = vmin.xlane.f32.xlu0 %v2171
        %v2189 = vpop.xlane.xlu0 %2188
        %2190 = vmin.xlane.f32.xlu0 %v2172
        %v2191 = vpop.xlane.xlu0 %2190
        %2192 = vmin.xlane.f32.xlu0 %v2173
        %v2193 = vpop.xlane.xlu0 %2192
        %2194 = vmin.xlane.f32.xlu0 %v2174
        %v2195 = vpop.xlane.xlu0 %2194
        %2196 = vmin.xlane.f32.xlu0 %v2175
        %v2197 = vpop.xlane.xlu0 %2196
        %2198 = vmin.xlane.f32.xlu0 %v2176
        %v2199 = vpop.xlane.xlu0 %2198
        %2200 = vmin.xlane.f32.xlu0 %v2177
        %v2201 = vpop.xlane.xlu0 %2200
        %2202 = vmin.xlane.f32.xlu0 %v2178
        %v2203 = vpop.xlane.xlu0 %2202
        %2204 = vmin.xlane.f32.xlu0 %v2179
        %v2205 = vpop.xlane.xlu0 %2204
        %2206 = vmin.xlane.f32.xlu0 %v2180
        %v2207 = vpop.xlane.xlu0 %2206
        %2208 = vmin.xlane.f32.xlu0 %v2181
        %v2209 = vpop.xlane.xlu0 %2208
        %2210 = vmin.xlane.f32.xlu0 %v2182
        %v2211 = vpop.xlane.xlu0 %2210
        %2212 = vmin.xlane.f32.xlu0 %v2183
        %v2213 = vpop.xlane.xlu0 %2212
        %2214 = vmin.xlane.f32.xlu0 %v2184
        %v2215 = vpop.xlane.xlu0 %2214
        %2216 = vmin.xlane.f32.xlu0 %v2185
        %v2217 = vpop.xlane.xlu0 %2216
        %vm2218 = vcmp.eq.f32.partialorder %v1494, %v2187
        %vm2219 = vcmp.eq.f32.partialorder %v1494, %v2189
        %vm2220 = vcmp.eq.f32.partialorder %v1494, %v2191
        %vm2221 = vcmp.eq.f32.partialorder %v1494, %v2193
        %vm2222 = vcmp.eq.f32.partialorder %v1494, %v2195
        %vm2223 = vcmp.eq.f32.partialorder %v1494, %v2197
        %vm2224 = vcmp.eq.f32.partialorder %v1494, %v2199
        %vm2225 = vcmp.eq.f32.partialorder %v1494, %v2201
        %vm2226 = vcmp.eq.f32.partialorder %v1494, %v2203
        %vm2227 = vcmp.eq.f32.partialorder %v1494, %v2205
        %vm2228 = vcmp.eq.f32.partialorder %v1494, %v2207
        %vm2229 = vcmp.eq.f32.partialorder %v1494, %v2209
        %vm2230 = vcmp.eq.f32.partialorder %v1494, %v2211
        %vm2231 = vcmp.eq.f32.partialorder %v1494, %v2213
        %vm2232 = vcmp.eq.f32.partialorder %v1494, %v2215
        %vm2233 = vcmp.eq.f32.partialorder %v1494, %v2217
        %v2234 = vsel %vm2218, %v1364, 0.0
        %v2235 = vsel %vm2219, %v1365, 0.0
        %v2236 = vsel %vm2220, %v1366, 0.0
        %v2237 = vsel %vm2221, %v1367, 0.0
        %v2238 = vsel %vm2222, %v1368, 0.0
        %v2239 = vsel %vm2223, %v1369, 0.0
        %v2240 = vsel %vm2224, %v1370, 0.0
        %v2241 = vsel %vm2225, %v1371, 0.0
        %v2242 = vsel %vm2226, %v1372, 0.0
        %v2243 = vsel %vm2227, %v1373, 0.0
        %v2244 = vsel %vm2228, %v1374, 0.0
        %v2245 = vsel %vm2229, %v1375, 0.0
        %v2246 = vsel %vm2230, %v1376, 0.0
        %v2247 = vsel %vm2231, %v1377, 0.0
        %v2248 = vsel %vm2232, %v1378, 0.0
        %v2249 = vsel %vm2233, %v1379, 0.0
        %2250 = vmax.xlane.f32.xlu0 %v2234
        %v2251 = vpop.xlane.xlu0 %2250
        %2252 = vmax.xlane.f32.xlu0 %v2235
        %v2253 = vpop.xlane.xlu0 %2252
        %2254 = vmax.xlane.f32.xlu0 %v2236
        %v2255 = vpop.xlane.xlu0 %2254
        %2256 = vmax.xlane.f32.xlu0 %v2237
        %v2257 = vpop.xlane.xlu0 %2256
        %2258 = vmax.xlane.f32.xlu0 %v2238
        %v2259 = vpop.xlane.xlu0 %2258
        %2260 = vmax.xlane.f32.xlu0 %v2239
        %v2261 = vpop.xlane.xlu0 %2260
        %2262 = vmax.xlane.f32.xlu0 %v2240
        %v2263 = vpop.xlane.xlu0 %2262
        %2264 = vmax.xlane.f32.xlu0 %v2241
        %v2265 = vpop.xlane.xlu0 %2264
        %2266 = vmax.xlane.f32.xlu0 %v2242
        %v2267 = vpop.xlane.xlu0 %2266
        %2268 = vmax.xlane.f32.xlu0 %v2243
        %v2269 = vpop.xlane.xlu0 %2268
        %2270 = vmax.xlane.f32.xlu0 %v2244
        %v2271 = vpop.xlane.xlu0 %2270
        %2272 = vmax.xlane.f32.xlu0 %v2245
        %v2273 = vpop.xlane.xlu0 %2272
        %2274 = vmax.xlane.f32.xlu0 %v2246
        %v2275 = vpop.xlane.xlu0 %2274
        %2276 = vmax.xlane.f32.xlu0 %v2247
        %v2277 = vpop.xlane.xlu0 %2276
        %2278 = vmax.xlane.f32.xlu0 %v2248
        %v2279 = vpop.xlane.xlu0 %2278
        %2280 = vmax.xlane.f32.xlu0 %v2249
        %v2281 = vpop.xlane.xlu0 %2280
        %vm2282 = vcmp.eq.s32.totalorder %v1493, 3
        %v2283 = vsel %vm2282, %v2187, %v2074
        %v2284 = vsel %vm2282, %v2189, %v2075
        %v2285 = vsel %vm2282, %v2191, %v2076
        %v2286 = vsel %vm2282, %v2193, %v2077
        %v2287 = vsel %vm2282, %v2195, %v2078
        %v2288 = vsel %vm2282, %v2197, %v2079
        %v2289 = vsel %vm2282, %v2199, %v2080
        %v2290 = vsel %vm2282, %v2201, %v2081
        %v2291 = vsel %vm2282, %v2203, %v2082
        %v2292 = vsel %vm2282, %v2205, %v2083
        %v2293 = vsel %vm2282, %v2207, %v2084
        %v2294 = vsel %vm2282, %v2209, %v2085
        %v2295 = vsel %vm2282, %v2211, %v2086
        %v2296 = vsel %vm2282, %v2213, %v2087
        %v2297 = vsel %vm2282, %v2215, %v2088
        %v2298 = vsel %vm2282, %v2217, %v2089
        %v2299 = vsel %vm2282, %v2251, %v2090
        %v2300 = vsel %vm2282, %v2253, %v2091
        %v2301 = vsel %vm2282, %v2255, %v2092
        %v2302 = vsel %vm2282, %v2257, %v2093
        %v2303 = vsel %vm2282, %v2259, %v2094
        %v2304 = vsel %vm2282, %v2261, %v2095
        %v2305 = vsel %vm2282, %v2263, %v2096
        %v2306 = vsel %vm2282, %v2265, %v2097
        %v2307 = vsel %vm2282, %v2267, %v2098
        %v2308 = vsel %vm2282, %v2269, %v2099
        %v2309 = vsel %vm2282, %v2271, %v2100
        %v2310 = vsel %vm2282, %v2273, %v2101
        %v2311 = vsel %vm2282, %v2275, %v2102
        %v2312 = vsel %vm2282, %v2277, %v2103
        %v2313 = vsel %vm2282, %v2279, %v2104
        %v2314 = vsel %vm2282, %v2281, %v2105
        %v2315 = vsel %vm2218, -1.0, %v2106
        %v2316 = vsel %vm2219, -1.0, %v2107
        %v2317 = vsel %vm2220, -1.0, %v2108
        %v2318 = vsel %vm2221, -1.0, %v2109
        %v2319 = vsel %vm2222, -1.0, %v2110
        %v2320 = vsel %vm2223, -1.0, %v2111
        %v2321 = vsel %vm2224, -1.0, %v2112
        %v2322 = vsel %vm2225, -1.0, %v2113
        %v2323 = vsel %vm2226, -1.0, %v2114
        %v2324 = vsel %vm2227, -1.0, %v2115
        %v2325 = vsel %vm2228, -1.0, %v2116
        %v2326 = vsel %vm2229, -1.0, %v2117
        %v2327 = vsel %vm2230, -1.0, %v2118
        %v2328 = vsel %vm2231, -1.0, %v2119
        %v2329 = vsel %vm2232, -1.0, %v2120
        %v2330 = vsel %vm2233, -1.0, %v2121
        %2331 = vmax.xlane.f32.xlu0 %v2315
        %v2332 = vpop.xlane.xlu0 %2331
        %2333 = vmax.xlane.f32.xlu0 %v2316
        %v2334 = vpop.xlane.xlu0 %2333
        %2335 = vmax.xlane.f32.xlu0 %v2317
        %v2336 = vpop.xlane.xlu0 %2335
        %2337 = vmax.xlane.f32.xlu0 %v2318
        %v2338 = vpop.xlane.xlu0 %2337
        %2339 = vmax.xlane.f32.xlu0 %v2319
        %v2340 = vpop.xlane.xlu0 %2339
        %2341 = vmax.xlane.f32.xlu0 %v2320
        %v2342 = vpop.xlane.xlu0 %2341
        %2343 = vmax.xlane.f32.xlu0 %v2321
        %v2344 = vpop.xlane.xlu0 %2343
        %2345 = vmax.xlane.f32.xlu0 %v2322
        %v2346 = vpop.xlane.xlu0 %2345
        %2347 = vmax.xlane.f32.xlu0 %v2323
        %v2348 = vpop.xlane.xlu0 %2347
        %2349 = vmax.xlane.f32.xlu0 %v2324
        %v2350 = vpop.xlane.xlu0 %2349
        %2351 = vmax.xlane.f32.xlu0 %v2325
        %v2352 = vpop.xlane.xlu0 %2351
        %2353 = vmax.xlane.f32.xlu0 %v2326
        %v2354 = vpop.xlane.xlu0 %2353
        %2355 = vmax.xlane.f32.xlu0 %v2327
        %v2356 = vpop.xlane.xlu0 %2355
        %2357 = vmax.xlane.f32.xlu0 %v2328
        %v2358 = vpop.xlane.xlu0 %2357
        %2359 = vmax.xlane.f32.xlu0 %v2329
        %v2360 = vpop.xlane.xlu0 %2359
        %2361 = vmax.xlane.f32.xlu0 %v2330
        %v2362 = vpop.xlane.xlu0 %2361
        %vm2363 = vcmp.eq.f32.partialorder %v2315, %v2332
        %vm2364 = vcmp.eq.f32.partialorder %v2316, %v2334
        %vm2365 = vcmp.eq.f32.partialorder %v2317, %v2336
        %vm2366 = vcmp.eq.f32.partialorder %v2318, %v2338
        %vm2367 = vcmp.eq.f32.partialorder %v2319, %v2340
        %vm2368 = vcmp.eq.f32.partialorder %v2320, %v2342
        %vm2369 = vcmp.eq.f32.partialorder %v2321, %v2344
        %vm2370 = vcmp.eq.f32.partialorder %v2322, %v2346
        %vm2371 = vcmp.eq.f32.partialorder %v2323, %v2348
        %vm2372 = vcmp.eq.f32.partialorder %v2324, %v2350
        %vm2373 = vcmp.eq.f32.partialorder %v2325, %v2352
        %vm2374 = vcmp.eq.f32.partialorder %v2326, %v2354
        %vm2375 = vcmp.eq.f32.partialorder %v2327, %v2356
        %vm2376 = vcmp.eq.f32.partialorder %v2328, %v2358
        %vm2377 = vcmp.eq.f32.partialorder %v2329, %v2360
        %vm2378 = vcmp.eq.f32.partialorder %v2330, %v2362
        %v2379 = vsel %vm2363, %v1494, 128.0
        %v2380 = vsel %vm2364, %v1494, 128.0
        %v2381 = vsel %vm2365, %v1494, 128.0
        %v2382 = vsel %vm2366, %v1494, 128.0
        %v2383 = vsel %vm2367, %v1494, 128.0
        %v2384 = vsel %vm2368, %v1494, 128.0
        %v2385 = vsel %vm2369, %v1494, 128.0
        %v2386 = vsel %vm2370, %v1494, 128.0
        %v2387 = vsel %vm2371, %v1494, 128.0
        %v2388 = vsel %vm2372, %v1494, 128.0
        %v2389 = vsel %vm2373, %v1494, 128.0
        %v2390 = vsel %vm2374, %v1494, 128.0
        %v2391 = vsel %vm2375, %v1494, 128.0
        %v2392 = vsel %vm2376, %v1494, 128.0
        %v2393 = vsel %vm2377, %v1494, 128.0
        %v2394 = vsel %vm2378, %v1494, 128.0
        %2395 = vmin.xlane.f32.xlu0 %v2379
        %v2396 = vpop.xlane.xlu0 %2395
        %2397 = vmin.xlane.f32.xlu0 %v2380
        %v2398 = vpop.xlane.xlu0 %2397
        %2399 = vmin.xlane.f32.xlu0 %v2381
        %v2400 = vpop.xlane.xlu0 %2399
        %2401 = vmin.xlane.f32.xlu0 %v2382
        %v2402 = vpop.xlane.xlu0 %2401
        %2403 = vmin.xlane.f32.xlu0 %v2383
        %v2404 = vpop.xlane.xlu0 %2403
        %2405 = vmin.xlane.f32.xlu0 %v2384
        %v2406 = vpop.xlane.xlu0 %2405
        %2407 = vmin.xlane.f32.xlu0 %v2385
        %v2408 = vpop.xlane.xlu0 %2407
        %2409 = vmin.xlane.f32.xlu0 %v2386
        %v2410 = vpop.xlane.xlu0 %2409
        %2411 = vmin.xlane.f32.xlu0 %v2387
        %v2412 = vpop.xlane.xlu0 %2411
        %2413 = vmin.xlane.f32.xlu0 %v2388
        %v2414 = vpop.xlane.xlu0 %2413
        %2415 = vmin.xlane.f32.xlu0 %v2389
        %v2416 = vpop.xlane.xlu0 %2415
        %2417 = vmin.xlane.f32.xlu0 %v2390
        %v2418 = vpop.xlane.xlu0 %2417
        %2419 = vmin.xlane.f32.xlu0 %v2391
        %v2420 = vpop.xlane.xlu0 %2419
        %2421 = vmin.xlane.f32.xlu0 %v2392
        %v2422 = vpop.xlane.xlu0 %2421
        %2423 = vmin.xlane.f32.xlu0 %v2393
        %v2424 = vpop.xlane.xlu0 %2423
        %2425 = vmin.xlane.f32.xlu0 %v2394
        %v2426 = vpop.xlane.xlu0 %2425
        %vm2427 = vcmp.eq.f32.partialorder %v1494, %v2396
        %vm2428 = vcmp.eq.f32.partialorder %v1494, %v2398
        %vm2429 = vcmp.eq.f32.partialorder %v1494, %v2400
        %vm2430 = vcmp.eq.f32.partialorder %v1494, %v2402
        %vm2431 = vcmp.eq.f32.partialorder %v1494, %v2404
        %vm2432 = vcmp.eq.f32.partialorder %v1494, %v2406
        %vm2433 = vcmp.eq.f32.partialorder %v1494, %v2408
        %vm2434 = vcmp.eq.f32.partialorder %v1494, %v2410
        %vm2435 = vcmp.eq.f32.partialorder %v1494, %v2412
        %vm2436 = vcmp.eq.f32.partialorder %v1494, %v2414
        %vm2437 = vcmp.eq.f32.partialorder %v1494, %v2416
        %vm2438 = vcmp.eq.f32.partialorder %v1494, %v2418
        %vm2439 = vcmp.eq.f32.partialorder %v1494, %v2420
        %vm2440 = vcmp.eq.f32.partialorder %v1494, %v2422
        %vm2441 = vcmp.eq.f32.partialorder %v1494, %v2424
        %vm2442 = vcmp.eq.f32.partialorder %v1494, %v2426
        %v2443 = vsel %vm2427, %v1364, 0.0
        %v2444 = vsel %vm2428, %v1365, 0.0
        %v2445 = vsel %vm2429, %v1366, 0.0
        %v2446 = vsel %vm2430, %v1367, 0.0
        %v2447 = vsel %vm2431, %v1368, 0.0
        %v2448 = vsel %vm2432, %v1369, 0.0
        %v2449 = vsel %vm2433, %v1370, 0.0
        %v2450 = vsel %vm2434, %v1371, 0.0
        %v2451 = vsel %vm2435, %v1372, 0.0
        %v2452 = vsel %vm2436, %v1373, 0.0
        %v2453 = vsel %vm2437, %v1374, 0.0
        %v2454 = vsel %vm2438, %v1375, 0.0
        %v2455 = vsel %vm2439, %v1376, 0.0
        %v2456 = vsel %vm2440, %v1377, 0.0
        %v2457 = vsel %vm2441, %v1378, 0.0
        %v2458 = vsel %vm2442, %v1379, 0.0
        %2459 = vmax.xlane.f32.xlu0 %v2443
        %v2460 = vpop.xlane.xlu0 %2459
        %2461 = vmax.xlane.f32.xlu0 %v2444
        %v2462 = vpop.xlane.xlu0 %2461
        %2463 = vmax.xlane.f32.xlu0 %v2445
        %v2464 = vpop.xlane.xlu0 %2463
        %2465 = vmax.xlane.f32.xlu0 %v2446
        %v2466 = vpop.xlane.xlu0 %2465
        %2467 = vmax.xlane.f32.xlu0 %v2447
        %v2468 = vpop.xlane.xlu0 %2467
        %2469 = vmax.xlane.f32.xlu0 %v2448
        %v2470 = vpop.xlane.xlu0 %2469
        %2471 = vmax.xlane.f32.xlu0 %v2449
        %v2472 = vpop.xlane.xlu0 %2471
        %2473 = vmax.xlane.f32.xlu0 %v2450
        %v2474 = vpop.xlane.xlu0 %2473
        %2475 = vmax.xlane.f32.xlu0 %v2451
        %v2476 = vpop.xlane.xlu0 %2475
        %2477 = vmax.xlane.f32.xlu0 %v2452
        %v2478 = vpop.xlane.xlu0 %2477
        %2479 = vmax.xlane.f32.xlu0 %v2453
        %v2480 = vpop.xlane.xlu0 %2479
        %2481 = vmax.xlane.f32.xlu0 %v2454
        %v2482 = vpop.xlane.xlu0 %2481
        %2483 = vmax.xlane.f32.xlu0 %v2455
        %v2484 = vpop.xlane.xlu0 %2483
        %2485 = vmax.xlane.f32.xlu0 %v2456
        %v2486 = vpop.xlane.xlu0 %2485
        %2487 = vmax.xlane.f32.xlu0 %v2457
        %v2488 = vpop.xlane.xlu0 %2487
        %2489 = vmax.xlane.f32.xlu0 %v2458
        %v2490 = vpop.xlane.xlu0 %2489
        %vm2491 = vcmp.eq.s32.totalorder %v1493, 4
        %v2492 = vsel %vm2491, %v2396, %v2283
        %v2493 = vsel %vm2491, %v2398, %v2284
        %v2494 = vsel %vm2491, %v2400, %v2285
        %v2495 = vsel %vm2491, %v2402, %v2286
        %v2496 = vsel %vm2491, %v2404, %v2287
        %v2497 = vsel %vm2491, %v2406, %v2288
        %v2498 = vsel %vm2491, %v2408, %v2289
        %v2499 = vsel %vm2491, %v2410, %v2290
        %v2500 = vsel %vm2491, %v2412, %v2291
        %v2501 = vsel %vm2491, %v2414, %v2292
        %v2502 = vsel %vm2491, %v2416, %v2293
        %v2503 = vsel %vm2491, %v2418, %v2294
        %v2504 = vsel %vm2491, %v2420, %v2295
        %v2505 = vsel %vm2491, %v2422, %v2296
        %v2506 = vsel %vm2491, %v2424, %v2297
        %v2507 = vsel %vm2491, %v2426, %v2298
        %v2508 = vsel %vm2491, %v2460, %v2299
        %v2509 = vsel %vm2491, %v2462, %v2300
        %v2510 = vsel %vm2491, %v2464, %v2301
        %v2511 = vsel %vm2491, %v2466, %v2302
        %v2512 = vsel %vm2491, %v2468, %v2303
        %v2513 = vsel %vm2491, %v2470, %v2304
        %v2514 = vsel %vm2491, %v2472, %v2305
        %v2515 = vsel %vm2491, %v2474, %v2306
        %v2516 = vsel %vm2491, %v2476, %v2307
        %v2517 = vsel %vm2491, %v2478, %v2308
        %v2518 = vsel %vm2491, %v2480, %v2309
        %v2519 = vsel %vm2491, %v2482, %v2310
        %v2520 = vsel %vm2491, %v2484, %v2311
        %v2521 = vsel %vm2491, %v2486, %v2312
        %v2522 = vsel %vm2491, %v2488, %v2313
        %v2523 = vsel %vm2491, %v2490, %v2314
        %v2524 = vsel %vm2427, -1.0, %v2315
        %v2525 = vsel %vm2428, -1.0, %v2316
        %v2526 = vsel %vm2429, -1.0, %v2317
        %v2527 = vsel %vm2430, -1.0, %v2318
        %v2528 = vsel %vm2431, -1.0, %v2319
        %v2529 = vsel %vm2432, -1.0, %v2320
        %v2530 = vsel %vm2433, -1.0, %v2321
        %v2531 = vsel %vm2434, -1.0, %v2322
        %v2532 = vsel %vm2435, -1.0, %v2323
        %v2533 = vsel %vm2436, -1.0, %v2324
        %v2534 = vsel %vm2437, -1.0, %v2325
        %v2535 = vsel %vm2438, -1.0, %v2326
        %v2536 = vsel %vm2439, -1.0, %v2327
        %v2537 = vsel %vm2440, -1.0, %v2328
        %v2538 = vsel %vm2441, -1.0, %v2329
        %v2539 = vsel %vm2442, -1.0, %v2330
        %2540 = vmax.xlane.f32.xlu0 %v2524
        %v2541 = vpop.xlane.xlu0 %2540
        %2542 = vmax.xlane.f32.xlu0 %v2525
        %v2543 = vpop.xlane.xlu0 %2542
        %2544 = vmax.xlane.f32.xlu0 %v2526
        %v2545 = vpop.xlane.xlu0 %2544
        %2546 = vmax.xlane.f32.xlu0 %v2527
        %v2547 = vpop.xlane.xlu0 %2546
        %2548 = vmax.xlane.f32.xlu0 %v2528
        %v2549 = vpop.xlane.xlu0 %2548
        %2550 = vmax.xlane.f32.xlu0 %v2529
        %v2551 = vpop.xlane.xlu0 %2550
        %2552 = vmax.xlane.f32.xlu0 %v2530
        %v2553 = vpop.xlane.xlu0 %2552
        %2554 = vmax.xlane.f32.xlu0 %v2531
        %v2555 = vpop.xlane.xlu0 %2554
        %2556 = vmax.xlane.f32.xlu0 %v2532
        %v2557 = vpop.xlane.xlu0 %2556
        %2558 = vmax.xlane.f32.xlu0 %v2533
        %v2559 = vpop.xlane.xlu0 %2558
        %2560 = vmax.xlane.f32.xlu0 %v2534
        %v2561 = vpop.xlane.xlu0 %2560
        %2562 = vmax.xlane.f32.xlu0 %v2535
        %v2563 = vpop.xlane.xlu0 %2562
        %2564 = vmax.xlane.f32.xlu0 %v2536
        %v2565 = vpop.xlane.xlu0 %2564
        %2566 = vmax.xlane.f32.xlu0 %v2537
        %v2567 = vpop.xlane.xlu0 %2566
        %2568 = vmax.xlane.f32.xlu0 %v2538
        %v2569 = vpop.xlane.xlu0 %2568
        %2570 = vmax.xlane.f32.xlu0 %v2539
        %v2571 = vpop.xlane.xlu0 %2570
        %vm2572 = vcmp.eq.f32.partialorder %v2524, %v2541
        %vm2573 = vcmp.eq.f32.partialorder %v2525, %v2543
        %vm2574 = vcmp.eq.f32.partialorder %v2526, %v2545
        %vm2575 = vcmp.eq.f32.partialorder %v2527, %v2547
        %vm2576 = vcmp.eq.f32.partialorder %v2528, %v2549
        %vm2577 = vcmp.eq.f32.partialorder %v2529, %v2551
        %vm2578 = vcmp.eq.f32.partialorder %v2530, %v2553
        %vm2579 = vcmp.eq.f32.partialorder %v2531, %v2555
        %vm2580 = vcmp.eq.f32.partialorder %v2532, %v2557
        %vm2581 = vcmp.eq.f32.partialorder %v2533, %v2559
        %vm2582 = vcmp.eq.f32.partialorder %v2534, %v2561
        %vm2583 = vcmp.eq.f32.partialorder %v2535, %v2563
        %vm2584 = vcmp.eq.f32.partialorder %v2536, %v2565
        %vm2585 = vcmp.eq.f32.partialorder %v2537, %v2567
        %vm2586 = vcmp.eq.f32.partialorder %v2538, %v2569
        %vm2587 = vcmp.eq.f32.partialorder %v2539, %v2571
        %v2588 = vsel %vm2572, %v1494, 128.0
        %v2589 = vsel %vm2573, %v1494, 128.0
        %v2590 = vsel %vm2574, %v1494, 128.0
        %v2591 = vsel %vm2575, %v1494, 128.0
        %v2592 = vsel %vm2576, %v1494, 128.0
        %v2593 = vsel %vm2577, %v1494, 128.0
        %v2594 = vsel %vm2578, %v1494, 128.0
        %v2595 = vsel %vm2579, %v1494, 128.0
        %v2596 = vsel %vm2580, %v1494, 128.0
        %v2597 = vsel %vm2581, %v1494, 128.0
        %v2598 = vsel %vm2582, %v1494, 128.0
        %v2599 = vsel %vm2583, %v1494, 128.0
        %v2600 = vsel %vm2584, %v1494, 128.0
        %v2601 = vsel %vm2585, %v1494, 128.0
        %v2602 = vsel %vm2586, %v1494, 128.0
        %v2603 = vsel %vm2587, %v1494, 128.0
        %2604 = vmin.xlane.f32.xlu0 %v2588
        %v2605 = vpop.xlane.xlu0 %2604
        %2606 = vmin.xlane.f32.xlu0 %v2589
        %v2607 = vpop.xlane.xlu0 %2606
        %2608 = vmin.xlane.f32.xlu0 %v2590
        %v2609 = vpop.xlane.xlu0 %2608
        %2610 = vmin.xlane.f32.xlu0 %v2591
        %v2611 = vpop.xlane.xlu0 %2610
        %2612 = vmin.xlane.f32.xlu0 %v2592
        %v2613 = vpop.xlane.xlu0 %2612
        %2614 = vmin.xlane.f32.xlu0 %v2593
        %v2615 = vpop.xlane.xlu0 %2614
        %2616 = vmin.xlane.f32.xlu0 %v2594
        %v2617 = vpop.xlane.xlu0 %2616
        %2618 = vmin.xlane.f32.xlu0 %v2595
        %v2619 = vpop.xlane.xlu0 %2618
        %2620 = vmin.xlane.f32.xlu0 %v2596
        %v2621 = vpop.xlane.xlu0 %2620
        %2622 = vmin.xlane.f32.xlu0 %v2597
        %v2623 = vpop.xlane.xlu0 %2622
        %2624 = vmin.xlane.f32.xlu0 %v2598
        %v2625 = vpop.xlane.xlu0 %2624
        %2626 = vmin.xlane.f32.xlu0 %v2599
        %v2627 = vpop.xlane.xlu0 %2626
        %2628 = vmin.xlane.f32.xlu0 %v2600
        %v2629 = vpop.xlane.xlu0 %2628
        %2630 = vmin.xlane.f32.xlu0 %v2601
        %v2631 = vpop.xlane.xlu0 %2630
        %2632 = vmin.xlane.f32.xlu0 %v2602
        %v2633 = vpop.xlane.xlu0 %2632
        %2634 = vmin.xlane.f32.xlu0 %v2603
        %v2635 = vpop.xlane.xlu0 %2634
        %vm2636 = vcmp.eq.f32.partialorder %v1494, %v2605
        %vm2637 = vcmp.eq.f32.partialorder %v1494, %v2607
        %vm2638 = vcmp.eq.f32.partialorder %v1494, %v2609
        %vm2639 = vcmp.eq.f32.partialorder %v1494, %v2611
        %vm2640 = vcmp.eq.f32.partialorder %v1494, %v2613
        %vm2641 = vcmp.eq.f32.partialorder %v1494, %v2615
        %vm2642 = vcmp.eq.f32.partialorder %v1494, %v2617
        %vm2643 = vcmp.eq.f32.partialorder %v1494, %v2619
        %vm2644 = vcmp.eq.f32.partialorder %v1494, %v2621
        %vm2645 = vcmp.eq.f32.partialorder %v1494, %v2623
        %vm2646 = vcmp.eq.f32.partialorder %v1494, %v2625
        %vm2647 = vcmp.eq.f32.partialorder %v1494, %v2627
        %vm2648 = vcmp.eq.f32.partialorder %v1494, %v2629
        %vm2649 = vcmp.eq.f32.partialorder %v1494, %v2631
        %vm2650 = vcmp.eq.f32.partialorder %v1494, %v2633
        %vm2651 = vcmp.eq.f32.partialorder %v1494, %v2635
        %v2652 = vsel %vm2636, %v1364, 0.0
        %v2653 = vsel %vm2637, %v1365, 0.0
        %v2654 = vsel %vm2638, %v1366, 0.0
        %v2655 = vsel %vm2639, %v1367, 0.0
        %v2656 = vsel %vm2640, %v1368, 0.0
        %v2657 = vsel %vm2641, %v1369, 0.0
        %v2658 = vsel %vm2642, %v1370, 0.0
        %v2659 = vsel %vm2643, %v1371, 0.0
        %v2660 = vsel %vm2644, %v1372, 0.0
        %v2661 = vsel %vm2645, %v1373, 0.0
        %v2662 = vsel %vm2646, %v1374, 0.0
        %v2663 = vsel %vm2647, %v1375, 0.0
        %v2664 = vsel %vm2648, %v1376, 0.0
        %v2665 = vsel %vm2649, %v1377, 0.0
        %v2666 = vsel %vm2650, %v1378, 0.0
        %v2667 = vsel %vm2651, %v1379, 0.0
        %2668 = vmax.xlane.f32.xlu0 %v2652
        %v2669 = vpop.xlane.xlu0 %2668
        %2670 = vmax.xlane.f32.xlu0 %v2653
        %v2671 = vpop.xlane.xlu0 %2670
        %2672 = vmax.xlane.f32.xlu0 %v2654
        %v2673 = vpop.xlane.xlu0 %2672
        %2674 = vmax.xlane.f32.xlu0 %v2655
        %v2675 = vpop.xlane.xlu0 %2674
        %2676 = vmax.xlane.f32.xlu0 %v2656
        %v2677 = vpop.xlane.xlu0 %2676
        %2678 = vmax.xlane.f32.xlu0 %v2657
        %v2679 = vpop.xlane.xlu0 %2678
        %2680 = vmax.xlane.f32.xlu0 %v2658
        %v2681 = vpop.xlane.xlu0 %2680
        %2682 = vmax.xlane.f32.xlu0 %v2659
        %v2683 = vpop.xlane.xlu0 %2682
        %2684 = vmax.xlane.f32.xlu0 %v2660
        %v2685 = vpop.xlane.xlu0 %2684
        %2686 = vmax.xlane.f32.xlu0 %v2661
        %v2687 = vpop.xlane.xlu0 %2686
        %2688 = vmax.xlane.f32.xlu0 %v2662
        %v2689 = vpop.xlane.xlu0 %2688
        %2690 = vmax.xlane.f32.xlu0 %v2663
        %v2691 = vpop.xlane.xlu0 %2690
        %2692 = vmax.xlane.f32.xlu0 %v2664
        %v2693 = vpop.xlane.xlu0 %2692
        %2694 = vmax.xlane.f32.xlu0 %v2665
        %v2695 = vpop.xlane.xlu0 %2694
        %2696 = vmax.xlane.f32.xlu0 %v2666
        %v2697 = vpop.xlane.xlu0 %2696
        %2698 = vmax.xlane.f32.xlu0 %v2667
        %v2699 = vpop.xlane.xlu0 %2698
        %vm2700 = vcmp.eq.s32.totalorder %v1493, 5
        %v2701 = vsel %vm2700, %v2605, %v2492
        %v2702 = vsel %vm2700, %v2607, %v2493
        %v2703 = vsel %vm2700, %v2609, %v2494
        %v2704 = vsel %vm2700, %v2611, %v2495
        %v2705 = vsel %vm2700, %v2613, %v2496
        %v2706 = vsel %vm2700, %v2615, %v2497
        %v2707 = vsel %vm2700, %v2617, %v2498
        %v2708 = vsel %vm2700, %v2619, %v2499
        %v2709 = vsel %vm2700, %v2621, %v2500
        %v2710 = vsel %vm2700, %v2623, %v2501
        %v2711 = vsel %vm2700, %v2625, %v2502
        %v2712 = vsel %vm2700, %v2627, %v2503
        %v2713 = vsel %vm2700, %v2629, %v2504
        %v2714 = vsel %vm2700, %v2631, %v2505
        %v2715 = vsel %vm2700, %v2633, %v2506
        %v2716 = vsel %vm2700, %v2635, %v2507
        %v2717 = vsel %vm2700, %v2669, %v2508
        %v2718 = vsel %vm2700, %v2671, %v2509
        %v2719 = vsel %vm2700, %v2673, %v2510
        %v2720 = vsel %vm2700, %v2675, %v2511
        %v2721 = vsel %vm2700, %v2677, %v2512
        %v2722 = vsel %vm2700, %v2679, %v2513
        %v2723 = vsel %vm2700, %v2681, %v2514
        %v2724 = vsel %vm2700, %v2683, %v2515
        %v2725 = vsel %vm2700, %v2685, %v2516
        %v2726 = vsel %vm2700, %v2687, %v2517
        %v2727 = vsel %vm2700, %v2689, %v2518
        %v2728 = vsel %vm2700, %v2691, %v2519
        %v2729 = vsel %vm2700, %v2693, %v2520
        %v2730 = vsel %vm2700, %v2695, %v2521
        %v2731 = vsel %vm2700, %v2697, %v2522
        %v2732 = vsel %vm2700, %v2699, %v2523
        %v2733 = vsel %vm2636, -1.0, %v2524
        %v2734 = vsel %vm2637, -1.0, %v2525
        %v2735 = vsel %vm2638, -1.0, %v2526
        %v2736 = vsel %vm2639, -1.0, %v2527
        %v2737 = vsel %vm2640, -1.0, %v2528
        %v2738 = vsel %vm2641, -1.0, %v2529
        %v2739 = vsel %vm2642, -1.0, %v2530
        %v2740 = vsel %vm2643, -1.0, %v2531
        %v2741 = vsel %vm2644, -1.0, %v2532
        %v2742 = vsel %vm2645, -1.0, %v2533
        %v2743 = vsel %vm2646, -1.0, %v2534
        %v2744 = vsel %vm2647, -1.0, %v2535
        %v2745 = vsel %vm2648, -1.0, %v2536
        %v2746 = vsel %vm2649, -1.0, %v2537
        %v2747 = vsel %vm2650, -1.0, %v2538
        %v2748 = vsel %vm2651, -1.0, %v2539
        %2749 = vmax.xlane.f32.xlu0 %v2733
        %v2750 = vpop.xlane.xlu0 %2749
        %2751 = vmax.xlane.f32.xlu0 %v2734
        %v2752 = vpop.xlane.xlu0 %2751
        %2753 = vmax.xlane.f32.xlu0 %v2735
        %v2754 = vpop.xlane.xlu0 %2753
        %2755 = vmax.xlane.f32.xlu0 %v2736
        %v2756 = vpop.xlane.xlu0 %2755
        %2757 = vmax.xlane.f32.xlu0 %v2737
        %v2758 = vpop.xlane.xlu0 %2757
        %2759 = vmax.xlane.f32.xlu0 %v2738
        %v2760 = vpop.xlane.xlu0 %2759
        %2761 = vmax.xlane.f32.xlu0 %v2739
        %v2762 = vpop.xlane.xlu0 %2761
        %2763 = vmax.xlane.f32.xlu0 %v2740
        %v2764 = vpop.xlane.xlu0 %2763
        %2765 = vmax.xlane.f32.xlu0 %v2741
        %v2766 = vpop.xlane.xlu0 %2765
        %2767 = vmax.xlane.f32.xlu0 %v2742
        %v2768 = vpop.xlane.xlu0 %2767
        %2769 = vmax.xlane.f32.xlu0 %v2743
        %v2770 = vpop.xlane.xlu0 %2769
        %2771 = vmax.xlane.f32.xlu0 %v2744
        %v2772 = vpop.xlane.xlu0 %2771
        %2773 = vmax.xlane.f32.xlu0 %v2745
        %v2774 = vpop.xlane.xlu0 %2773
        %2775 = vmax.xlane.f32.xlu0 %v2746
        %v2776 = vpop.xlane.xlu0 %2775
        %2777 = vmax.xlane.f32.xlu0 %v2747
        %v2778 = vpop.xlane.xlu0 %2777
        %2779 = vmax.xlane.f32.xlu0 %v2748
        %v2780 = vpop.xlane.xlu0 %2779
        %vm2781 = vcmp.eq.f32.partialorder %v2733, %v2750
        %vm2782 = vcmp.eq.f32.partialorder %v2734, %v2752
        %vm2783 = vcmp.eq.f32.partialorder %v2735, %v2754
        %vm2784 = vcmp.eq.f32.partialorder %v2736, %v2756
        %vm2785 = vcmp.eq.f32.partialorder %v2737, %v2758
        %vm2786 = vcmp.eq.f32.partialorder %v2738, %v2760
        %vm2787 = vcmp.eq.f32.partialorder %v2739, %v2762
        %vm2788 = vcmp.eq.f32.partialorder %v2740, %v2764
        %vm2789 = vcmp.eq.f32.partialorder %v2741, %v2766
        %vm2790 = vcmp.eq.f32.partialorder %v2742, %v2768
        %vm2791 = vcmp.eq.f32.partialorder %v2743, %v2770
        %vm2792 = vcmp.eq.f32.partialorder %v2744, %v2772
        %vm2793 = vcmp.eq.f32.partialorder %v2745, %v2774
        %vm2794 = vcmp.eq.f32.partialorder %v2746, %v2776
        %vm2795 = vcmp.eq.f32.partialorder %v2747, %v2778
        %vm2796 = vcmp.eq.f32.partialorder %v2748, %v2780
        %v2797 = vsel %vm2781, %v1494, 128.0
        %v2798 = vsel %vm2782, %v1494, 128.0
        %v2799 = vsel %vm2783, %v1494, 128.0
        %v2800 = vsel %vm2784, %v1494, 128.0
        %v2801 = vsel %vm2785, %v1494, 128.0
        %v2802 = vsel %vm2786, %v1494, 128.0
        %v2803 = vsel %vm2787, %v1494, 128.0
        %v2804 = vsel %vm2788, %v1494, 128.0
        %v2805 = vsel %vm2789, %v1494, 128.0
        %v2806 = vsel %vm2790, %v1494, 128.0
        %v2807 = vsel %vm2791, %v1494, 128.0
        %v2808 = vsel %vm2792, %v1494, 128.0
        %v2809 = vsel %vm2793, %v1494, 128.0
        %v2810 = vsel %vm2794, %v1494, 128.0
        %v2811 = vsel %vm2795, %v1494, 128.0
        %v2812 = vsel %vm2796, %v1494, 128.0
        %2813 = vmin.xlane.f32.xlu0 %v2797
        %v2814 = vpop.xlane.xlu0 %2813
        %2815 = vmin.xlane.f32.xlu0 %v2798
        %v2816 = vpop.xlane.xlu0 %2815
        %2817 = vmin.xlane.f32.xlu0 %v2799
        %v2818 = vpop.xlane.xlu0 %2817
        %2819 = vmin.xlane.f32.xlu0 %v2800
        %v2820 = vpop.xlane.xlu0 %2819
        %2821 = vmin.xlane.f32.xlu0 %v2801
        %v2822 = vpop.xlane.xlu0 %2821
        %2823 = vmin.xlane.f32.xlu0 %v2802
        %v2824 = vpop.xlane.xlu0 %2823
        %2825 = vmin.xlane.f32.xlu0 %v2803
        %v2826 = vpop.xlane.xlu0 %2825
        %2827 = vmin.xlane.f32.xlu0 %v2804
        %v2828 = vpop.xlane.xlu0 %2827
        %2829 = vmin.xlane.f32.xlu0 %v2805
        %v2830 = vpop.xlane.xlu0 %2829
        %2831 = vmin.xlane.f32.xlu0 %v2806
        %v2832 = vpop.xlane.xlu0 %2831
        %2833 = vmin.xlane.f32.xlu0 %v2807
        %v2834 = vpop.xlane.xlu0 %2833
        %2835 = vmin.xlane.f32.xlu0 %v2808
        %v2836 = vpop.xlane.xlu0 %2835
        %2837 = vmin.xlane.f32.xlu0 %v2809
        %v2838 = vpop.xlane.xlu0 %2837
        %2839 = vmin.xlane.f32.xlu0 %v2810
        %v2840 = vpop.xlane.xlu0 %2839
        %2841 = vmin.xlane.f32.xlu0 %v2811
        %v2842 = vpop.xlane.xlu0 %2841
        %2843 = vmin.xlane.f32.xlu0 %v2812
        %v2844 = vpop.xlane.xlu0 %2843
        %vm2845 = vcmp.eq.f32.partialorder %v1494, %v2814
        %vm2846 = vcmp.eq.f32.partialorder %v1494, %v2816
        %vm2847 = vcmp.eq.f32.partialorder %v1494, %v2818
        %vm2848 = vcmp.eq.f32.partialorder %v1494, %v2820
        %vm2849 = vcmp.eq.f32.partialorder %v1494, %v2822
        %vm2850 = vcmp.eq.f32.partialorder %v1494, %v2824
        %vm2851 = vcmp.eq.f32.partialorder %v1494, %v2826
        %vm2852 = vcmp.eq.f32.partialorder %v1494, %v2828
        %vm2853 = vcmp.eq.f32.partialorder %v1494, %v2830
        %vm2854 = vcmp.eq.f32.partialorder %v1494, %v2832
        %vm2855 = vcmp.eq.f32.partialorder %v1494, %v2834
        %vm2856 = vcmp.eq.f32.partialorder %v1494, %v2836
        %vm2857 = vcmp.eq.f32.partialorder %v1494, %v2838
        %vm2858 = vcmp.eq.f32.partialorder %v1494, %v2840
        %vm2859 = vcmp.eq.f32.partialorder %v1494, %v2842
        %vm2860 = vcmp.eq.f32.partialorder %v1494, %v2844
        %v2861 = vsel %vm2845, %v1364, 0.0
        %v2862 = vsel %vm2846, %v1365, 0.0
        %v2863 = vsel %vm2847, %v1366, 0.0
        %v2864 = vsel %vm2848, %v1367, 0.0
        %v2865 = vsel %vm2849, %v1368, 0.0
        %v2866 = vsel %vm2850, %v1369, 0.0
        %v2867 = vsel %vm2851, %v1370, 0.0
        %v2868 = vsel %vm2852, %v1371, 0.0
        %v2869 = vsel %vm2853, %v1372, 0.0
        %v2870 = vsel %vm2854, %v1373, 0.0
        %v2871 = vsel %vm2855, %v1374, 0.0
        %v2872 = vsel %vm2856, %v1375, 0.0
        %v2873 = vsel %vm2857, %v1376, 0.0
        %v2874 = vsel %vm2858, %v1377, 0.0
        %v2875 = vsel %vm2859, %v1378, 0.0
        %v2876 = vsel %vm2860, %v1379, 0.0
        %2877 = vmax.xlane.f32.xlu0 %v2861
        %v2878 = vpop.xlane.xlu0 %2877
        %2879 = vmax.xlane.f32.xlu0 %v2862
        %v2880 = vpop.xlane.xlu0 %2879
        %2881 = vmax.xlane.f32.xlu0 %v2863
        %v2882 = vpop.xlane.xlu0 %2881
        %2883 = vmax.xlane.f32.xlu0 %v2864
        %v2884 = vpop.xlane.xlu0 %2883
        %2885 = vmax.xlane.f32.xlu0 %v2865
        %v2886 = vpop.xlane.xlu0 %2885
        %2887 = vmax.xlane.f32.xlu0 %v2866
        %v2888 = vpop.xlane.xlu0 %2887
        %2889 = vmax.xlane.f32.xlu0 %v2867
        %v2890 = vpop.xlane.xlu0 %2889
        %2891 = vmax.xlane.f32.xlu0 %v2868
        %v2892 = vpop.xlane.xlu0 %2891
        %2893 = vmax.xlane.f32.xlu0 %v2869
        %v2894 = vpop.xlane.xlu0 %2893
        %2895 = vmax.xlane.f32.xlu0 %v2870
        %v2896 = vpop.xlane.xlu0 %2895
        %2897 = vmax.xlane.f32.xlu0 %v2871
        %v2898 = vpop.xlane.xlu0 %2897
        %2899 = vmax.xlane.f32.xlu0 %v2872
        %v2900 = vpop.xlane.xlu0 %2899
        %2901 = vmax.xlane.f32.xlu0 %v2873
        %v2902 = vpop.xlane.xlu0 %2901
        %2903 = vmax.xlane.f32.xlu0 %v2874
        %v2904 = vpop.xlane.xlu0 %2903
        %2905 = vmax.xlane.f32.xlu0 %v2875
        %v2906 = vpop.xlane.xlu0 %2905
        %2907 = vmax.xlane.f32.xlu0 %v2876
        %v2908 = vpop.xlane.xlu0 %2907
        %vm2909 = vcmp.eq.s32.totalorder %v1493, 6
        %v2910 = vsel %vm2909, %v2814, %v2701
        %v2911 = vsel %vm2909, %v2816, %v2702
        %v2912 = vsel %vm2909, %v2818, %v2703
        %v2913 = vsel %vm2909, %v2820, %v2704
        %v2914 = vsel %vm2909, %v2822, %v2705
        %v2915 = vsel %vm2909, %v2824, %v2706
        %v2916 = vsel %vm2909, %v2826, %v2707
        %v2917 = vsel %vm2909, %v2828, %v2708
        %v2918 = vsel %vm2909, %v2830, %v2709
        %v2919 = vsel %vm2909, %v2832, %v2710
        %v2920 = vsel %vm2909, %v2834, %v2711
        %v2921 = vsel %vm2909, %v2836, %v2712
        %v2922 = vsel %vm2909, %v2838, %v2713
        %v2923 = vsel %vm2909, %v2840, %v2714
        %v2924 = vsel %vm2909, %v2842, %v2715
        %v2925 = vsel %vm2909, %v2844, %v2716
        %v2926 = vsel %vm2909, %v2878, %v2717
        %v2927 = vsel %vm2909, %v2880, %v2718
        %v2928 = vsel %vm2909, %v2882, %v2719
        %v2929 = vsel %vm2909, %v2884, %v2720
        %v2930 = vsel %vm2909, %v2886, %v2721
        %v2931 = vsel %vm2909, %v2888, %v2722
        %v2932 = vsel %vm2909, %v2890, %v2723
        %v2933 = vsel %vm2909, %v2892, %v2724
        %v2934 = vsel %vm2909, %v2894, %v2725
        %v2935 = vsel %vm2909, %v2896, %v2726
        %v2936 = vsel %vm2909, %v2898, %v2727
        %v2937 = vsel %vm2909, %v2900, %v2728
        %v2938 = vsel %vm2909, %v2902, %v2729
        %v2939 = vsel %vm2909, %v2904, %v2730
        %v2940 = vsel %vm2909, %v2906, %v2731
        %v2941 = vsel %vm2909, %v2908, %v2732
        %v2942 = vsel %vm2845, -1.0, %v2733
        %v2943 = vsel %vm2846, -1.0, %v2734
        %v2944 = vsel %vm2847, -1.0, %v2735
        %v2945 = vsel %vm2848, -1.0, %v2736
        %v2946 = vsel %vm2849, -1.0, %v2737
        %v2947 = vsel %vm2850, -1.0, %v2738
        %v2948 = vsel %vm2851, -1.0, %v2739
        %v2949 = vsel %vm2852, -1.0, %v2740
        %v2950 = vsel %vm2853, -1.0, %v2741
        %v2951 = vsel %vm2854, -1.0, %v2742
        %v2952 = vsel %vm2855, -1.0, %v2743
        %v2953 = vsel %vm2856, -1.0, %v2744
        %v2954 = vsel %vm2857, -1.0, %v2745
        %v2955 = vsel %vm2858, -1.0, %v2746
        %v2956 = vsel %vm2859, -1.0, %v2747
        %v2957 = vsel %vm2860, -1.0, %v2748
        %2958 = vmax.xlane.f32.xlu0 %v2942
        %v2959 = vpop.xlane.xlu0 %2958
        %2960 = vmax.xlane.f32.xlu0 %v2943
        %v2961 = vpop.xlane.xlu0 %2960
        %2962 = vmax.xlane.f32.xlu0 %v2944
        %v2963 = vpop.xlane.xlu0 %2962
        %2964 = vmax.xlane.f32.xlu0 %v2945
        %v2965 = vpop.xlane.xlu0 %2964
        %2966 = vmax.xlane.f32.xlu0 %v2946
        %v2967 = vpop.xlane.xlu0 %2966
        %2968 = vmax.xlane.f32.xlu0 %v2947
        %v2969 = vpop.xlane.xlu0 %2968
        %2970 = vmax.xlane.f32.xlu0 %v2948
        %v2971 = vpop.xlane.xlu0 %2970
        %2972 = vmax.xlane.f32.xlu0 %v2949
        %v2973 = vpop.xlane.xlu0 %2972
        %2974 = vmax.xlane.f32.xlu0 %v2950
        %v2975 = vpop.xlane.xlu0 %2974
        %2976 = vmax.xlane.f32.xlu0 %v2951
        %v2977 = vpop.xlane.xlu0 %2976
        %2978 = vmax.xlane.f32.xlu0 %v2952
        %v2979 = vpop.xlane.xlu0 %2978
        %2980 = vmax.xlane.f32.xlu0 %v2953
        %v2981 = vpop.xlane.xlu0 %2980
        %2982 = vmax.xlane.f32.xlu0 %v2954
        %v2983 = vpop.xlane.xlu0 %2982
        %2984 = vmax.xlane.f32.xlu0 %v2955
        %v2985 = vpop.xlane.xlu0 %2984
        %2986 = vmax.xlane.f32.xlu0 %v2956
        %v2987 = vpop.xlane.xlu0 %2986
        %2988 = vmax.xlane.f32.xlu0 %v2957
        %v2989 = vpop.xlane.xlu0 %2988
        %vm2990 = vcmp.eq.f32.partialorder %v2942, %v2959
        %vm2991 = vcmp.eq.f32.partialorder %v2943, %v2961
        %vm2992 = vcmp.eq.f32.partialorder %v2944, %v2963
        %vm2993 = vcmp.eq.f32.partialorder %v2945, %v2965
        %vm2994 = vcmp.eq.f32.partialorder %v2946, %v2967
        %vm2995 = vcmp.eq.f32.partialorder %v2947, %v2969
        %vm2996 = vcmp.eq.f32.partialorder %v2948, %v2971
        %vm2997 = vcmp.eq.f32.partialorder %v2949, %v2973
        %vm2998 = vcmp.eq.f32.partialorder %v2950, %v2975
        %vm2999 = vcmp.eq.f32.partialorder %v2951, %v2977
        %vm3000 = vcmp.eq.f32.partialorder %v2952, %v2979
        %vm3001 = vcmp.eq.f32.partialorder %v2953, %v2981
        %vm3002 = vcmp.eq.f32.partialorder %v2954, %v2983
        %vm3003 = vcmp.eq.f32.partialorder %v2955, %v2985
        %vm3004 = vcmp.eq.f32.partialorder %v2956, %v2987
        %vm3005 = vcmp.eq.f32.partialorder %v2957, %v2989
        %v3006 = vsel %vm2990, %v1494, 128.0
        %v3007 = vsel %vm2991, %v1494, 128.0
        %v3008 = vsel %vm2992, %v1494, 128.0
        %v3009 = vsel %vm2993, %v1494, 128.0
        %v3010 = vsel %vm2994, %v1494, 128.0
        %v3011 = vsel %vm2995, %v1494, 128.0
        %v3012 = vsel %vm2996, %v1494, 128.0
        %v3013 = vsel %vm2997, %v1494, 128.0
        %v3014 = vsel %vm2998, %v1494, 128.0
        %v3015 = vsel %vm2999, %v1494, 128.0
        %v3016 = vsel %vm3000, %v1494, 128.0
        %v3017 = vsel %vm3001, %v1494, 128.0
        %v3018 = vsel %vm3002, %v1494, 128.0
        %v3019 = vsel %vm3003, %v1494, 128.0
        %v3020 = vsel %vm3004, %v1494, 128.0
        %v3021 = vsel %vm3005, %v1494, 128.0
        %3022 = vmin.xlane.f32.xlu0 %v3006
        %v3023 = vpop.xlane.xlu0 %3022
        %3024 = vmin.xlane.f32.xlu0 %v3007
        %v3025 = vpop.xlane.xlu0 %3024
        %3026 = vmin.xlane.f32.xlu0 %v3008
        %v3027 = vpop.xlane.xlu0 %3026
        %3028 = vmin.xlane.f32.xlu0 %v3009
        %v3029 = vpop.xlane.xlu0 %3028
        %3030 = vmin.xlane.f32.xlu0 %v3010
        %v3031 = vpop.xlane.xlu0 %3030
        %3032 = vmin.xlane.f32.xlu0 %v3011
        %v3033 = vpop.xlane.xlu0 %3032
        %3034 = vmin.xlane.f32.xlu0 %v3012
        %v3035 = vpop.xlane.xlu0 %3034
        %3036 = vmin.xlane.f32.xlu0 %v3013
        %v3037 = vpop.xlane.xlu0 %3036
        %3038 = vmin.xlane.f32.xlu0 %v3014
        %v3039 = vpop.xlane.xlu0 %3038
        %3040 = vmin.xlane.f32.xlu0 %v3015
        %v3041 = vpop.xlane.xlu0 %3040
        %3042 = vmin.xlane.f32.xlu0 %v3016
        %v3043 = vpop.xlane.xlu0 %3042
        %3044 = vmin.xlane.f32.xlu0 %v3017
        %v3045 = vpop.xlane.xlu0 %3044
        %3046 = vmin.xlane.f32.xlu0 %v3018
        %v3047 = vpop.xlane.xlu0 %3046
        %3048 = vmin.xlane.f32.xlu0 %v3019
        %v3049 = vpop.xlane.xlu0 %3048
        %3050 = vmin.xlane.f32.xlu0 %v3020
        %v3051 = vpop.xlane.xlu0 %3050
        %3052 = vmin.xlane.f32.xlu0 %v3021
        %v3053 = vpop.xlane.xlu0 %3052
        %vm3054 = vcmp.eq.f32.partialorder %v1494, %v3023
        %vm3055 = vcmp.eq.f32.partialorder %v1494, %v3025
        %vm3056 = vcmp.eq.f32.partialorder %v1494, %v3027
        %vm3057 = vcmp.eq.f32.partialorder %v1494, %v3029
        %vm3058 = vcmp.eq.f32.partialorder %v1494, %v3031
        %vm3059 = vcmp.eq.f32.partialorder %v1494, %v3033
        %vm3060 = vcmp.eq.f32.partialorder %v1494, %v3035
        %vm3061 = vcmp.eq.f32.partialorder %v1494, %v3037
        %vm3062 = vcmp.eq.f32.partialorder %v1494, %v3039
        %vm3063 = vcmp.eq.f32.partialorder %v1494, %v3041
        %vm3064 = vcmp.eq.f32.partialorder %v1494, %v3043
        %vm3065 = vcmp.eq.f32.partialorder %v1494, %v3045
        %vm3066 = vcmp.eq.f32.partialorder %v1494, %v3047
        %vm3067 = vcmp.eq.f32.partialorder %v1494, %v3049
        %vm3068 = vcmp.eq.f32.partialorder %v1494, %v3051
        %vm3069 = vcmp.eq.f32.partialorder %v1494, %v3053
        %v3070 = vsel %vm3054, %v1364, 0.0
        %v3071 = vsel %vm3055, %v1365, 0.0
        %v3072 = vsel %vm3056, %v1366, 0.0
        %v3073 = vsel %vm3057, %v1367, 0.0
        %v3074 = vsel %vm3058, %v1368, 0.0
        %v3075 = vsel %vm3059, %v1369, 0.0
        %v3076 = vsel %vm3060, %v1370, 0.0
        %v3077 = vsel %vm3061, %v1371, 0.0
        %v3078 = vsel %vm3062, %v1372, 0.0
        %v3079 = vsel %vm3063, %v1373, 0.0
        %v3080 = vsel %vm3064, %v1374, 0.0
        %v3081 = vsel %vm3065, %v1375, 0.0
        %v3082 = vsel %vm3066, %v1376, 0.0
        %v3083 = vsel %vm3067, %v1377, 0.0
        %v3084 = vsel %vm3068, %v1378, 0.0
        %v3085 = vsel %vm3069, %v1379, 0.0
        %3086 = vmax.xlane.f32.xlu0 %v3070
        %v3087 = vpop.xlane.xlu0 %3086
        %3088 = vmax.xlane.f32.xlu0 %v3071
        %v3089 = vpop.xlane.xlu0 %3088
        %3090 = vmax.xlane.f32.xlu0 %v3072
        %v3091 = vpop.xlane.xlu0 %3090
        %3092 = vmax.xlane.f32.xlu0 %v3073
        %v3093 = vpop.xlane.xlu0 %3092
        %3094 = vmax.xlane.f32.xlu0 %v3074
        %v3095 = vpop.xlane.xlu0 %3094
        %3096 = vmax.xlane.f32.xlu0 %v3075
        %v3097 = vpop.xlane.xlu0 %3096
        %3098 = vmax.xlane.f32.xlu0 %v3076
        %v3099 = vpop.xlane.xlu0 %3098
        %3100 = vmax.xlane.f32.xlu0 %v3077
        %v3101 = vpop.xlane.xlu0 %3100
        %3102 = vmax.xlane.f32.xlu0 %v3078
        %v3103 = vpop.xlane.xlu0 %3102
        %3104 = vmax.xlane.f32.xlu0 %v3079
        %v3105 = vpop.xlane.xlu0 %3104
        %3106 = vmax.xlane.f32.xlu0 %v3080
        %v3107 = vpop.xlane.xlu0 %3106
        %3108 = vmax.xlane.f32.xlu0 %v3081
        %v3109 = vpop.xlane.xlu0 %3108
        %3110 = vmax.xlane.f32.xlu0 %v3082
        %v3111 = vpop.xlane.xlu0 %3110
        %3112 = vmax.xlane.f32.xlu0 %v3083
        %v3113 = vpop.xlane.xlu0 %3112
        %3114 = vmax.xlane.f32.xlu0 %v3084
        %v3115 = vpop.xlane.xlu0 %3114
        %3116 = vmax.xlane.f32.xlu0 %v3085
        %v3117 = vpop.xlane.xlu0 %3116
        %vm3118 = vcmp.eq.s32.totalorder %v1493, 7
        %v3119 = vsel %vm3118, %v3023, %v2910
        %v3120 = vsel %vm3118, %v3025, %v2911
        %v3121 = vsel %vm3118, %v3027, %v2912
        %v3122 = vsel %vm3118, %v3029, %v2913
        %v3123 = vsel %vm3118, %v3031, %v2914
        %v3124 = vsel %vm3118, %v3033, %v2915
        %v3125 = vsel %vm3118, %v3035, %v2916
        %v3126 = vsel %vm3118, %v3037, %v2917
        %v3127 = vsel %vm3118, %v3039, %v2918
        %v3128 = vsel %vm3118, %v3041, %v2919
        %v3129 = vsel %vm3118, %v3043, %v2920
        %v3130 = vsel %vm3118, %v3045, %v2921
        %v3131 = vsel %vm3118, %v3047, %v2922
        %v3132 = vsel %vm3118, %v3049, %v2923
        %v3133 = vsel %vm3118, %v3051, %v2924
        %v3134 = vsel %vm3118, %v3053, %v2925
        %v3135 = vsel %vm3118, %v3087, %v2926
        %v3136 = vsel %vm3118, %v3089, %v2927
        %v3137 = vsel %vm3118, %v3091, %v2928
        %v3138 = vsel %vm3118, %v3093, %v2929
        %v3139 = vsel %vm3118, %v3095, %v2930
        %v3140 = vsel %vm3118, %v3097, %v2931
        %v3141 = vsel %vm3118, %v3099, %v2932
        %v3142 = vsel %vm3118, %v3101, %v2933
        %v3143 = vsel %vm3118, %v3103, %v2934
        %v3144 = vsel %vm3118, %v3105, %v2935
        %v3145 = vsel %vm3118, %v3107, %v2936
        %v3146 = vsel %vm3118, %v3109, %v2937
        %v3147 = vsel %vm3118, %v3111, %v2938
        %v3148 = vsel %vm3118, %v3113, %v2939
        %v3149 = vsel %vm3118, %v3115, %v2940
        %v3150 = vsel %vm3118, %v3117, %v2941
        %v3151 = vcvt.f32.s32.to.zero.pseudo %v3119
        %v3152 = vcvt.f32.s32.to.zero.pseudo %v3120
        %v3153 = vcvt.f32.s32.to.zero.pseudo %v3121
        %v3154 = vcvt.f32.s32.to.zero.pseudo %v3122
        %v3155 = vcvt.f32.s32.to.zero.pseudo %v3123
        %v3156 = vcvt.f32.s32.to.zero.pseudo %v3124
        %v3157 = vcvt.f32.s32.to.zero.pseudo %v3125
        %v3158 = vcvt.f32.s32.to.zero.pseudo %v3126
        %v3159 = vcvt.f32.s32.to.zero.pseudo %v3127
        %v3160 = vcvt.f32.s32.to.zero.pseudo %v3128
        %v3161 = vcvt.f32.s32.to.zero.pseudo %v3129
        %v3162 = vcvt.f32.s32.to.zero.pseudo %v3130
        %v3163 = vcvt.f32.s32.to.zero.pseudo %v3131
        %v3164 = vcvt.f32.s32.to.zero.pseudo %v3132
        %v3165 = vcvt.f32.s32.to.zero.pseudo %v3133
        %v3166 = vcvt.f32.s32.to.zero.pseudo %v3134
        %vm3167 = vcmask 64512
        %3168 = vst.msk [vmem:[%s320] sm:$0xff] %vm3167, %v3151
        %3169 = vst.msk [vmem:[%s320 + $0x8] sm:$0xff] %vm3167, %v3152
        %3170 = vst.msk [vmem:[%s320 + $0x10] sm:$0xff] %vm3167, %v3153
        %3171 = vst.msk [vmem:[%s320 + $0x18] sm:$0xff] %vm3167, %v3154
        %3172 = vst.msk [vmem:[%s320 + $0x20] sm:$0xff] %vm3167, %v3155
        %3173 = vst.msk [vmem:[%s320 + $0x28] sm:$0xff] %vm3167, %v3156
        %3174 = vst.msk [vmem:[%s320 + $0x30] sm:$0xff] %vm3167, %v3157
        %3175 = vst.msk [vmem:[%s320 + $0x38] sm:$0xff] %vm3167, %v3158
        %3176 = vst.msk [vmem:[%s320 + $0x40] sm:$0xff] %vm3167, %v3159
        %3177 = vst.msk [vmem:[%s320 + $0x48] sm:$0xff] %vm3167, %v3160
        %3178 = vst.msk [vmem:[%s320 + $0x50] sm:$0xff] %vm3167, %v3161
        %3179 = vst.msk [vmem:[%s320 + $0x58] sm:$0xff] %vm3167, %v3162
        %3180 = vst.msk [vmem:[%s320 + $0x60] sm:$0xff] %vm3167, %v3163
        %3181 = vst.msk [vmem:[%s320 + $0x68] sm:$0xff] %vm3167, %v3164
        %3182 = vst.msk [vmem:[%s320 + $0x70] sm:$0xff] %vm3167, %v3165
        %3183 = vst.msk [vmem:[%s320 + $0x78] sm:$0xff] %vm3167, %v3166
        %3184 = vst.msk [vmem:[%s325] sm:$0xff] %vm3167, %v3135
        %3185 = vst.msk [vmem:[%s325 + $0x8] sm:$0xff] %vm3167, %v3136
        %3186 = vst.msk [vmem:[%s325 + $0x10] sm:$0xff] %vm3167, %v3137
        %3187 = vst.msk [vmem:[%s325 + $0x18] sm:$0xff] %vm3167, %v3138
        %3188 = vst.msk [vmem:[%s325 + $0x20] sm:$0xff] %vm3167, %v3139
        %3189 = vst.msk [vmem:[%s325 + $0x28] sm:$0xff] %vm3167, %v3140
        %3190 = vst.msk [vmem:[%s325 + $0x30] sm:$0xff] %vm3167, %v3141
        %3191 = vst.msk [vmem:[%s325 + $0x38] sm:$0xff] %vm3167, %v3142
        %3192 = vst.msk [vmem:[%s325 + $0x40] sm:$0xff] %vm3167, %v3143
        %3193 = vst.msk [vmem:[%s325 + $0x48] sm:$0xff] %vm3167, %v3144
        %3194 = vst.msk [vmem:[%s325 + $0x50] sm:$0xff] %vm3167, %v3145
        %3195 = vst.msk [vmem:[%s325 + $0x58] sm:$0xff] %vm3167, %v3146
        %3196 = vst.msk [vmem:[%s325 + $0x60] sm:$0xff] %vm3167, %v3147
        %3197 = vst.msk [vmem:[%s325 + $0x68] sm:$0xff] %vm3167, %v3148
        %3198 = vst.msk [vmem:[%s325 + $0x70] sm:$0xff] %vm3167, %v3149
        %3199 = vst.msk [vmem:[%s325 + $0x78] sm:$0xff] %vm3167, %v3150
        %s3200 = sand.u32 %s133, 1
        %s3201 = scalar_lea.sflag [#allocation3], %s3200
        %s3202 = sand.u32 %s133, 1
        %s3203 = smul.addr %s3202, 32
        %s3204 = scalar_lea.vmem [#allocation2], %s3203
        %p3205 = scmp.lt.s32.totalorder %s21, 1
        %s3206 = scalar_select %p3205, %s21, 1
        %s3207 = smul.addr %s3206, 16
        %s3208 = smul.addr %s3207, 8
        %s3209 = scalar_lea.vmem %s5, %s3208
        %p3210 = scmp.lt.s32.totalorder %s21, 1
        %s3211 = scalar_select %p3210, %s21, 1
        %s3212 = smul.addr %s3211, 16
        %s3213 = smul.addr %s3212, 8
        %s3214 = scalar_lea.vmem %s6, %s3213
        // Predicated region
        $region37: #{tpu_custom_call.1} parent=35 // pred_check
          %p3215 = pneg %p143
        $region38: #{tpu_custom_call.1} parent=35 // pred_check_branch
          %3217 = sbr.rel (%p3215) target = $region40
        $region39: #{tpu_custom_call.1} parent=35 // pred_region
          %s3219 = ssub.s32 512, 512
          %3220 = vsyncadd %s3201, %s3219
          %s3221 = smul.addr %s21, 4
          %s3222 = smul.addr %s3221, 128
          %s3223 = scalar_lea.hbm %s4, %s3222
          %s3224 = sshll.u32 %s3204, 4
          %s3225 = int_to_ptr.vmem [resolvable:$true] %s3224
          %3230 = dma.vmem_to_hbm [thread:$0]  %s3225, 512, %s3223, %s3201, 128, 128, 8
        $region40: #{tpu_custom_call.1} parent=35 // pred_fallthru
          _
        // Predicated region
        $region41: #{tpu_custom_call.1} parent=35 // pred_check
          %p3231 = pneg %p169
        $region42: #{tpu_custom_call.1} parent=35 // pred_check_branch
          %3233 = sbr.rel (%p3231) target = $region44
        $region43: #{tpu_custom_call.1} parent=35 // pred_region
          _
        $region44: #{tpu_custom_call.1} parent=35 // pred_fallthru
          _
        // Predicated region
        $region45: #{tpu_custom_call.1} parent=35 // pred_check
          %p3234 = pneg %p195
        $region46: #{tpu_custom_call.1} parent=35 // pred_check_branch
          %3236 = sbr.rel (%p3234) target = $region48
        $region47: #{tpu_custom_call.1} parent=35 // pred_region
          _
        $region48: #{tpu_custom_call.1} parent=35 // pred_fallthru
          _
      $region36: #{tpu_custom_call.1} parent=5 // pred_fallthru
        _
      %p3237 = scmp.le.s32.totalorder 2, %s16
      // Predicated region
      $region49: #{tpu_custom_call.1} parent=5 // pred_check
        %p3238 = pneg %p3237
      $region50: #{tpu_custom_call.1} parent=5 // pred_check_branch
        %3240 = sbr.rel (%p3238) target = $region52
      $region51: #{tpu_custom_call.1} parent=5 // pred_region
        %s3241 = ssub.s32 %s16, 2
        // Predicated region
        $region53: #{tpu_custom_call.1} parent=51 // pred_check
          %p3242 = pneg %p149
        $region54: #{tpu_custom_call.1} parent=51 // pred_check_branch
          %3244 = sbr.rel (%p3242) target = $region56
        $region55: #{tpu_custom_call.1} parent=51 // pred_region
          %s3245 = sand.u32 %s134, 1
          %s3246 = scalar_lea.sflag [#allocation3], %s3245
          %s3247 = sand.u32 %s134, 1
          %s3248 = smul.addr %s3247, 32
          %s3249 = scalar_lea.vmem [#allocation2], %s3248
          %3250 = dma.done %s3246, 512
        $region56: #{tpu_custom_call.1} parent=51 // pred_fallthru
          _
        // Predicated region
        $region57: #{tpu_custom_call.1} parent=51 // pred_check
          %p3251 = pneg %p175
        $region58: #{tpu_custom_call.1} parent=51 // pred_check_branch
          %3253 = sbr.rel (%p3251) target = $region60
        $region59: #{tpu_custom_call.1} parent=51 // pred_region
          %p3254 = scmp.lt.s32.totalorder %s22, 1
          %s3255 = scalar_select %p3254, %s22, 1
          %s3256 = smul.addr %s3255, 16
          %s3257 = smul.addr %s3256, 8
          %s3258 = scalar_lea.vmem %s5, %s3257
        $region60: #{tpu_custom_call.1} parent=51 // pred_fallthru
          _
        // Predicated region
        $region61: #{tpu_custom_call.1} parent=51 // pred_check
          %p3259 = pneg %p201
        $region62: #{tpu_custom_call.1} parent=51 // pred_check_branch
          %3261 = sbr.rel (%p3259) target = $region64
        $region63: #{tpu_custom_call.1} parent=51 // pred_region
          %p3262 = scmp.lt.s32.totalorder %s22, 1
          %s3263 = scalar_select %p3262, %s22, 1
          %s3264 = smul.addr %s3263, 16
          %s3265 = smul.addr %s3264, 8
          %s3266 = scalar_lea.vmem %s6, %s3265
        $region64: #{tpu_custom_call.1} parent=51 // pred_fallthru
          _
      $region52: #{tpu_custom_call.1} parent=5 // pred_fallthru
        _
    $region6: #{tpu_custom_call.1} parent=1 // loop_footer
      %s20 = sadd.s32 1, %s16
    $region7: #{tpu_custom_call.1} parent=1 // loop_footer_branch
      %15 = sbr.rel target = $region3
    $region8: #{tpu_custom_call.1} parent=1 // loop_exit
      _
    %3267 = vsyncpa [#allocation3], 1
    %s3268 = scalar_lea.sflag [#allocation3], 1
    %3269 = vsyncpa %s3268, 1

</llo_original>
